<compile_context>
chip_gen: v6e
topology: v6e:2x2x1
jax: 0.10.0
libtpu: 0.0.40
codegen_flags: <defaults>
</compile_context>

<pallas_src>
import jax
import jax.numpy as jnp
from jax.experimental import pallas as pl
from jax.experimental.pallas import tpu as pltpu


def _round_up(v, m):
    return (v + m - 1) // m * m


def _batch_block(batch):
    """Batch elements per grid step.

    v7x has 2 TensorCores per chip -> keep a parallel batch grid (one element
    per TC).  v5e/v6e are single-TC -> collapse the batch into one grid step
    to avoid the ~0.35us per-step overhead on this latency-bound kernel.
    """
    try:
        kind = jax.devices()[0].device_kind.lower()
    except Exception:
        kind = ""
    multi_tc = ("v7" in kind) or ("7x" in kind)
    if multi_tc and batch > 1:
        return 1
    return batch


# ----------------------------- Pallas kernel --------------------------------

def _fused_heads_kernel(xp_ref, w1_ref, shift_ref, w2_ref, b2_ref, out_ref):
    # xp_ref   : (bb, H+2, W+2, Cin)   zero-padded f32 input block
    # w1_ref   : (9*Cin, Cmid_pad)     bf16 3x3 weights, tap-major, BN scale folded
    # shift_ref: (1, Cmid_pad)         f32 folded BN shift
    # w2_ref   : (Cmid_pad, Cout_pad)  bf16 block-diagonal 1x1 weights
    # b2_ref   : (1, Cout_pad)         f32 1x1 bias (zero in padded lanes)
    # out_ref  : (bb*H*W, Cout_pad)    f32 lane-dense flat output
    bb, Hp, Wp, Cin = xp_ref.shape
    H, W = Hp - 2, Wp - 2
    M = bb * H * W

    xp = xp_ref[...]                                       # (bb, H+2, W+2, Cin)

    # im2col: 9 shifted views concatenated along channels -> (M, 9*Cin).
    # Slices/reshapes/concat stay in f32 (proven relayout path, no bf16 VPU on
    # v5e); only the matmul operands are cast to bf16 below.
    cols = [xp[:, kh:kh + H, kw:kw + W, :].reshape(M, Cin)
            for kh in range(3) for kw in range(3)]
    patches = jnp.concatenate(cols, axis=-1)               # (M, 9*Cin)

    # conv3x3 (BN scale already folded into w1) as one K=9*Cin MXU matmul.
    acc = jnp.dot(patches.astype(w1_ref.dtype), w1_ref[...],
                  preferred_element_type=jnp.float32)      # (M, Cmid_pad) f32

    # BatchNorm shift + ReLU (f32 elementwise).
    h = jnp.maximum(acc + shift_ref[...], 0.0)

    # All three 1x1 convs as a single block-diagonal matmul.
    o = jnp.dot(h.astype(w2_ref.dtype), w2_ref[...],
                preferred_element_type=jnp.float32) + b2_ref[...]

    out_ref[...] = o.astype(out_ref.dtype)                 # lane-dense store


# ------------------------------- wrapper -------------------------------------

def fused_heads_forward(x, heads, eps=1e-5):
    """Run all heads in one fused Pallas call.

    x: (B, H, W, Cin) NHWC float32.
    heads: list of dicts with keys w1 (3,3,Cin,Cmid), b1, gamma, beta, mean,
           var, w2 (Cmid, Cout), b2.
    Returns a list of (B, H, W, Cout_h) float32 arrays, one per head.
    """
    B, H, W, Cin = x.shape
    cmids = [int(p["w1"].shape[-1]) for p in heads]
    couts = [int(p["w2"].shape[-1]) for p in heads]
    cmid_pad = _round_up(sum(cmids), 128)   # lane-dense hidden width
    cout_pad = _round_up(sum(couts), 128)   # lane-dense output width

    # Assemble fused weights (f32), folding BN into conv1.
    w1_all = jnp.zeros((9 * Cin, cmid_pad), jnp.float32)
    shift_all = jnp.zeros((1, cmid_pad), jnp.float32)
    w2_all = jnp.zeros((cmid_pad, cout_pad), jnp.float32)
    b2_all = jnp.zeros((1, cout_pad), jnp.float32)

    moff = ooff = 0
    for p, cm, co in zip(heads, cmids, couts):
        inv = p["gamma"] / jnp.sqrt(p["var"] + eps)           # BN scale
        w1f = (p["w1"] * inv).reshape(9 * Cin, cm)            # scale folded in
        shift = (p["b1"] - p["mean"]) * inv + p["beta"]       # folded BN shift
        w1_all = w1_all.at[:, moff:moff + cm].set(w1f)
        shift_all = shift_all.at[0, moff:moff + cm].set(shift)
        w2_all = w2_all.at[moff:moff + cm, ooff:ooff + co].set(p["w2"])
        b2_all = b2_all.at[0, ooff:ooff + co].set(p["b2"])
        moff += cm
        ooff += co

    # bf16 matmul operands (MXU-native), f32 accumulate inside the kernel.
    w1_bf = w1_all.astype(jnp.bfloat16)
    w2_bf = w2_all.astype(jnp.bfloat16)

    # Zero pad once for pad=1 (amortized over the fused heads).
    x_pad = jnp.pad(x.astype(jnp.float32), ((0, 0), (1, 1), (1, 1), (0, 0)))

    bb = _batch_block(B)            # 1 on v7x (2 TCs), B on v5e/v6e (1 TC)
    grid = (B // bb,)

    out_flat = pl.pallas_call(
        _fused_heads_kernel,
        out_shape=jax.ShapeDtypeStruct((B * H * W, cout_pad), jnp.float32),
        grid=grid,
        in_specs=[
            pl.BlockSpec((bb, H + 2, W + 2, Cin), lambda b: (b, 0, 0, 0)),
            pl.BlockSpec((9 * Cin, cmid_pad), lambda b: (0, 0)),
            pl.BlockSpec((1, cmid_pad), lambda b: (0, 0)),
            pl.BlockSpec((cmid_pad, cout_pad), lambda b: (0, 0)),
            pl.BlockSpec((1, cout_pad), lambda b: (0, 0)),
        ],
        out_specs=pl.BlockSpec((bb * H * W, cout_pad), lambda b: (b, 0)),
        compiler_params=pltpu.CompilerParams(
            dimension_semantics=("parallel",)),
    )(x_pad, w1_bf, shift_all, w2_bf, b2_all)

    out = out_flat.reshape(B, H, W, cout_pad)
    outs, off = [], 0
    for co in couts:
        outs.append(out[..., off:off + co])
        off += co
    return outs


# --------------------------- model configuration ----------------------------

class Config:
    # synthetic config: binary=True, only_det=True, no map / vis channels
    category_num = 2
    anchor_size = [None] * 6          # anchor_num_per_loc = 6
    box_code_size = 6
    only_det = True
    pred_len = 1
    binary = True
    motion_state = True
    use_map = False
    use_vis = False


def _init_head(key, cin, cmid, cout):
    k = jax.random.split(key, 8)
    return dict(
        w1=0.05 * jax.random.normal(k[0], (3, 3, cin, cmid), jnp.float32),
        b1=0.05 * jax.random.normal(k[1], (cmid,), jnp.float32),
        gamma=1.0 + 0.05 * jax.random.normal(k[2], (cmid,), jnp.float32),
        beta=0.05 * jax.random.normal(k[3], (cmid,), jnp.float32),
        mean=0.05 * jax.random.normal(k[4], (cmid,), jnp.float32),
        var=1.0 + 0.05 * jnp.abs(jax.random.normal(k[5], (cmid,), jnp.float32)),
        w2=0.05 * jax.random.normal(k[6], (cmid, cout), jnp.float32),
        b2=0.05 * jax.random.normal(k[7], (cout,), jnp.float32),
    )


def init_fafmgda_params(key, config):
    channel = 32 + (6 if config.use_map else 0) + (13 if config.use_vis else 0)
    anchor = len(config.anchor_size)
    out_seq = 1 if config.only_det else config.pred_len
    k_cls, k_reg, k_mot = jax.random.split(key, 3)
    params = {
        "cls": _init_head(k_cls, channel, channel, config.category_num * anchor),
        # binary=True, only_det=True branch of SingleRegressionHead
        "loc": _init_head(k_reg, channel, channel,
                          anchor * config.box_code_size * out_seq),
    }
    if config.motion_state:
        # motion_cls head (conv3x3+BN+ReLU+conv1x1 -> 3*anchor channels)
        params["state"] = _init_head(k_mot, channel, channel, 3 * anchor)
    return params


def fafmgda_forward(params, x_nhwc, config):
    """x_nhwc: (B, H, W, C).  Returns dict matching the PyTorch module."""
    B, H, W, _ = x_nhwc.shape
    anchor = len(config.anchor_size)
    out_seq = 1 if config.only_det else config.pred_len

    heads = [params["cls"], params["loc"]]
    if config.motion_state:
        heads.append(params["state"])

    outs = fused_heads_forward(x_nhwc, heads)

    cls = outs[0]                                          # (B, H, W, cat*anchor)
    cls_preds = cls.reshape(B, -1, config.category_num)    # == permute+view
    loc = outs[1]                                          # (B, H, W, anchor*seq*box)
    loc_preds = loc.reshape(B, H, W, anchor, out_seq, config.box_code_size)

    result = {"loc": loc_preds, "cls": cls_preds}
    if config.motion_state:
        result["state"] = outs[2].reshape(B, -1, 3)
    return result


# ---------------------------------- main -------------------------------------

if __name__ == "__main__":
    cfg = Config()
    key = jax.random.PRNGKey(0)
    k_param, k_x = jax.random.split(key)

    params = init_fafmgda_params(k_param, cfg)

    # PyTorch-style NCHW input: (batch=2, channels=32, H=16, W=16)
    x_nchw = jax.random.normal(k_x, (2, 32, 16, 16), jnp.float32)
    x_nhwc = jnp.transpose(x_nchw, (0, 2, 3, 1))           # kernel layout NHWC

    out = fafmgda_forward(params, x_nhwc, cfg)
    jax.block_until_ready(out)

    assert out["cls"].shape == (2, 16 * 16 * 6, 2)
    assert out["loc"].shape == (2, 16, 16, 6, 1, 6)
    assert out["state"].shape == (2, 16 * 16 * 6, 3)
    print("KERNEL_OK")
</pallas_src>

<mosaic_0001>
module attributes {stable_mosaic.version = 11 : i64} {
  func.func @_fused_heads_kernel(%arg0: i32, %arg1: memref<2x18x18x32xf32, #tpu.memory_space<vmem>>, %arg2: memref<288x128xbf16, #tpu.memory_space<vmem>>, %arg3: memref<1x128xf32, #tpu.memory_space<vmem>>, %arg4: memref<128x128xbf16, #tpu.memory_space<vmem>>, %arg5: memref<1x128xf32, #tpu.memory_space<vmem>>, %arg6: memref<512x128xf32, #tpu.memory_space<vmem>>) attributes {dimension_semantics = [#tpu.dimension_semantics<parallel>], iteration_bounds = array<i64: 1>, scalar_prefetch = 0 : i64, scratch_operands = 0 : i64, tpu.core_type = #tpu.core_type<tc>, window_params = [{transform_indices = @transform_0, window_bounds = array<i64: 2, 18, 18, 32>}, {pipeline_mode = #tpu.pipeline_mode<synchronous>, transform_indices = @transform_1, window_bounds = array<i64: 288, 128>}, {pipeline_mode = #tpu.pipeline_mode<synchronous>, transform_indices = @transform_2, window_bounds = array<i64: 1, 128>}, {pipeline_mode = #tpu.pipeline_mode<synchronous>, transform_indices = @transform_3, window_bounds = array<i64: 128, 128>}, {pipeline_mode = #tpu.pipeline_mode<synchronous>, transform_indices = @transform_4, window_bounds = array<i64: 1, 128>}, {transform_indices = @transform_5, window_bounds = array<i64: 512, 128>}]} {
    %c0 = arith.constant 0 : index
    %c0_0 = arith.constant 0 : index
    %c0_1 = arith.constant 0 : index
    %c0_2 = arith.constant 0 : index
    %0 = vector.load %arg1[%c0, %c0_0, %c0_1, %c0_2] : memref<2x18x18x32xf32, #tpu.memory_space<vmem>>, vector<2x18x18x32xf32>
    %1 = vector.extract_strided_slice %0 {offsets = [0, 0, 0, 0], sizes = [2, 16, 16, 32], strides = [1, 1, 1, 1]} : vector<2x18x18x32xf32> to vector<2x16x16x32xf32>
    %2 = vector.shape_cast %1 : vector<2x16x16x32xf32> to vector<512x32xf32>
    %3 = vector.extract_strided_slice %0 {offsets = [0, 0, 1, 0], sizes = [2, 16, 16, 32], strides = [1, 1, 1, 1]} : vector<2x18x18x32xf32> to vector<2x16x16x32xf32>
    %4 = vector.shape_cast %3 : vector<2x16x16x32xf32> to vector<512x32xf32>
    %5 = vector.extract_strided_slice %0 {offsets = [0, 0, 2, 0], sizes = [2, 16, 16, 32], strides = [1, 1, 1, 1]} : vector<2x18x18x32xf32> to vector<2x16x16x32xf32>
    %6 = vector.shape_cast %5 : vector<2x16x16x32xf32> to vector<512x32xf32>
    %7 = vector.extract_strided_slice %0 {offsets = [0, 1, 0, 0], sizes = [2, 16, 16, 32], strides = [1, 1, 1, 1]} : vector<2x18x18x32xf32> to vector<2x16x16x32xf32>
    %8 = vector.shape_cast %7 : vector<2x16x16x32xf32> to vector<512x32xf32>
    %9 = vector.extract_strided_slice %0 {offsets = [0, 1, 1, 0], sizes = [2, 16, 16, 32], strides = [1, 1, 1, 1]} : vector<2x18x18x32xf32> to vector<2x16x16x32xf32>
    %10 = vector.shape_cast %9 : vector<2x16x16x32xf32> to vector<512x32xf32>
    %11 = vector.extract_strided_slice %0 {offsets = [0, 1, 2, 0], sizes = [2, 16, 16, 32], strides = [1, 1, 1, 1]} : vector<2x18x18x32xf32> to vector<2x16x16x32xf32>
    %12 = vector.shape_cast %11 : vector<2x16x16x32xf32> to vector<512x32xf32>
    %13 = vector.extract_strided_slice %0 {offsets = [0, 2, 0, 0], sizes = [2, 16, 16, 32], strides = [1, 1, 1, 1]} : vector<2x18x18x32xf32> to vector<2x16x16x32xf32>
    %14 = vector.shape_cast %13 : vector<2x16x16x32xf32> to vector<512x32xf32>
    %15 = vector.extract_strided_slice %0 {offsets = [0, 2, 1, 0], sizes = [2, 16, 16, 32], strides = [1, 1, 1, 1]} : vector<2x18x18x32xf32> to vector<2x16x16x32xf32>
    %16 = vector.shape_cast %15 : vector<2x16x16x32xf32> to vector<512x32xf32>
    %17 = vector.extract_strided_slice %0 {offsets = [0, 2, 2, 0], sizes = [2, 16, 16, 32], strides = [1, 1, 1, 1]} : vector<2x18x18x32xf32> to vector<2x16x16x32xf32>
    %18 = vector.shape_cast %17 : vector<2x16x16x32xf32> to vector<512x32xf32>
    %19 = tpu.concatenate %2, %4, %6, %8, %10, %12, %14, %16, %18 in 1 : vector<512x32xf32>, vector<512x32xf32>, vector<512x32xf32>, vector<512x32xf32>, vector<512x32xf32>, vector<512x32xf32>, vector<512x32xf32>, vector<512x32xf32>, vector<512x32xf32> -> vector<512x288xf32>
    %20 = arith.truncf %19 : vector<512x288xf32> to vector<512x288xbf16>
    %c0_3 = arith.constant 0 : index
    %c0_4 = arith.constant 0 : index
    %21 = vector.load %arg2[%c0_3, %c0_4] : memref<288x128xbf16, #tpu.memory_space<vmem>>, vector<288x128xbf16>
    %cst = arith.constant dense<0.000000e+00> : vector<512x128xf32>
    %22 = tpu.matmul %20, %21, %cst {dimension_numbers = #tpu.dot_dimension_numbers<[1], [0], [0], [1], [0, 0, 1, 1], [], []>} : vector<512x288xbf16>, vector<288x128xbf16>, vector<512x128xf32> -> vector<512x128xf32>
    %c0_5 = arith.constant 0 : index
    %c0_6 = arith.constant 0 : index
    %23 = vector.load %arg3[%c0_5, %c0_6] : memref<1x128xf32, #tpu.memory_space<vmem>>, vector<1x128xf32>
    %24 = vector.broadcast %23 : vector<1x128xf32> to vector<512x128xf32>
    %25 = arith.addf %22, %24 : vector<512x128xf32>
    %cst_7 = arith.constant 0.000000e+00 : f32
    %26 = vector.broadcast %cst_7 : f32 to vector<512x128xf32>
    %27 = arith.maximumf %25, %26 : vector<512x128xf32>
    %28 = arith.truncf %27 : vector<512x128xf32> to vector<512x128xbf16>
    %c0_8 = arith.constant 0 : index
    %c0_9 = arith.constant 0 : index
    %29 = vector.load %arg4[%c0_8, %c0_9] : memref<128x128xbf16, #tpu.memory_space<vmem>>, vector<128x128xbf16>
    %cst_10 = arith.constant dense<0.000000e+00> : vector<512x128xf32>
    %30 = tpu.matmul %28, %29, %cst_10 {dimension_numbers = #tpu.dot_dimension_numbers<[1], [0], [0], [1], [0, 0, 1, 1], [], []>} : vector<512x128xbf16>, vector<128x128xbf16>, vector<512x128xf32> -> vector<512x128xf32>
    %c0_11 = arith.constant 0 : index
    %c0_12 = arith.constant 0 : index
    %31 = vector.load %arg5[%c0_11, %c0_12] : memref<1x128xf32, #tpu.memory_space<vmem>>, vector<1x128xf32>
    %32 = vector.broadcast %31 : vector<1x128xf32> to vector<512x128xf32>
    %33 = arith.addf %30, %32 : vector<512x128xf32>
    %c0_13 = arith.constant 0 : index
    %c0_14 = arith.constant 0 : index
    %34 = vector.load %arg6[%c0_13, %c0_14] : memref<512x128xf32, #tpu.memory_space<vmem>>, vector<512x128xf32>
    tpu.vector_store %arg6[%c0_13, %c0_14], %33 {strides = array<i32>} : memref<512x128xf32, #tpu.memory_space<vmem>>, vector<512x128xf32>,
    return
  }
  func.func @transform_0(%arg0: i32) -> (i32, i32, i32, i32) {
    %c0_i32 = arith.constant 0 : i32
    %c0_i32_0 = arith.constant 0 : i32
    %c0_i32_1 = arith.constant 0 : i32
    %c0_i32_2 = arith.constant 0 : i32
    return %arg0, %c0_i32, %c0_i32_0, %c0_i32_1 : i32, i32, i32, i32
  }
  func.func @transform_1(%arg0: i32) -> (i32, i32) {
    %c0_i32 = arith.constant 0 : i32
    %c0_i32_0 = arith.constant 0 : i32
    %c0_i32_1 = arith.constant 0 : i32
    return %c0_i32, %c0_i32_0 : i32, i32
  }
  func.func @transform_2(%arg0: i32) -> (i32, i32) {
    %c0_i32 = arith.constant 0 : i32
    %c0_i32_0 = arith.constant 0 : i32
    %c0_i32_1 = arith.constant 0 : i32
    return %c0_i32, %c0_i32_0 : i32, i32
  }
  func.func @transform_3(%arg0: i32) -> (i32, i32) {
    %c0_i32 = arith.constant 0 : i32
    %c0_i32_0 = arith.constant 0 : i32
    %c0_i32_1 = arith.constant 0 : i32
    return %c0_i32, %c0_i32_0 : i32, i32
  }
  func.func @transform_4(%arg0: i32) -> (i32, i32) {
    %c0_i32 = arith.constant 0 : i32
    %c0_i32_0 = arith.constant 0 : i32
    %c0_i32_1 = arith.constant 0 : i32
    return %c0_i32, %c0_i32_0 : i32, i32
  }
  func.func @transform_5(%arg0: i32) -> (i32, i32) {
    %c0_i32 = arith.constant 0 : i32
    %c0_i32_0 = arith.constant 0 : i32
    return %arg0, %c0_i32 : i32, i32
  }
}

</mosaic_0001>

<llo_original>
// kernel: tpu_custom_call.1
$region0: #{tpu_custom_call.1}
  #allocation0 [shape = 'u32[]', space=smem, size = 0x4, offset = 0x4, fixed_abs, tag = 'smem constant byte address 0x4 - core index']
  #allocation1 [shape = 'u32[144,128]{1,0:T(1,128)}', space=vmem, size = 0x12000, scoped, tag = 'internal scratch']
  %s0 = inlined_call_operand.vmem [shape: f32[2,18,18,32], index: 0, kind: input, shape index: {}]
  %s1 = inlined_call_operand.vmem [shape: bf16[288,128], index: 1, kind: input, shape index: {}]
  %s2 = inlined_call_operand.vmem [shape: f32[1,128], index: 2, kind: input, shape index: {}]
  %s3 = inlined_call_operand.vmem [shape: bf16[128,128], index: 3, kind: input, shape index: {}]
  %s4 = inlined_call_operand.vmem [shape: f32[1,128], index: 4, kind: input, shape index: {}]
  %s5 = inlined_call_operand.hbm [shape: f32[512,128], index: 5, kind: output, shape index: {}]
  %s6 = sld [smem:[#allocation0]]
  $region30: #{tpu_custom_call.1} parent=0
    _
  %s8 = ssub.s32 1, %s6
  %s9 = scalar_select 0, %s8, %s6
  $region1: #{tpu_custom_call.1} parent=0
    #allocation2 [shape = 'u8[262144]{0}', space=vmem, size = 0x40000, scoped, tag = 'output window, operand 0, single buffered']
    #allocation3 [shape = 's32[1]{0}', space=sflag, size = 0x4, scoped, tag = 'scoped memory for tpu_custom_call.1']
    %10 = vsyncpa [#allocation3], 0
    // Predicated region
    $region2: #{tpu_custom_call.1} parent=1 // pred_check
      _
    $region3: #{tpu_custom_call.1} parent=1 // pred_check_branch
      %12 = sbr.rel (0) target = $region5
    $region4: #{tpu_custom_call.1} parent=1 // pred_region
      _
    $region5: #{tpu_custom_call.1} parent=1 // pred_fallthru
      _
    // Predicated region
    $region6: #{tpu_custom_call.1} parent=1 // pred_check
      _
    $region7: #{tpu_custom_call.1} parent=1 // pred_check_branch
      %14 = sbr.rel (0) target = $region9
    $region8: #{tpu_custom_call.1} parent=1 // pred_region
      _
    $region9: #{tpu_custom_call.1} parent=1 // pred_fallthru
      _
    // Predicated region
    $region10: #{tpu_custom_call.1} parent=1 // pred_check
      _
    $region11: #{tpu_custom_call.1} parent=1 // pred_check_branch
      %16 = sbr.rel (0) target = $region13
    $region12: #{tpu_custom_call.1} parent=1 // pred_region
      _
    $region13: #{tpu_custom_call.1} parent=1 // pred_fallthru
      _
    // Predicated region
    $region14: #{tpu_custom_call.1} parent=1 // pred_check
      _
    $region15: #{tpu_custom_call.1} parent=1 // pred_check_branch
      %18 = sbr.rel (0) target = $region17
    $region16: #{tpu_custom_call.1} parent=1 // pred_region
      _
    $region17: #{tpu_custom_call.1} parent=1 // pred_fallthru
      _
    // Predicated region
    $region18: #{tpu_custom_call.1} parent=1 // pred_check
      _
    $region19: #{tpu_custom_call.1} parent=1 // pred_check_branch
      %20 = sbr.rel (0) target = $region21
    $region20: #{tpu_custom_call.1} parent=1 // pred_region
      _
    $region21: #{tpu_custom_call.1} parent=1 // pred_fallthru
      _
    %v22 = vld [vmem:[%s0] sm:$0xff]
    %v23 = vld [vmem:[%s0 + $0x8] sm:$0xff]
    %v24 = vld [vmem:[%s0 + $0x10] sm:$0x3]
    %v25 = vld [vmem:[%s0 + $0x18] sm:$0xff]
    %v26 = vld [vmem:[%s0 + $0x20] sm:$0xff]
    %v27 = vld [vmem:[%s0 + $0x28] sm:$0x3]
    %v28 = vld [vmem:[%s0 + $0x30] sm:$0xff]
    %v29 = vld [vmem:[%s0 + $0x38] sm:$0xff]
    %v30 = vld [vmem:[%s0 + $0x40] sm:$0x3]
    %v31 = vld [vmem:[%s0 + $0x48] sm:$0xff]
    %v32 = vld [vmem:[%s0 + $0x50] sm:$0xff]
    %v33 = vld [vmem:[%s0 + $0x58] sm:$0x3]
    %v34 = vld [vmem:[%s0 + $0x60] sm:$0xff]
    %v35 = vld [vmem:[%s0 + $0x68] sm:$0xff]
    %v36 = vld [vmem:[%s0 + $0x70] sm:$0x3]
    %v37 = vld [vmem:[%s0 + $0x78] sm:$0xff]
    %v38 = vld [vmem:[%s0 + $0x80] sm:$0xff]
    %v39 = vld [vmem:[%s0 + $0x88] sm:$0x3]
    %v40 = vld [vmem:[%s0 + $0x90] sm:$0xff]
    %v41 = vld [vmem:[%s0 + $0x98] sm:$0xff]
    %v42 = vld [vmem:[%s0 + $0xa0] sm:$0x3]
    %v43 = vld [vmem:[%s0 + $0xa8] sm:$0xff]
    %v44 = vld [vmem:[%s0 + $0xb0] sm:$0xff]
    %v45 = vld [vmem:[%s0 + $0xb8] sm:$0x3]
    %v46 = vld [vmem:[%s0 + $0xc0] sm:$0xff]
    %v47 = vld [vmem:[%s0 + $0xc8] sm:$0xff]
    %v48 = vld [vmem:[%s0 + $0xd0] sm:$0x3]
    %v49 = vld [vmem:[%s0 + $0xd8] sm:$0xff]
    %v50 = vld [vmem:[%s0 + $0xe0] sm:$0xff]
    %v51 = vld [vmem:[%s0 + $0xe8] sm:$0x3]
    %v52 = vld [vmem:[%s0 + $0xf0] sm:$0xff]
    %v53 = vld [vmem:[%s0 + $0xf8] sm:$0xff]
    %v54 = vld [vmem:[%s0 + $0x100] sm:$0x3]
    %v55 = vld [vmem:[%s0 + $0x108] sm:$0xff]
    %v56 = vld [vmem:[%s0 + $0x110] sm:$0xff]
    %v57 = vld [vmem:[%s0 + $0x118] sm:$0x3]
    %v58 = vld [vmem:[%s0 + $0x120] sm:$0xff]
    %v59 = vld [vmem:[%s0 + $0x128] sm:$0xff]
    %v60 = vld [vmem:[%s0 + $0x130] sm:$0x3]
    %v61 = vld [vmem:[%s0 + $0x138] sm:$0xff]
    %v62 = vld [vmem:[%s0 + $0x140] sm:$0xff]
    %v63 = vld [vmem:[%s0 + $0x148] sm:$0x3]
    %v64 = vld [vmem:[%s0 + $0x150] sm:$0xff]
    %v65 = vld [vmem:[%s0 + $0x158] sm:$0xff]
    %v66 = vld [vmem:[%s0 + $0x160] sm:$0x3]
    %v67 = vld [vmem:[%s0 + $0x168] sm:$0xff]
    %v68 = vld [vmem:[%s0 + $0x170] sm:$0xff]
    %v69 = vld [vmem:[%s0 + $0x178] sm:$0x3]
    %v70 = vld [vmem:[%s0 + $0x180] sm:$0xff]
    %v71 = vld [vmem:[%s0 + $0x188] sm:$0xff]
    %v72 = vld [vmem:[%s0 + $0x190] sm:$0x3]
    %v73 = vld [vmem:[%s0 + $0x198] sm:$0xff]
    %v74 = vld [vmem:[%s0 + $0x1a0] sm:$0xff]
    %v75 = vld [vmem:[%s0 + $0x1a8] sm:$0x3]
    %v76 = vld [vmem:[%s0 + $0x1b0] sm:$0xff]
    %v77 = vld [vmem:[%s0 + $0x1b8] sm:$0xff]
    %v78 = vld [vmem:[%s0 + $0x1c0] sm:$0x3]
    %v79 = vld [vmem:[%s0 + $0x1c8] sm:$0xff]
    %v80 = vld [vmem:[%s0 + $0x1d0] sm:$0xff]
    %v81 = vld [vmem:[%s0 + $0x1d8] sm:$0x3]
    %v82 = vld [vmem:[%s0 + $0x1e0] sm:$0xff]
    %v83 = vld [vmem:[%s0 + $0x1e8] sm:$0xff]
    %v84 = vld [vmem:[%s0 + $0x1f0] sm:$0x3]
    %v85 = vld [vmem:[%s0 + $0x1f8] sm:$0xff]
    %v86 = vld [vmem:[%s0 + $0x200] sm:$0xff]
    %v87 = vld [vmem:[%s0 + $0x208] sm:$0x3]
    %v88 = vld [vmem:[%s0 + $0x210] sm:$0xff]
    %v89 = vld [vmem:[%s0 + $0x218] sm:$0xff]
    %v90 = vld [vmem:[%s0 + $0x220] sm:$0x3]
    %v91 = vld [vmem:[%s0 + $0x228] sm:$0xff]
    %v92 = vld [vmem:[%s0 + $0x230] sm:$0xff]
    %v93 = vld [vmem:[%s0 + $0x238] sm:$0x3]
    %v94 = vld [vmem:[%s0 + $0x240] sm:$0xff]
    %v95 = vld [vmem:[%s0 + $0x248] sm:$0xff]
    %v96 = vld [vmem:[%s0 + $0x250] sm:$0x3]
    %v97 = vld [vmem:[%s0 + $0x258] sm:$0xff]
    %v98 = vld [vmem:[%s0 + $0x260] sm:$0xff]
    %v99 = vld [vmem:[%s0 + $0x268] sm:$0x3]
    %v100 = vld [vmem:[%s0 + $0x270] sm:$0xff]
    %v101 = vld [vmem:[%s0 + $0x278] sm:$0xff]
    %v102 = vld [vmem:[%s0 + $0x280] sm:$0x3]
    %v103 = vld [vmem:[%s0 + $0x288] sm:$0xff]
    %v104 = vld [vmem:[%s0 + $0x290] sm:$0xff]
    %v105 = vld [vmem:[%s0 + $0x298] sm:$0x3]
    %v106 = vld [vmem:[%s0 + $0x2a0] sm:$0xff]
    %v107 = vld [vmem:[%s0 + $0x2a8] sm:$0xff]
    %v108 = vld [vmem:[%s0 + $0x2b0] sm:$0x3]
    %v109 = vld [vmem:[%s0 + $0x2b8] sm:$0xff]
    %v110 = vld [vmem:[%s0 + $0x2c0] sm:$0xff]
    %v111 = vld [vmem:[%s0 + $0x2c8] sm:$0x3]
    %v112 = vld [vmem:[%s0 + $0x2d0] sm:$0xff]
    %v113 = vld [vmem:[%s0 + $0x2d8] sm:$0xff]
    %v114 = vld [vmem:[%s0 + $0x2e0] sm:$0x3]
    %v115 = vld [vmem:[%s0 + $0x2e8] sm:$0xff]
    %v116 = vld [vmem:[%s0 + $0x2f0] sm:$0xff]
    %v117 = vld [vmem:[%s0 + $0x2f8] sm:$0x3]
    %v118 = vld [vmem:[%s0 + $0x300] sm:$0xff]
    %v119 = vld [vmem:[%s0 + $0x308] sm:$0xff]
    %v120 = vld [vmem:[%s0 + $0x310] sm:$0x3]
    %v121 = vld [vmem:[%s0 + $0x318] sm:$0xff]
    %v122 = vld [vmem:[%s0 + $0x320] sm:$0xff]
    %v123 = vld [vmem:[%s0 + $0x328] sm:$0x3]
    %v124 = vld [vmem:[%s0 + $0x330] sm:$0xff]
    %v125 = vld [vmem:[%s0 + $0x338] sm:$0xff]
    %v126 = vld [vmem:[%s0 + $0x340] sm:$0x3]
    %v127 = vld [vmem:[%s0 + $0x348] sm:$0xff]
    %v128 = vld [vmem:[%s0 + $0x350] sm:$0xff]
    %v129 = vld [vmem:[%s0 + $0x358] sm:$0x3]
    %vm226 = vcmask 1046528
    %v227 = vrot.slane %v22, 1
    %v228 = vrot.slane %v23, 1
    %v229 = vsel %vm226, %v227, %v228
    %v230 = vrot.slane %v24, 1
    %v231 = vsel %vm226, %v228, %v230
    %v232 = vrot.slane %v25, 1
    %v233 = vrot.slane %v26, 1
    %v234 = vsel %vm226, %v232, %v233
    %v235 = vrot.slane %v27, 1
    %v236 = vsel %vm226, %v233, %v235
    %v237 = vrot.slane %v28, 1
    %v238 = vrot.slane %v29, 1
    %v239 = vsel %vm226, %v237, %v238
    %v240 = vrot.slane %v30, 1
    %v241 = vsel %vm226, %v238, %v240
    %v242 = vrot.slane %v31, 1
    %v243 = vrot.slane %v32, 1
    %v244 = vsel %vm226, %v242, %v243
    %v245 = vrot.slane %v33, 1
    %v246 = vsel %vm226, %v243, %v245
    %v247 = vrot.slane %v34, 1
    %v248 = vrot.slane %v35, 1
    %v249 = vsel %vm226, %v247, %v248
    %v250 = vrot.slane %v36, 1
    %v251 = vsel %vm226, %v248, %v250
    %v252 = vrot.slane %v37, 1
    %v253 = vrot.slane %v38, 1
    %v254 = vsel %vm226, %v252, %v253
    %v255 = vrot.slane %v39, 1
    %v256 = vsel %vm226, %v253, %v255
    %v257 = vrot.slane %v40, 1
    %v258 = vrot.slane %v41, 1
    %v259 = vsel %vm226, %v257, %v258
    %v260 = vrot.slane %v42, 1
    %v261 = vsel %vm226, %v258, %v260
    %v262 = vrot.slane %v43, 1
    %v263 = vrot.slane %v44, 1
    %v264 = vsel %vm226, %v262, %v263
    %v265 = vrot.slane %v45, 1
    %v266 = vsel %vm226, %v263, %v265
    %v267 = vrot.slane %v46, 1
    %v268 = vrot.slane %v47, 1
    %v269 = vsel %vm226, %v267, %v268
    %v270 = vrot.slane %v48, 1
    %v271 = vsel %vm226, %v268, %v270
    %v272 = vrot.slane %v49, 1
    %v273 = vrot.slane %v50, 1
    %v274 = vsel %vm226, %v272, %v273
    %v275 = vrot.slane %v51, 1
    %v276 = vsel %vm226, %v273, %v275
    %v277 = vrot.slane %v52, 1
    %v278 = vrot.slane %v53, 1
    %v279 = vsel %vm226, %v277, %v278
    %v280 = vrot.slane %v54, 1
    %v281 = vsel %vm226, %v278, %v280
    %v282 = vrot.slane %v55, 1
    %v283 = vrot.slane %v56, 1
    %v284 = vsel %vm226, %v282, %v283
    %v285 = vrot.slane %v57, 1
    %v286 = vsel %vm226, %v283, %v285
    %v287 = vrot.slane %v58, 1
    %v288 = vrot.slane %v59, 1
    %v289 = vsel %vm226, %v287, %v288
    %v290 = vrot.slane %v60, 1
    %v291 = vsel %vm226, %v288, %v290
    %v292 = vrot.slane %v61, 1
    %v293 = vrot.slane %v62, 1
    %v294 = vsel %vm226, %v292, %v293
    %v295 = vrot.slane %v63, 1
    %v296 = vsel %vm226, %v293, %v295
    %v297 = vrot.slane %v64, 1
    %v298 = vrot.slane %v65, 1
    %v299 = vsel %vm226, %v297, %v298
    %v300 = vrot.slane %v66, 1
    %v301 = vsel %vm226, %v298, %v300
    %v302 = vrot.slane %v67, 1
    %v303 = vrot.slane %v68, 1
    %v304 = vsel %vm226, %v302, %v303
    %v305 = vrot.slane %v69, 1
    %v306 = vsel %vm226, %v303, %v305
    %v307 = vrot.slane %v76, 1
    %v308 = vrot.slane %v77, 1
    %v309 = vsel %vm226, %v307, %v308
    %v310 = vrot.slane %v78, 1
    %v311 = vsel %vm226, %v308, %v310
    %v312 = vrot.slane %v79, 1
    %v313 = vrot.slane %v80, 1
    %v314 = vsel %vm226, %v312, %v313
    %v315 = vrot.slane %v81, 1
    %v316 = vsel %vm226, %v313, %v315
    %v317 = vrot.slane %v82, 1
    %v318 = vrot.slane %v83, 1
    %v319 = vsel %vm226, %v317, %v318
    %v320 = vrot.slane %v84, 1
    %v321 = vsel %vm226, %v318, %v320
    %v322 = vrot.slane %v85, 1
    %v323 = vrot.slane %v86, 1
    %v324 = vsel %vm226, %v322, %v323
    %v325 = vrot.slane %v87, 1
    %v326 = vsel %vm226, %v323, %v325
    %v327 = vrot.slane %v88, 1
    %v328 = vrot.slane %v89, 1
    %v329 = vsel %vm226, %v327, %v328
    %v330 = vrot.slane %v90, 1
    %v331 = vsel %vm226, %v328, %v330
    %v332 = vrot.slane %v91, 1
    %v333 = vrot.slane %v92, 1
    %v334 = vsel %vm226, %v332, %v333
    %v335 = vrot.slane %v93, 1
    %v336 = vsel %vm226, %v333, %v335
    %v337 = vrot.slane %v94, 1
    %v338 = vrot.slane %v95, 1
    %v339 = vsel %vm226, %v337, %v338
    %v340 = vrot.slane %v96, 1
    %v341 = vsel %vm226, %v338, %v340
    %v342 = vrot.slane %v97, 1
    %v343 = vrot.slane %v98, 1
    %v344 = vsel %vm226, %v342, %v343
    %v345 = vrot.slane %v99, 1
    %v346 = vsel %vm226, %v343, %v345
    %v347 = vrot.slane %v100, 1
    %v348 = vrot.slane %v101, 1
    %v349 = vsel %vm226, %v347, %v348
    %v350 = vrot.slane %v102, 1
    %v351 = vsel %vm226, %v348, %v350
    %v352 = vrot.slane %v103, 1
    %v353 = vrot.slane %v104, 1
    %v354 = vsel %vm226, %v352, %v353
    %v355 = vrot.slane %v105, 1
    %v356 = vsel %vm226, %v353, %v355
    %v357 = vrot.slane %v106, 1
    %v358 = vrot.slane %v107, 1
    %v359 = vsel %vm226, %v357, %v358
    %v360 = vrot.slane %v108, 1
    %v361 = vsel %vm226, %v358, %v360
    %v362 = vrot.slane %v109, 1
    %v363 = vrot.slane %v110, 1
    %v364 = vsel %vm226, %v362, %v363
    %v365 = vrot.slane %v111, 1
    %v366 = vsel %vm226, %v363, %v365
    %v367 = vrot.slane %v112, 1
    %v368 = vrot.slane %v113, 1
    %v369 = vsel %vm226, %v367, %v368
    %v370 = vrot.slane %v114, 1
    %v371 = vsel %vm226, %v368, %v370
    %v372 = vrot.slane %v115, 1
    %v373 = vrot.slane %v116, 1
    %v374 = vsel %vm226, %v372, %v373
    %v375 = vrot.slane %v117, 1
    %v376 = vsel %vm226, %v373, %v375
    %v377 = vrot.slane %v118, 1
    %v378 = vrot.slane %v119, 1
    %v379 = vsel %vm226, %v377, %v378
    %v380 = vrot.slane %v120, 1
    %v381 = vsel %vm226, %v378, %v380
    %v382 = vrot.slane %v121, 1
    %v383 = vrot.slane %v122, 1
    %v384 = vsel %vm226, %v382, %v383
    %v385 = vrot.slane %v123, 1
    %v386 = vsel %vm226, %v383, %v385
    %vm387 = vcmask 1045504
    %v388 = vrot.slane %v22, 2
    %v389 = vrot.slane %v23, 2
    %v390 = vsel %vm387, %v388, %v389
    %v391 = vrot.slane %v24, 2
    %v392 = vsel %vm387, %v389, %v391
    %v393 = vrot.slane %v25, 2
    %v394 = vrot.slane %v26, 2
    %v395 = vsel %vm387, %v393, %v394
    %v396 = vrot.slane %v27, 2
    %v397 = vsel %vm387, %v394, %v396
    %v398 = vrot.slane %v28, 2
    %v399 = vrot.slane %v29, 2
    %v400 = vsel %vm387, %v398, %v399
    %v401 = vrot.slane %v30, 2
    %v402 = vsel %vm387, %v399, %v401
    %v403 = vrot.slane %v31, 2
    %v404 = vrot.slane %v32, 2
    %v405 = vsel %vm387, %v403, %v404
    %v406 = vrot.slane %v33, 2
    %v407 = vsel %vm387, %v404, %v406
    %v408 = vrot.slane %v34, 2
    %v409 = vrot.slane %v35, 2
    %v410 = vsel %vm387, %v408, %v409
    %v411 = vrot.slane %v36, 2
    %v412 = vsel %vm387, %v409, %v411
    %v413 = vrot.slane %v37, 2
    %v414 = vrot.slane %v38, 2
    %v415 = vsel %vm387, %v413, %v414
    %v416 = vrot.slane %v39, 2
    %v417 = vsel %vm387, %v414, %v416
    %v418 = vrot.slane %v40, 2
    %v419 = vrot.slane %v41, 2
    %v420 = vsel %vm387, %v418, %v419
    %v421 = vrot.slane %v42, 2
    %v422 = vsel %vm387, %v419, %v421
    %v423 = vrot.slane %v43, 2
    %v424 = vrot.slane %v44, 2
    %v425 = vsel %vm387, %v423, %v424
    %v426 = vrot.slane %v45, 2
    %v427 = vsel %vm387, %v424, %v426
    %v428 = vrot.slane %v46, 2
    %v429 = vrot.slane %v47, 2
    %v430 = vsel %vm387, %v428, %v429
    %v431 = vrot.slane %v48, 2
    %v432 = vsel %vm387, %v429, %v431
    %v433 = vrot.slane %v49, 2
    %v434 = vrot.slane %v50, 2
    %v435 = vsel %vm387, %v433, %v434
    %v436 = vrot.slane %v51, 2
    %v437 = vsel %vm387, %v434, %v436
    %v438 = vrot.slane %v52, 2
    %v439 = vrot.slane %v53, 2
    %v440 = vsel %vm387, %v438, %v439
    %v441 = vrot.slane %v54, 2
    %v442 = vsel %vm387, %v439, %v441
    %v443 = vrot.slane %v55, 2
    %v444 = vrot.slane %v56, 2
    %v445 = vsel %vm387, %v443, %v444
    %v446 = vrot.slane %v57, 2
    %v447 = vsel %vm387, %v444, %v446
    %v448 = vrot.slane %v58, 2
    %v449 = vrot.slane %v59, 2
    %v450 = vsel %vm387, %v448, %v449
    %v451 = vrot.slane %v60, 2
    %v452 = vsel %vm387, %v449, %v451
    %v453 = vrot.slane %v61, 2
    %v454 = vrot.slane %v62, 2
    %v455 = vsel %vm387, %v453, %v454
    %v456 = vrot.slane %v63, 2
    %v457 = vsel %vm387, %v454, %v456
    %v458 = vrot.slane %v64, 2
    %v459 = vrot.slane %v65, 2
    %v460 = vsel %vm387, %v458, %v459
    %v461 = vrot.slane %v66, 2
    %v462 = vsel %vm387, %v459, %v461
    %v463 = vrot.slane %v67, 2
    %v464 = vrot.slane %v68, 2
    %v465 = vsel %vm387, %v463, %v464
    %v466 = vrot.slane %v69, 2
    %v467 = vsel %vm387, %v464, %v466
    %v468 = vrot.slane %v76, 2
    %v469 = vrot.slane %v77, 2
    %v470 = vsel %vm387, %v468, %v469
    %v471 = vrot.slane %v78, 2
    %v472 = vsel %vm387, %v469, %v471
    %v473 = vrot.slane %v79, 2
    %v474 = vrot.slane %v80, 2
    %v475 = vsel %vm387, %v473, %v474
    %v476 = vrot.slane %v81, 2
    %v477 = vsel %vm387, %v474, %v476
    %v478 = vrot.slane %v82, 2
    %v479 = vrot.slane %v83, 2
    %v480 = vsel %vm387, %v478, %v479
    %v481 = vrot.slane %v84, 2
    %v482 = vsel %vm387, %v479, %v481
    %v483 = vrot.slane %v85, 2
    %v484 = vrot.slane %v86, 2
    %v485 = vsel %vm387, %v483, %v484
    %v486 = vrot.slane %v87, 2
    %v487 = vsel %vm387, %v484, %v486
    %v488 = vrot.slane %v88, 2
    %v489 = vrot.slane %v89, 2
    %v490 = vsel %vm387, %v488, %v489
    %v491 = vrot.slane %v90, 2
    %v492 = vsel %vm387, %v489, %v491
    %v493 = vrot.slane %v91, 2
    %v494 = vrot.slane %v92, 2
    %v495 = vsel %vm387, %v493, %v494
    %v496 = vrot.slane %v93, 2
    %v497 = vsel %vm387, %v494, %v496
    %v498 = vrot.slane %v94, 2
    %v499 = vrot.slane %v95, 2
    %v500 = vsel %vm387, %v498, %v499
    %v501 = vrot.slane %v96, 2
    %v502 = vsel %vm387, %v499, %v501
    %v503 = vrot.slane %v97, 2
    %v504 = vrot.slane %v98, 2
    %v505 = vsel %vm387, %v503, %v504
    %v506 = vrot.slane %v99, 2
    %v507 = vsel %vm387, %v504, %v506
    %v508 = vrot.slane %v100, 2
    %v509 = vrot.slane %v101, 2
    %v510 = vsel %vm387, %v508, %v509
    %v511 = vrot.slane %v102, 2
    %v512 = vsel %vm387, %v509, %v511
    %v513 = vrot.slane %v103, 2
    %v514 = vrot.slane %v104, 2
    %v515 = vsel %vm387, %v513, %v514
    %v516 = vrot.slane %v105, 2
    %v517 = vsel %vm387, %v514, %v516
    %v518 = vrot.slane %v106, 2
    %v519 = vrot.slane %v107, 2
    %v520 = vsel %vm387, %v518, %v519
    %v521 = vrot.slane %v108, 2
    %v522 = vsel %vm387, %v519, %v521
    %v523 = vrot.slane %v109, 2
    %v524 = vrot.slane %v110, 2
    %v525 = vsel %vm387, %v523, %v524
    %v526 = vrot.slane %v111, 2
    %v527 = vsel %vm387, %v524, %v526
    %v528 = vrot.slane %v112, 2
    %v529 = vrot.slane %v113, 2
    %v530 = vsel %vm387, %v528, %v529
    %v531 = vrot.slane %v114, 2
    %v532 = vsel %vm387, %v529, %v531
    %v533 = vrot.slane %v115, 2
    %v534 = vrot.slane %v116, 2
    %v535 = vsel %vm387, %v533, %v534
    %v536 = vrot.slane %v117, 2
    %v537 = vsel %vm387, %v534, %v536
    %v538 = vrot.slane %v118, 2
    %v539 = vrot.slane %v119, 2
    %v540 = vsel %vm387, %v538, %v539
    %v541 = vrot.slane %v120, 2
    %v542 = vsel %vm387, %v539, %v541
    %v543 = vrot.slane %v121, 2
    %v544 = vrot.slane %v122, 2
    %v545 = vsel %vm387, %v543, %v544
    %v546 = vrot.slane %v123, 2
    %v547 = vsel %vm387, %v544, %v546
    %v554 = vrot.slane %v70, 1
    %v555 = vrot.slane %v71, 1
    %v556 = vsel %vm226, %v554, %v555
    %v557 = vrot.slane %v72, 1
    %v558 = vsel %vm226, %v555, %v557
    %v559 = vrot.slane %v124, 1
    %v560 = vrot.slane %v125, 1
    %v561 = vsel %vm226, %v559, %v560
    %v562 = vrot.slane %v126, 1
    %v563 = vsel %vm226, %v560, %v562
    %v628 = vrot.slane %v70, 2
    %v629 = vrot.slane %v71, 2
    %v630 = vsel %vm387, %v628, %v629
    %v631 = vrot.slane %v72, 2
    %v632 = vsel %vm387, %v629, %v631
    %v633 = vrot.slane %v124, 2
    %v634 = vrot.slane %v125, 2
    %v635 = vsel %vm387, %v633, %v634
    %v636 = vrot.slane %v126, 2
    %v637 = vsel %vm387, %v634, %v636
    %v644 = vrot.slane %v73, 1
    %v645 = vrot.slane %v74, 1
    %v646 = vsel %vm226, %v644, %v645
    %v647 = vrot.slane %v75, 1
    %v648 = vsel %vm226, %v645, %v647
    %v649 = vrot.slane %v127, 1
    %v650 = vrot.slane %v128, 1
    %v651 = vsel %vm226, %v649, %v650
    %v652 = vrot.slane %v129, 1
    %v653 = vsel %vm226, %v650, %v652
    %v654 = vrot.slane %v73, 2
    %v655 = vrot.slane %v74, 2
    %v656 = vsel %vm387, %v654, %v655
    %v657 = vrot.slane %v75, 2
    %v658 = vsel %vm387, %v655, %v657
    %v659 = vrot.slane %v127, 2
    %v660 = vrot.slane %v128, 2
    %v661 = vsel %vm387, %v659, %v660
    %v662 = vrot.slane %v129, 2
    %v663 = vsel %vm387, %v660, %v662
    %728 = vrot.lane.b32.xlu0 %v229, 32
    %v729 = vpop.permute.xlu0 %728
    %730 = vrot.lane.b32.xlu0 %v231, 32
    %v731 = vpop.permute.xlu0 %730
    %732 = vrot.lane.b32.xlu0 %v234, 32
    %v733 = vpop.permute.xlu0 %732
    %734 = vrot.lane.b32.xlu0 %v236, 32
    %v735 = vpop.permute.xlu0 %734
    %736 = vrot.lane.b32.xlu0 %v239, 32
    %v737 = vpop.permute.xlu0 %736
    %738 = vrot.lane.b32.xlu0 %v241, 32
    %v739 = vpop.permute.xlu0 %738
    %740 = vrot.lane.b32.xlu0 %v244, 32
    %v741 = vpop.permute.xlu0 %740
    %742 = vrot.lane.b32.xlu0 %v246, 32
    %v743 = vpop.permute.xlu0 %742
    %744 = vrot.lane.b32.xlu0 %v249, 32
    %v745 = vpop.permute.xlu0 %744
    %746 = vrot.lane.b32.xlu0 %v251, 32
    %v747 = vpop.permute.xlu0 %746
    %748 = vrot.lane.b32.xlu0 %v254, 32
    %v749 = vpop.permute.xlu0 %748
    %750 = vrot.lane.b32.xlu0 %v256, 32
    %v751 = vpop.permute.xlu0 %750
    %752 = vrot.lane.b32.xlu0 %v259, 32
    %v753 = vpop.permute.xlu0 %752
    %754 = vrot.lane.b32.xlu0 %v261, 32
    %v755 = vpop.permute.xlu0 %754
    %756 = vrot.lane.b32.xlu0 %v264, 32
    %v757 = vpop.permute.xlu0 %756
    %758 = vrot.lane.b32.xlu0 %v266, 32
    %v759 = vpop.permute.xlu0 %758
    %760 = vrot.lane.b32.xlu0 %v269, 32
    %v761 = vpop.permute.xlu0 %760
    %762 = vrot.lane.b32.xlu0 %v271, 32
    %v763 = vpop.permute.xlu0 %762
    %764 = vrot.lane.b32.xlu0 %v274, 32
    %v765 = vpop.permute.xlu0 %764
    %766 = vrot.lane.b32.xlu0 %v276, 32
    %v767 = vpop.permute.xlu0 %766
    %768 = vrot.lane.b32.xlu0 %v279, 32
    %v769 = vpop.permute.xlu0 %768
    %770 = vrot.lane.b32.xlu0 %v281, 32
    %v771 = vpop.permute.xlu0 %770
    %772 = vrot.lane.b32.xlu0 %v284, 32
    %v773 = vpop.permute.xlu0 %772
    %774 = vrot.lane.b32.xlu0 %v286, 32
    %v775 = vpop.permute.xlu0 %774
    %776 = vrot.lane.b32.xlu0 %v289, 32
    %v777 = vpop.permute.xlu0 %776
    %778 = vrot.lane.b32.xlu0 %v291, 32
    %v779 = vpop.permute.xlu0 %778
    %780 = vrot.lane.b32.xlu0 %v294, 32
    %v781 = vpop.permute.xlu0 %780
    %782 = vrot.lane.b32.xlu0 %v296, 32
    %v783 = vpop.permute.xlu0 %782
    %784 = vrot.lane.b32.xlu0 %v299, 32
    %v785 = vpop.permute.xlu0 %784
    %786 = vrot.lane.b32.xlu0 %v301, 32
    %v787 = vpop.permute.xlu0 %786
    %788 = vrot.lane.b32.xlu0 %v304, 32
    %v789 = vpop.permute.xlu0 %788
    %790 = vrot.lane.b32.xlu0 %v306, 32
    %v791 = vpop.permute.xlu0 %790
    %792 = vrot.lane.b32.xlu0 %v309, 32
    %v793 = vpop.permute.xlu0 %792
    %794 = vrot.lane.b32.xlu0 %v311, 32
    %v795 = vpop.permute.xlu0 %794
    %796 = vrot.lane.b32.xlu0 %v314, 32
    %v797 = vpop.permute.xlu0 %796
    %798 = vrot.lane.b32.xlu0 %v316, 32
    %v799 = vpop.permute.xlu0 %798
    %800 = vrot.lane.b32.xlu0 %v319, 32
    %v801 = vpop.permute.xlu0 %800
    %802 = vrot.lane.b32.xlu0 %v321, 32
    %v803 = vpop.permute.xlu0 %802
    %804 = vrot.lane.b32.xlu0 %v324, 32
    %v805 = vpop.permute.xlu0 %804
    %806 = vrot.lane.b32.xlu0 %v326, 32
    %v807 = vpop.permute.xlu0 %806
    %808 = vrot.lane.b32.xlu0 %v329, 32
    %v809 = vpop.permute.xlu0 %808
    %810 = vrot.lane.b32.xlu0 %v331, 32
    %v811 = vpop.permute.xlu0 %810
    %812 = vrot.lane.b32.xlu0 %v334, 32
    %v813 = vpop.permute.xlu0 %812
    %814 = vrot.lane.b32.xlu0 %v336, 32
    %v815 = vpop.permute.xlu0 %814
    %816 = vrot.lane.b32.xlu0 %v339, 32
    %v817 = vpop.permute.xlu0 %816
    %818 = vrot.lane.b32.xlu0 %v341, 32
    %v819 = vpop.permute.xlu0 %818
    %820 = vrot.lane.b32.xlu0 %v344, 32
    %v821 = vpop.permute.xlu0 %820
    %822 = vrot.lane.b32.xlu0 %v346, 32
    %v823 = vpop.permute.xlu0 %822
    %824 = vrot.lane.b32.xlu0 %v349, 32
    %v825 = vpop.permute.xlu0 %824
    %826 = vrot.lane.b32.xlu0 %v351, 32
    %v827 = vpop.permute.xlu0 %826
    %828 = vrot.lane.b32.xlu0 %v354, 32
    %v829 = vpop.permute.xlu0 %828
    %830 = vrot.lane.b32.xlu0 %v356, 32
    %v831 = vpop.permute.xlu0 %830
    %832 = vrot.lane.b32.xlu0 %v359, 32
    %v833 = vpop.permute.xlu0 %832
    %834 = vrot.lane.b32.xlu0 %v361, 32
    %v835 = vpop.permute.xlu0 %834
    %836 = vrot.lane.b32.xlu0 %v364, 32
    %v837 = vpop.permute.xlu0 %836
    %838 = vrot.lane.b32.xlu0 %v366, 32
    %v839 = vpop.permute.xlu0 %838
    %840 = vrot.lane.b32.xlu0 %v369, 32
    %v841 = vpop.permute.xlu0 %840
    %842 = vrot.lane.b32.xlu0 %v371, 32
    %v843 = vpop.permute.xlu0 %842
    %844 = vrot.lane.b32.xlu0 %v374, 32
    %v845 = vpop.permute.xlu0 %844
    %846 = vrot.lane.b32.xlu0 %v376, 32
    %v847 = vpop.permute.xlu0 %846
    %848 = vrot.lane.b32.xlu0 %v379, 32
    %v849 = vpop.permute.xlu0 %848
    %850 = vrot.lane.b32.xlu0 %v381, 32
    %v851 = vpop.permute.xlu0 %850
    %852 = vrot.lane.b32.xlu0 %v384, 32
    %v853 = vpop.permute.xlu0 %852
    %854 = vrot.lane.b32.xlu0 %v386, 32
    %v855 = vpop.permute.xlu0 %854
    %920 = vrot.lane.b32.xlu0 %v390, 64
    %v921 = vpop.permute.xlu0 %920
    %922 = vrot.lane.b32.xlu0 %v392, 64
    %v923 = vpop.permute.xlu0 %922
    %924 = vrot.lane.b32.xlu0 %v395, 64
    %v925 = vpop.permute.xlu0 %924
    %926 = vrot.lane.b32.xlu0 %v397, 64
    %v927 = vpop.permute.xlu0 %926
    %928 = vrot.lane.b32.xlu0 %v400, 64
    %v929 = vpop.permute.xlu0 %928
    %930 = vrot.lane.b32.xlu0 %v402, 64
    %v931 = vpop.permute.xlu0 %930
    %932 = vrot.lane.b32.xlu0 %v405, 64
    %v933 = vpop.permute.xlu0 %932
    %934 = vrot.lane.b32.xlu0 %v407, 64
    %v935 = vpop.permute.xlu0 %934
    %936 = vrot.lane.b32.xlu0 %v410, 64
    %v937 = vpop.permute.xlu0 %936
    %938 = vrot.lane.b32.xlu0 %v412, 64
    %v939 = vpop.permute.xlu0 %938
    %940 = vrot.lane.b32.xlu0 %v415, 64
    %v941 = vpop.permute.xlu0 %940
    %942 = vrot.lane.b32.xlu0 %v417, 64
    %v943 = vpop.permute.xlu0 %942
    %944 = vrot.lane.b32.xlu0 %v420, 64
    %v945 = vpop.permute.xlu0 %944
    %946 = vrot.lane.b32.xlu0 %v422, 64
    %v947 = vpop.permute.xlu0 %946
    %948 = vrot.lane.b32.xlu0 %v425, 64
    %v949 = vpop.permute.xlu0 %948
    %950 = vrot.lane.b32.xlu0 %v427, 64
    %v951 = vpop.permute.xlu0 %950
    %952 = vrot.lane.b32.xlu0 %v430, 64
    %v953 = vpop.permute.xlu0 %952
    %954 = vrot.lane.b32.xlu0 %v432, 64
    %v955 = vpop.permute.xlu0 %954
    %956 = vrot.lane.b32.xlu0 %v435, 64
    %v957 = vpop.permute.xlu0 %956
    %958 = vrot.lane.b32.xlu0 %v437, 64
    %v959 = vpop.permute.xlu0 %958
    %960 = vrot.lane.b32.xlu0 %v440, 64
    %v961 = vpop.permute.xlu0 %960
    %962 = vrot.lane.b32.xlu0 %v442, 64
    %v963 = vpop.permute.xlu0 %962
    %964 = vrot.lane.b32.xlu0 %v445, 64
    %v965 = vpop.permute.xlu0 %964
    %966 = vrot.lane.b32.xlu0 %v447, 64
    %v967 = vpop.permute.xlu0 %966
    %968 = vrot.lane.b32.xlu0 %v450, 64
    %v969 = vpop.permute.xlu0 %968
    %970 = vrot.lane.b32.xlu0 %v452, 64
    %v971 = vpop.permute.xlu0 %970
    %972 = vrot.lane.b32.xlu0 %v455, 64
    %v973 = vpop.permute.xlu0 %972
    %974 = vrot.lane.b32.xlu0 %v457, 64
    %v975 = vpop.permute.xlu0 %974
    %976 = vrot.lane.b32.xlu0 %v460, 64
    %v977 = vpop.permute.xlu0 %976
    %978 = vrot.lane.b32.xlu0 %v462, 64
    %v979 = vpop.permute.xlu0 %978
    %980 = vrot.lane.b32.xlu0 %v465, 64
    %v981 = vpop.permute.xlu0 %980
    %982 = vrot.lane.b32.xlu0 %v467, 64
    %v983 = vpop.permute.xlu0 %982
    %984 = vrot.lane.b32.xlu0 %v470, 64
    %v985 = vpop.permute.xlu0 %984
    %986 = vrot.lane.b32.xlu0 %v472, 64
    %v987 = vpop.permute.xlu0 %986
    %988 = vrot.lane.b32.xlu0 %v475, 64
    %v989 = vpop.permute.xlu0 %988
    %990 = vrot.lane.b32.xlu0 %v477, 64
    %v991 = vpop.permute.xlu0 %990
    %992 = vrot.lane.b32.xlu0 %v480, 64
    %v993 = vpop.permute.xlu0 %992
    %994 = vrot.lane.b32.xlu0 %v482, 64
    %v995 = vpop.permute.xlu0 %994
    %996 = vrot.lane.b32.xlu0 %v485, 64
    %v997 = vpop.permute.xlu0 %996
    %998 = vrot.lane.b32.xlu0 %v487, 64
    %v999 = vpop.permute.xlu0 %998
    %1000 = vrot.lane.b32.xlu0 %v490, 64
    %v1001 = vpop.permute.xlu0 %1000
    %1002 = vrot.lane.b32.xlu0 %v492, 64
    %v1003 = vpop.permute.xlu0 %1002
    %1004 = vrot.lane.b32.xlu0 %v495, 64
    %v1005 = vpop.permute.xlu0 %1004
    %1006 = vrot.lane.b32.xlu0 %v497, 64
    %v1007 = vpop.permute.xlu0 %1006
    %1008 = vrot.lane.b32.xlu0 %v500, 64
    %v1009 = vpop.permute.xlu0 %1008
    %1010 = vrot.lane.b32.xlu0 %v502, 64
    %v1011 = vpop.permute.xlu0 %1010
    %1012 = vrot.lane.b32.xlu0 %v505, 64
    %v1013 = vpop.permute.xlu0 %1012
    %1014 = vrot.lane.b32.xlu0 %v507, 64
    %v1015 = vpop.permute.xlu0 %1014
    %1016 = vrot.lane.b32.xlu0 %v510, 64
    %v1017 = vpop.permute.xlu0 %1016
    %1018 = vrot.lane.b32.xlu0 %v512, 64
    %v1019 = vpop.permute.xlu0 %1018
    %1020 = vrot.lane.b32.xlu0 %v515, 64
    %v1021 = vpop.permute.xlu0 %1020
    %1022 = vrot.lane.b32.xlu0 %v517, 64
    %v1023 = vpop.permute.xlu0 %1022
    %1024 = vrot.lane.b32.xlu0 %v520, 64
    %v1025 = vpop.permute.xlu0 %1024
    %1026 = vrot.lane.b32.xlu0 %v522, 64
    %v1027 = vpop.permute.xlu0 %1026
    %1028 = vrot.lane.b32.xlu0 %v525, 64
    %v1029 = vpop.permute.xlu0 %1028
    %1030 = vrot.lane.b32.xlu0 %v527, 64
    %v1031 = vpop.permute.xlu0 %1030
    %1032 = vrot.lane.b32.xlu0 %v530, 64
    %v1033 = vpop.permute.xlu0 %1032
    %1034 = vrot.lane.b32.xlu0 %v532, 64
    %v1035 = vpop.permute.xlu0 %1034
    %1036 = vrot.lane.b32.xlu0 %v535, 64
    %v1037 = vpop.permute.xlu0 %1036
    %1038 = vrot.lane.b32.xlu0 %v537, 64
    %v1039 = vpop.permute.xlu0 %1038
    %1040 = vrot.lane.b32.xlu0 %v540, 64
    %v1041 = vpop.permute.xlu0 %1040
    %1042 = vrot.lane.b32.xlu0 %v542, 64
    %v1043 = vpop.permute.xlu0 %1042
    %1044 = vrot.lane.b32.xlu0 %v545, 64
    %v1045 = vpop.permute.xlu0 %1044
    %1046 = vrot.lane.b32.xlu0 %v547, 64
    %v1047 = vpop.permute.xlu0 %1046
    %1112 = vrot.lane.b32.xlu0 %v25, 96
    %v1113 = vpop.permute.xlu0 %1112
    %1114 = vrot.lane.b32.xlu0 %v26, 96
    %v1115 = vpop.permute.xlu0 %1114
    %1116 = vrot.lane.b32.xlu0 %v28, 96
    %v1117 = vpop.permute.xlu0 %1116
    %1118 = vrot.lane.b32.xlu0 %v29, 96
    %v1119 = vpop.permute.xlu0 %1118
    %1120 = vrot.lane.b32.xlu0 %v31, 96
    %v1121 = vpop.permute.xlu0 %1120
    %1122 = vrot.lane.b32.xlu0 %v32, 96
    %v1123 = vpop.permute.xlu0 %1122
    %1124 = vrot.lane.b32.xlu0 %v34, 96
    %v1125 = vpop.permute.xlu0 %1124
    %1126 = vrot.lane.b32.xlu0 %v35, 96
    %v1127 = vpop.permute.xlu0 %1126
    %1128 = vrot.lane.b32.xlu0 %v37, 96
    %v1129 = vpop.permute.xlu0 %1128
    %1130 = vrot.lane.b32.xlu0 %v38, 96
    %v1131 = vpop.permute.xlu0 %1130
    %1132 = vrot.lane.b32.xlu0 %v40, 96
    %v1133 = vpop.permute.xlu0 %1132
    %1134 = vrot.lane.b32.xlu0 %v41, 96
    %v1135 = vpop.permute.xlu0 %1134
    %1136 = vrot.lane.b32.xlu0 %v43, 96
    %v1137 = vpop.permute.xlu0 %1136
    %1138 = vrot.lane.b32.xlu0 %v44, 96
    %v1139 = vpop.permute.xlu0 %1138
    %1140 = vrot.lane.b32.xlu0 %v46, 96
    %v1141 = vpop.permute.xlu0 %1140
    %1142 = vrot.lane.b32.xlu0 %v47, 96
    %v1143 = vpop.permute.xlu0 %1142
    %1144 = vrot.lane.b32.xlu0 %v49, 96
    %v1145 = vpop.permute.xlu0 %1144
    %1146 = vrot.lane.b32.xlu0 %v50, 96
    %v1147 = vpop.permute.xlu0 %1146
    %1148 = vrot.lane.b32.xlu0 %v52, 96
    %v1149 = vpop.permute.xlu0 %1148
    %1150 = vrot.lane.b32.xlu0 %v53, 96
    %v1151 = vpop.permute.xlu0 %1150
    %1152 = vrot.lane.b32.xlu0 %v55, 96
    %v1153 = vpop.permute.xlu0 %1152
    %1154 = vrot.lane.b32.xlu0 %v56, 96
    %v1155 = vpop.permute.xlu0 %1154
    %1156 = vrot.lane.b32.xlu0 %v58, 96
    %v1157 = vpop.permute.xlu0 %1156
    %1158 = vrot.lane.b32.xlu0 %v59, 96
    %v1159 = vpop.permute.xlu0 %1158
    %1160 = vrot.lane.b32.xlu0 %v61, 96
    %v1161 = vpop.permute.xlu0 %1160
    %1162 = vrot.lane.b32.xlu0 %v62, 96
    %v1163 = vpop.permute.xlu0 %1162
    %1164 = vrot.lane.b32.xlu0 %v64, 96
    %v1165 = vpop.permute.xlu0 %1164
    %1166 = vrot.lane.b32.xlu0 %v65, 96
    %v1167 = vpop.permute.xlu0 %1166
    %1168 = vrot.lane.b32.xlu0 %v67, 96
    %v1169 = vpop.permute.xlu0 %1168
    %1170 = vrot.lane.b32.xlu0 %v68, 96
    %v1171 = vpop.permute.xlu0 %1170
    %1172 = vrot.lane.b32.xlu0 %v70, 96
    %v1173 = vpop.permute.xlu0 %1172
    %1174 = vrot.lane.b32.xlu0 %v71, 96
    %v1175 = vpop.permute.xlu0 %1174
    %1176 = vrot.lane.b32.xlu0 %v79, 96
    %v1177 = vpop.permute.xlu0 %1176
    %1178 = vrot.lane.b32.xlu0 %v80, 96
    %v1179 = vpop.permute.xlu0 %1178
    %1180 = vrot.lane.b32.xlu0 %v82, 96
    %v1181 = vpop.permute.xlu0 %1180
    %1182 = vrot.lane.b32.xlu0 %v83, 96
    %v1183 = vpop.permute.xlu0 %1182
    %1184 = vrot.lane.b32.xlu0 %v85, 96
    %v1185 = vpop.permute.xlu0 %1184
    %1186 = vrot.lane.b32.xlu0 %v86, 96
    %v1187 = vpop.permute.xlu0 %1186
    %1188 = vrot.lane.b32.xlu0 %v88, 96
    %v1189 = vpop.permute.xlu0 %1188
    %1190 = vrot.lane.b32.xlu0 %v89, 96
    %v1191 = vpop.permute.xlu0 %1190
    %1192 = vrot.lane.b32.xlu0 %v91, 96
    %v1193 = vpop.permute.xlu0 %1192
    %1194 = vrot.lane.b32.xlu0 %v92, 96
    %v1195 = vpop.permute.xlu0 %1194
    %1196 = vrot.lane.b32.xlu0 %v94, 96
    %v1197 = vpop.permute.xlu0 %1196
    %1198 = vrot.lane.b32.xlu0 %v95, 96
    %v1199 = vpop.permute.xlu0 %1198
    %1200 = vrot.lane.b32.xlu0 %v97, 96
    %v1201 = vpop.permute.xlu0 %1200
    %1202 = vrot.lane.b32.xlu0 %v98, 96
    %v1203 = vpop.permute.xlu0 %1202
    %1204 = vrot.lane.b32.xlu0 %v100, 96
    %v1205 = vpop.permute.xlu0 %1204
    %1206 = vrot.lane.b32.xlu0 %v101, 96
    %v1207 = vpop.permute.xlu0 %1206
    %1208 = vrot.lane.b32.xlu0 %v103, 96
    %v1209 = vpop.permute.xlu0 %1208
    %1210 = vrot.lane.b32.xlu0 %v104, 96
    %v1211 = vpop.permute.xlu0 %1210
    %1212 = vrot.lane.b32.xlu0 %v106, 96
    %v1213 = vpop.permute.xlu0 %1212
    %1214 = vrot.lane.b32.xlu0 %v107, 96
    %v1215 = vpop.permute.xlu0 %1214
    %1216 = vrot.lane.b32.xlu0 %v109, 96
    %v1217 = vpop.permute.xlu0 %1216
    %1218 = vrot.lane.b32.xlu0 %v110, 96
    %v1219 = vpop.permute.xlu0 %1218
    %1220 = vrot.lane.b32.xlu0 %v112, 96
    %v1221 = vpop.permute.xlu0 %1220
    %1222 = vrot.lane.b32.xlu0 %v113, 96
    %v1223 = vpop.permute.xlu0 %1222
    %1224 = vrot.lane.b32.xlu0 %v115, 96
    %v1225 = vpop.permute.xlu0 %1224
    %1226 = vrot.lane.b32.xlu0 %v116, 96
    %v1227 = vpop.permute.xlu0 %1226
    %1228 = vrot.lane.b32.xlu0 %v118, 96
    %v1229 = vpop.permute.xlu0 %1228
    %1230 = vrot.lane.b32.xlu0 %v119, 96
    %v1231 = vpop.permute.xlu0 %1230
    %1232 = vrot.lane.b32.xlu0 %v121, 96
    %v1233 = vpop.permute.xlu0 %1232
    %1234 = vrot.lane.b32.xlu0 %v122, 96
    %v1235 = vpop.permute.xlu0 %1234
    %1236 = vrot.lane.b32.xlu0 %v124, 96
    %v1237 = vpop.permute.xlu0 %1236
    %1238 = vrot.lane.b32.xlu0 %v125, 96
    %v1239 = vpop.permute.xlu0 %1238
    %1304 = vrot.lane.b32.xlu0 %v395, 32
    %v1305 = vpop.permute.xlu0 %1304
    %1306 = vrot.lane.b32.xlu0 %v397, 32
    %v1307 = vpop.permute.xlu0 %1306
    %1308 = vrot.lane.b32.xlu0 %v400, 32
    %v1309 = vpop.permute.xlu0 %1308
    %1310 = vrot.lane.b32.xlu0 %v402, 32
    %v1311 = vpop.permute.xlu0 %1310
    %1312 = vrot.lane.b32.xlu0 %v405, 32
    %v1313 = vpop.permute.xlu0 %1312
    %1314 = vrot.lane.b32.xlu0 %v407, 32
    %v1315 = vpop.permute.xlu0 %1314
    %1316 = vrot.lane.b32.xlu0 %v410, 32
    %v1317 = vpop.permute.xlu0 %1316
    %1318 = vrot.lane.b32.xlu0 %v412, 32
    %v1319 = vpop.permute.xlu0 %1318
    %1320 = vrot.lane.b32.xlu0 %v415, 32
    %v1321 = vpop.permute.xlu0 %1320
    %1322 = vrot.lane.b32.xlu0 %v417, 32
    %v1323 = vpop.permute.xlu0 %1322
    %1324 = vrot.lane.b32.xlu0 %v420, 32
    %v1325 = vpop.permute.xlu0 %1324
    %1326 = vrot.lane.b32.xlu0 %v422, 32
    %v1327 = vpop.permute.xlu0 %1326
    %1328 = vrot.lane.b32.xlu0 %v425, 32
    %v1329 = vpop.permute.xlu0 %1328
    %1330 = vrot.lane.b32.xlu0 %v427, 32
    %v1331 = vpop.permute.xlu0 %1330
    %1332 = vrot.lane.b32.xlu0 %v430, 32
    %v1333 = vpop.permute.xlu0 %1332
    %1334 = vrot.lane.b32.xlu0 %v432, 32
    %v1335 = vpop.permute.xlu0 %1334
    %1336 = vrot.lane.b32.xlu0 %v435, 32
    %v1337 = vpop.permute.xlu0 %1336
    %1338 = vrot.lane.b32.xlu0 %v437, 32
    %v1339 = vpop.permute.xlu0 %1338
    %1340 = vrot.lane.b32.xlu0 %v440, 32
    %v1341 = vpop.permute.xlu0 %1340
    %1342 = vrot.lane.b32.xlu0 %v442, 32
    %v1343 = vpop.permute.xlu0 %1342
    %1344 = vrot.lane.b32.xlu0 %v445, 32
    %v1345 = vpop.permute.xlu0 %1344
    %1346 = vrot.lane.b32.xlu0 %v447, 32
    %v1347 = vpop.permute.xlu0 %1346
    %1348 = vrot.lane.b32.xlu0 %v450, 32
    %v1349 = vpop.permute.xlu0 %1348
    %1350 = vrot.lane.b32.xlu0 %v452, 32
    %v1351 = vpop.permute.xlu0 %1350
    %1352 = vrot.lane.b32.xlu0 %v455, 32
    %v1353 = vpop.permute.xlu0 %1352
    %1354 = vrot.lane.b32.xlu0 %v457, 32
    %v1355 = vpop.permute.xlu0 %1354
    %1356 = vrot.lane.b32.xlu0 %v460, 32
    %v1357 = vpop.permute.xlu0 %1356
    %1358 = vrot.lane.b32.xlu0 %v462, 32
    %v1359 = vpop.permute.xlu0 %1358
    %1360 = vrot.lane.b32.xlu0 %v465, 32
    %v1361 = vpop.permute.xlu0 %1360
    %1362 = vrot.lane.b32.xlu0 %v467, 32
    %v1363 = vpop.permute.xlu0 %1362
    %1364 = vrot.lane.b32.xlu0 %v630, 32
    %v1365 = vpop.permute.xlu0 %1364
    %1366 = vrot.lane.b32.xlu0 %v632, 32
    %v1367 = vpop.permute.xlu0 %1366
    %1368 = vrot.lane.b32.xlu0 %v475, 32
    %v1369 = vpop.permute.xlu0 %1368
    %1370 = vrot.lane.b32.xlu0 %v477, 32
    %v1371 = vpop.permute.xlu0 %1370
    %1372 = vrot.lane.b32.xlu0 %v480, 32
    %v1373 = vpop.permute.xlu0 %1372
    %1374 = vrot.lane.b32.xlu0 %v482, 32
    %v1375 = vpop.permute.xlu0 %1374
    %1376 = vrot.lane.b32.xlu0 %v485, 32
    %v1377 = vpop.permute.xlu0 %1376
    %1378 = vrot.lane.b32.xlu0 %v487, 32
    %v1379 = vpop.permute.xlu0 %1378
    %1380 = vrot.lane.b32.xlu0 %v490, 32
    %v1381 = vpop.permute.xlu0 %1380
    %1382 = vrot.lane.b32.xlu0 %v492, 32
    %v1383 = vpop.permute.xlu0 %1382
    %1384 = vrot.lane.b32.xlu0 %v495, 32
    %v1385 = vpop.permute.xlu0 %1384
    %1386 = vrot.lane.b32.xlu0 %v497, 32
    %v1387 = vpop.permute.xlu0 %1386
    %1388 = vrot.lane.b32.xlu0 %v500, 32
    %v1389 = vpop.permute.xlu0 %1388
    %1390 = vrot.lane.b32.xlu0 %v502, 32
    %v1391 = vpop.permute.xlu0 %1390
    %1392 = vrot.lane.b32.xlu0 %v505, 32
    %v1393 = vpop.permute.xlu0 %1392
    %1394 = vrot.lane.b32.xlu0 %v507, 32
    %v1395 = vpop.permute.xlu0 %1394
    %1396 = vrot.lane.b32.xlu0 %v510, 32
    %v1397 = vpop.permute.xlu0 %1396
    %1398 = vrot.lane.b32.xlu0 %v512, 32
    %v1399 = vpop.permute.xlu0 %1398
    %1400 = vrot.lane.b32.xlu0 %v515, 32
    %v1401 = vpop.permute.xlu0 %1400
    %1402 = vrot.lane.b32.xlu0 %v517, 32
    %v1403 = vpop.permute.xlu0 %1402
    %1404 = vrot.lane.b32.xlu0 %v520, 32
    %v1405 = vpop.permute.xlu0 %1404
    %1406 = vrot.lane.b32.xlu0 %v522, 32
    %v1407 = vpop.permute.xlu0 %1406
    %1408 = vrot.lane.b32.xlu0 %v525, 32
    %v1409 = vpop.permute.xlu0 %1408
    %1410 = vrot.lane.b32.xlu0 %v527, 32
    %v1411 = vpop.permute.xlu0 %1410
    %1412 = vrot.lane.b32.xlu0 %v530, 32
    %v1413 = vpop.permute.xlu0 %1412
    %1414 = vrot.lane.b32.xlu0 %v532, 32
    %v1415 = vpop.permute.xlu0 %1414
    %1416 = vrot.lane.b32.xlu0 %v535, 32
    %v1417 = vpop.permute.xlu0 %1416
    %1418 = vrot.lane.b32.xlu0 %v537, 32
    %v1419 = vpop.permute.xlu0 %1418
    %1420 = vrot.lane.b32.xlu0 %v540, 32
    %v1421 = vpop.permute.xlu0 %1420
    %1422 = vrot.lane.b32.xlu0 %v542, 32
    %v1423 = vpop.permute.xlu0 %1422
    %1424 = vrot.lane.b32.xlu0 %v545, 32
    %v1425 = vpop.permute.xlu0 %1424
    %1426 = vrot.lane.b32.xlu0 %v547, 32
    %v1427 = vpop.permute.xlu0 %1426
    %1428 = vrot.lane.b32.xlu0 %v635, 32
    %v1429 = vpop.permute.xlu0 %1428
    %1430 = vrot.lane.b32.xlu0 %v637, 32
    %v1431 = vpop.permute.xlu0 %1430
    %1496 = vrot.lane.b32.xlu0 %v28, 64
    %v1497 = vpop.permute.xlu0 %1496
    %1498 = vrot.lane.b32.xlu0 %v29, 64
    %v1499 = vpop.permute.xlu0 %1498
    %1500 = vrot.lane.b32.xlu0 %v31, 64
    %v1501 = vpop.permute.xlu0 %1500
    %1502 = vrot.lane.b32.xlu0 %v32, 64
    %v1503 = vpop.permute.xlu0 %1502
    %1504 = vrot.lane.b32.xlu0 %v34, 64
    %v1505 = vpop.permute.xlu0 %1504
    %1506 = vrot.lane.b32.xlu0 %v35, 64
    %v1507 = vpop.permute.xlu0 %1506
    %1508 = vrot.lane.b32.xlu0 %v37, 64
    %v1509 = vpop.permute.xlu0 %1508
    %1510 = vrot.lane.b32.xlu0 %v38, 64
    %v1511 = vpop.permute.xlu0 %1510
    %1512 = vrot.lane.b32.xlu0 %v40, 64
    %v1513 = vpop.permute.xlu0 %1512
    %1514 = vrot.lane.b32.xlu0 %v41, 64
    %v1515 = vpop.permute.xlu0 %1514
    %1516 = vrot.lane.b32.xlu0 %v43, 64
    %v1517 = vpop.permute.xlu0 %1516
    %1518 = vrot.lane.b32.xlu0 %v44, 64
    %v1519 = vpop.permute.xlu0 %1518
    %1520 = vrot.lane.b32.xlu0 %v46, 64
    %v1521 = vpop.permute.xlu0 %1520
    %1522 = vrot.lane.b32.xlu0 %v47, 64
    %v1523 = vpop.permute.xlu0 %1522
    %1524 = vrot.lane.b32.xlu0 %v49, 64
    %v1525 = vpop.permute.xlu0 %1524
    %1526 = vrot.lane.b32.xlu0 %v50, 64
    %v1527 = vpop.permute.xlu0 %1526
    %1528 = vrot.lane.b32.xlu0 %v52, 64
    %v1529 = vpop.permute.xlu0 %1528
    %1530 = vrot.lane.b32.xlu0 %v53, 64
    %v1531 = vpop.permute.xlu0 %1530
    %1532 = vrot.lane.b32.xlu0 %v55, 64
    %v1533 = vpop.permute.xlu0 %1532
    %1534 = vrot.lane.b32.xlu0 %v56, 64
    %v1535 = vpop.permute.xlu0 %1534
    %1536 = vrot.lane.b32.xlu0 %v58, 64
    %v1537 = vpop.permute.xlu0 %1536
    %1538 = vrot.lane.b32.xlu0 %v59, 64
    %v1539 = vpop.permute.xlu0 %1538
    %1540 = vrot.lane.b32.xlu0 %v61, 64
    %v1541 = vpop.permute.xlu0 %1540
    %1542 = vrot.lane.b32.xlu0 %v62, 64
    %v1543 = vpop.permute.xlu0 %1542
    %1544 = vrot.lane.b32.xlu0 %v64, 64
    %v1545 = vpop.permute.xlu0 %1544
    %1546 = vrot.lane.b32.xlu0 %v65, 64
    %v1547 = vpop.permute.xlu0 %1546
    %1548 = vrot.lane.b32.xlu0 %v67, 64
    %v1549 = vpop.permute.xlu0 %1548
    %1550 = vrot.lane.b32.xlu0 %v68, 64
    %v1551 = vpop.permute.xlu0 %1550
    %1552 = vrot.lane.b32.xlu0 %v70, 64
    %v1553 = vpop.permute.xlu0 %1552
    %1554 = vrot.lane.b32.xlu0 %v71, 64
    %v1555 = vpop.permute.xlu0 %1554
    %1556 = vrot.lane.b32.xlu0 %v73, 64
    %v1557 = vpop.permute.xlu0 %1556
    %1558 = vrot.lane.b32.xlu0 %v74, 64
    %v1559 = vpop.permute.xlu0 %1558
    %1560 = vrot.lane.b32.xlu0 %v82, 64
    %v1561 = vpop.permute.xlu0 %1560
    %1562 = vrot.lane.b32.xlu0 %v83, 64
    %v1563 = vpop.permute.xlu0 %1562
    %1564 = vrot.lane.b32.xlu0 %v85, 64
    %v1565 = vpop.permute.xlu0 %1564
    %1566 = vrot.lane.b32.xlu0 %v86, 64
    %v1567 = vpop.permute.xlu0 %1566
    %1568 = vrot.lane.b32.xlu0 %v88, 64
    %v1569 = vpop.permute.xlu0 %1568
    %1570 = vrot.lane.b32.xlu0 %v89, 64
    %v1571 = vpop.permute.xlu0 %1570
    %1572 = vrot.lane.b32.xlu0 %v91, 64
    %v1573 = vpop.permute.xlu0 %1572
    %1574 = vrot.lane.b32.xlu0 %v92, 64
    %v1575 = vpop.permute.xlu0 %1574
    %1576 = vrot.lane.b32.xlu0 %v94, 64
    %v1577 = vpop.permute.xlu0 %1576
    %1578 = vrot.lane.b32.xlu0 %v95, 64
    %v1579 = vpop.permute.xlu0 %1578
    %1580 = vrot.lane.b32.xlu0 %v97, 64
    %v1581 = vpop.permute.xlu0 %1580
    %1582 = vrot.lane.b32.xlu0 %v98, 64
    %v1583 = vpop.permute.xlu0 %1582
    %1584 = vrot.lane.b32.xlu0 %v100, 64
    %v1585 = vpop.permute.xlu0 %1584
    %1586 = vrot.lane.b32.xlu0 %v101, 64
    %v1587 = vpop.permute.xlu0 %1586
    %1588 = vrot.lane.b32.xlu0 %v103, 64
    %v1589 = vpop.permute.xlu0 %1588
    %1590 = vrot.lane.b32.xlu0 %v104, 64
    %v1591 = vpop.permute.xlu0 %1590
    %1592 = vrot.lane.b32.xlu0 %v106, 64
    %v1593 = vpop.permute.xlu0 %1592
    %1594 = vrot.lane.b32.xlu0 %v107, 64
    %v1595 = vpop.permute.xlu0 %1594
    %1596 = vrot.lane.b32.xlu0 %v109, 64
    %v1597 = vpop.permute.xlu0 %1596
    %1598 = vrot.lane.b32.xlu0 %v110, 64
    %v1599 = vpop.permute.xlu0 %1598
    %1600 = vrot.lane.b32.xlu0 %v112, 64
    %v1601 = vpop.permute.xlu0 %1600
    %1602 = vrot.lane.b32.xlu0 %v113, 64
    %v1603 = vpop.permute.xlu0 %1602
    %1604 = vrot.lane.b32.xlu0 %v115, 64
    %v1605 = vpop.permute.xlu0 %1604
    %1606 = vrot.lane.b32.xlu0 %v116, 64
    %v1607 = vpop.permute.xlu0 %1606
    %1608 = vrot.lane.b32.xlu0 %v118, 64
    %v1609 = vpop.permute.xlu0 %1608
    %1610 = vrot.lane.b32.xlu0 %v119, 64
    %v1611 = vpop.permute.xlu0 %1610
    %1612 = vrot.lane.b32.xlu0 %v121, 64
    %v1613 = vpop.permute.xlu0 %1612
    %1614 = vrot.lane.b32.xlu0 %v122, 64
    %v1615 = vpop.permute.xlu0 %1614
    %1616 = vrot.lane.b32.xlu0 %v124, 64
    %v1617 = vpop.permute.xlu0 %1616
    %1618 = vrot.lane.b32.xlu0 %v125, 64
    %v1619 = vpop.permute.xlu0 %1618
    %1620 = vrot.lane.b32.xlu0 %v127, 64
    %v1621 = vpop.permute.xlu0 %1620
    %1622 = vrot.lane.b32.xlu0 %v128, 64
    %v1623 = vpop.permute.xlu0 %1622
    %1688 = vrot.lane.b32.xlu0 %v239, 96
    %v1689 = vpop.permute.xlu0 %1688
    %1690 = vrot.lane.b32.xlu0 %v241, 96
    %v1691 = vpop.permute.xlu0 %1690
    %1692 = vrot.lane.b32.xlu0 %v244, 96
    %v1693 = vpop.permute.xlu0 %1692
    %1694 = vrot.lane.b32.xlu0 %v246, 96
    %v1695 = vpop.permute.xlu0 %1694
    %1696 = vrot.lane.b32.xlu0 %v249, 96
    %v1697 = vpop.permute.xlu0 %1696
    %1698 = vrot.lane.b32.xlu0 %v251, 96
    %v1699 = vpop.permute.xlu0 %1698
    %1700 = vrot.lane.b32.xlu0 %v254, 96
    %v1701 = vpop.permute.xlu0 %1700
    %1702 = vrot.lane.b32.xlu0 %v256, 96
    %v1703 = vpop.permute.xlu0 %1702
    %1704 = vrot.lane.b32.xlu0 %v259, 96
    %v1705 = vpop.permute.xlu0 %1704
    %1706 = vrot.lane.b32.xlu0 %v261, 96
    %v1707 = vpop.permute.xlu0 %1706
    %1708 = vrot.lane.b32.xlu0 %v264, 96
    %v1709 = vpop.permute.xlu0 %1708
    %1710 = vrot.lane.b32.xlu0 %v266, 96
    %v1711 = vpop.permute.xlu0 %1710
    %1712 = vrot.lane.b32.xlu0 %v269, 96
    %v1713 = vpop.permute.xlu0 %1712
    %1714 = vrot.lane.b32.xlu0 %v271, 96
    %v1715 = vpop.permute.xlu0 %1714
    %1716 = vrot.lane.b32.xlu0 %v274, 96
    %v1717 = vpop.permute.xlu0 %1716
    %1718 = vrot.lane.b32.xlu0 %v276, 96
    %v1719 = vpop.permute.xlu0 %1718
    %1720 = vrot.lane.b32.xlu0 %v279, 96
    %v1721 = vpop.permute.xlu0 %1720
    %1722 = vrot.lane.b32.xlu0 %v281, 96
    %v1723 = vpop.permute.xlu0 %1722
    %1724 = vrot.lane.b32.xlu0 %v284, 96
    %v1725 = vpop.permute.xlu0 %1724
    %1726 = vrot.lane.b32.xlu0 %v286, 96
    %v1727 = vpop.permute.xlu0 %1726
    %1728 = vrot.lane.b32.xlu0 %v289, 96
    %v1729 = vpop.permute.xlu0 %1728
    %1730 = vrot.lane.b32.xlu0 %v291, 96
    %v1731 = vpop.permute.xlu0 %1730
    %1732 = vrot.lane.b32.xlu0 %v294, 96
    %v1733 = vpop.permute.xlu0 %1732
    %1734 = vrot.lane.b32.xlu0 %v296, 96
    %v1735 = vpop.permute.xlu0 %1734
    %1736 = vrot.lane.b32.xlu0 %v299, 96
    %v1737 = vpop.permute.xlu0 %1736
    %1738 = vrot.lane.b32.xlu0 %v301, 96
    %v1739 = vpop.permute.xlu0 %1738
    %1740 = vrot.lane.b32.xlu0 %v304, 96
    %v1741 = vpop.permute.xlu0 %1740
    %1742 = vrot.lane.b32.xlu0 %v306, 96
    %v1743 = vpop.permute.xlu0 %1742
    %1744 = vrot.lane.b32.xlu0 %v556, 96
    %v1745 = vpop.permute.xlu0 %1744
    %1746 = vrot.lane.b32.xlu0 %v558, 96
    %v1747 = vpop.permute.xlu0 %1746
    %1748 = vrot.lane.b32.xlu0 %v646, 96
    %v1749 = vpop.permute.xlu0 %1748
    %1750 = vrot.lane.b32.xlu0 %v648, 96
    %v1751 = vpop.permute.xlu0 %1750
    %1752 = vrot.lane.b32.xlu0 %v319, 96
    %v1753 = vpop.permute.xlu0 %1752
    %1754 = vrot.lane.b32.xlu0 %v321, 96
    %v1755 = vpop.permute.xlu0 %1754
    %1756 = vrot.lane.b32.xlu0 %v324, 96
    %v1757 = vpop.permute.xlu0 %1756
    %1758 = vrot.lane.b32.xlu0 %v326, 96
    %v1759 = vpop.permute.xlu0 %1758
    %1760 = vrot.lane.b32.xlu0 %v329, 96
    %v1761 = vpop.permute.xlu0 %1760
    %1762 = vrot.lane.b32.xlu0 %v331, 96
    %v1763 = vpop.permute.xlu0 %1762
    %1764 = vrot.lane.b32.xlu0 %v334, 96
    %v1765 = vpop.permute.xlu0 %1764
    %1766 = vrot.lane.b32.xlu0 %v336, 96
    %v1767 = vpop.permute.xlu0 %1766
    %1768 = vrot.lane.b32.xlu0 %v339, 96
    %v1769 = vpop.permute.xlu0 %1768
    %1770 = vrot.lane.b32.xlu0 %v341, 96
    %v1771 = vpop.permute.xlu0 %1770
    %1772 = vrot.lane.b32.xlu0 %v344, 96
    %v1773 = vpop.permute.xlu0 %1772
    %1774 = vrot.lane.b32.xlu0 %v346, 96
    %v1775 = vpop.permute.xlu0 %1774
    %1776 = vrot.lane.b32.xlu0 %v349, 96
    %v1777 = vpop.permute.xlu0 %1776
    %1778 = vrot.lane.b32.xlu0 %v351, 96
    %v1779 = vpop.permute.xlu0 %1778
    %1780 = vrot.lane.b32.xlu0 %v354, 96
    %v1781 = vpop.permute.xlu0 %1780
    %1782 = vrot.lane.b32.xlu0 %v356, 96
    %v1783 = vpop.permute.xlu0 %1782
    %1784 = vrot.lane.b32.xlu0 %v359, 96
    %v1785 = vpop.permute.xlu0 %1784
    %1786 = vrot.lane.b32.xlu0 %v361, 96
    %v1787 = vpop.permute.xlu0 %1786
    %1788 = vrot.lane.b32.xlu0 %v364, 96
    %v1789 = vpop.permute.xlu0 %1788
    %1790 = vrot.lane.b32.xlu0 %v366, 96
    %v1791 = vpop.permute.xlu0 %1790
    %1792 = vrot.lane.b32.xlu0 %v369, 96
    %v1793 = vpop.permute.xlu0 %1792
    %1794 = vrot.lane.b32.xlu0 %v371, 96
    %v1795 = vpop.permute.xlu0 %1794
    %1796 = vrot.lane.b32.xlu0 %v374, 96
    %v1797 = vpop.permute.xlu0 %1796
    %1798 = vrot.lane.b32.xlu0 %v376, 96
    %v1799 = vpop.permute.xlu0 %1798
    %1800 = vrot.lane.b32.xlu0 %v379, 96
    %v1801 = vpop.permute.xlu0 %1800
    %1802 = vrot.lane.b32.xlu0 %v381, 96
    %v1803 = vpop.permute.xlu0 %1802
    %1804 = vrot.lane.b32.xlu0 %v384, 96
    %v1805 = vpop.permute.xlu0 %1804
    %1806 = vrot.lane.b32.xlu0 %v386, 96
    %v1807 = vpop.permute.xlu0 %1806
    %1808 = vrot.lane.b32.xlu0 %v561, 96
    %v1809 = vpop.permute.xlu0 %1808
    %1810 = vrot.lane.b32.xlu0 %v563, 96
    %v1811 = vpop.permute.xlu0 %1810
    %1812 = vrot.lane.b32.xlu0 %v651, 96
    %v1813 = vpop.permute.xlu0 %1812
    %1814 = vrot.lane.b32.xlu0 %v653, 96
    %v1815 = vpop.permute.xlu0 %1814
    %vm1880 = vcmask 261120
    %v1881 = vsel %vm1880, %v22, %v729
    %v1882 = vsel %vm1880, %v23, %v731
    %v1883 = vsel %vm1880, %v25, %v733
    %v1884 = vsel %vm1880, %v26, %v735
    %v1885 = vsel %vm1880, %v28, %v737
    %v1886 = vsel %vm1880, %v29, %v739
    %v1887 = vsel %vm1880, %v31, %v741
    %v1888 = vsel %vm1880, %v32, %v743
    %v1889 = vsel %vm1880, %v34, %v745
    %v1890 = vsel %vm1880, %v35, %v747
    %v1891 = vsel %vm1880, %v37, %v749
    %v1892 = vsel %vm1880, %v38, %v751
    %v1893 = vsel %vm1880, %v40, %v753
    %v1894 = vsel %vm1880, %v41, %v755
    %v1895 = vsel %vm1880, %v43, %v757
    %v1896 = vsel %vm1880, %v44, %v759
    %v1897 = vsel %vm1880, %v46, %v761
    %v1898 = vsel %vm1880, %v47, %v763
    %v1899 = vsel %vm1880, %v49, %v765
    %v1900 = vsel %vm1880, %v50, %v767
    %v1901 = vsel %vm1880, %v52, %v769
    %v1902 = vsel %vm1880, %v53, %v771
    %v1903 = vsel %vm1880, %v55, %v773
    %v1904 = vsel %vm1880, %v56, %v775
    %v1905 = vsel %vm1880, %v58, %v777
    %v1906 = vsel %vm1880, %v59, %v779
    %v1907 = vsel %vm1880, %v61, %v781
    %v1908 = vsel %vm1880, %v62, %v783
    %v1909 = vsel %vm1880, %v64, %v785
    %v1910 = vsel %vm1880, %v65, %v787
    %v1911 = vsel %vm1880, %v67, %v789
    %v1912 = vsel %vm1880, %v68, %v791
    %v1913 = vsel %vm1880, %v76, %v793
    %v1914 = vsel %vm1880, %v77, %v795
    %v1915 = vsel %vm1880, %v79, %v797
    %v1916 = vsel %vm1880, %v80, %v799
    %v1917 = vsel %vm1880, %v82, %v801
    %v1918 = vsel %vm1880, %v83, %v803
    %v1919 = vsel %vm1880, %v85, %v805
    %v1920 = vsel %vm1880, %v86, %v807
    %v1921 = vsel %vm1880, %v88, %v809
    %v1922 = vsel %vm1880, %v89, %v811
    %v1923 = vsel %vm1880, %v91, %v813
    %v1924 = vsel %vm1880, %v92, %v815
    %v1925 = vsel %vm1880, %v94, %v817
    %v1926 = vsel %vm1880, %v95, %v819
    %v1927 = vsel %vm1880, %v97, %v821
    %v1928 = vsel %vm1880, %v98, %v823
    %v1929 = vsel %vm1880, %v100, %v825
    %v1930 = vsel %vm1880, %v101, %v827
    %v1931 = vsel %vm1880, %v103, %v829
    %v1932 = vsel %vm1880, %v104, %v831
    %v1933 = vsel %vm1880, %v106, %v833
    %v1934 = vsel %vm1880, %v107, %v835
    %v1935 = vsel %vm1880, %v109, %v837
    %v1936 = vsel %vm1880, %v110, %v839
    %v1937 = vsel %vm1880, %v112, %v841
    %v1938 = vsel %vm1880, %v113, %v843
    %v1939 = vsel %vm1880, %v115, %v845
    %v1940 = vsel %vm1880, %v116, %v847
    %v1941 = vsel %vm1880, %v118, %v849
    %v1942 = vsel %vm1880, %v119, %v851
    %v1943 = vsel %vm1880, %v121, %v853
    %v1944 = vsel %vm1880, %v122, %v855
    %vm1945 = vcmask 523264
    %v1946 = vsel %vm1945, %v1881, %v921
    %v1947 = vsel %vm1945, %v1882, %v923
    %v1948 = vsel %vm1945, %v1883, %v925
    %v1949 = vsel %vm1945, %v1884, %v927
    %v1950 = vsel %vm1945, %v1885, %v929
    %v1951 = vsel %vm1945, %v1886, %v931
    %v1952 = vsel %vm1945, %v1887, %v933
    %v1953 = vsel %vm1945, %v1888, %v935
    %v1954 = vsel %vm1945, %v1889, %v937
    %v1955 = vsel %vm1945, %v1890, %v939
    %v1956 = vsel %vm1945, %v1891, %v941
    %v1957 = vsel %vm1945, %v1892, %v943
    %v1958 = vsel %vm1945, %v1893, %v945
    %v1959 = vsel %vm1945, %v1894, %v947
    %v1960 = vsel %vm1945, %v1895, %v949
    %v1961 = vsel %vm1945, %v1896, %v951
    %v1962 = vsel %vm1945, %v1897, %v953
    %v1963 = vsel %vm1945, %v1898, %v955
    %v1964 = vsel %vm1945, %v1899, %v957
    %v1965 = vsel %vm1945, %v1900, %v959
    %v1966 = vsel %vm1945, %v1901, %v961
    %v1967 = vsel %vm1945, %v1902, %v963
    %v1968 = vsel %vm1945, %v1903, %v965
    %v1969 = vsel %vm1945, %v1904, %v967
    %v1970 = vsel %vm1945, %v1905, %v969
    %v1971 = vsel %vm1945, %v1906, %v971
    %v1972 = vsel %vm1945, %v1907, %v973
    %v1973 = vsel %vm1945, %v1908, %v975
    %v1974 = vsel %vm1945, %v1909, %v977
    %v1975 = vsel %vm1945, %v1910, %v979
    %v1976 = vsel %vm1945, %v1911, %v981
    %v1977 = vsel %vm1945, %v1912, %v983
    %v1978 = vsel %vm1945, %v1913, %v985
    %v1979 = vsel %vm1945, %v1914, %v987
    %v1980 = vsel %vm1945, %v1915, %v989
    %v1981 = vsel %vm1945, %v1916, %v991
    %v1982 = vsel %vm1945, %v1917, %v993
    %v1983 = vsel %vm1945, %v1918, %v995
    %v1984 = vsel %vm1945, %v1919, %v997
    %v1985 = vsel %vm1945, %v1920, %v999
    %v1986 = vsel %vm1945, %v1921, %v1001
    %v1987 = vsel %vm1945, %v1922, %v1003
    %v1988 = vsel %vm1945, %v1923, %v1005
    %v1989 = vsel %vm1945, %v1924, %v1007
    %v1990 = vsel %vm1945, %v1925, %v1009
    %v1991 = vsel %vm1945, %v1926, %v1011
    %v1992 = vsel %vm1945, %v1927, %v1013
    %v1993 = vsel %vm1945, %v1928, %v1015
    %v1994 = vsel %vm1945, %v1929, %v1017
    %v1995 = vsel %vm1945, %v1930, %v1019
    %v1996 = vsel %vm1945, %v1931, %v1021
    %v1997 = vsel %vm1945, %v1932, %v1023
    %v1998 = vsel %vm1945, %v1933, %v1025
    %v1999 = vsel %vm1945, %v1934, %v1027
    %v2000 = vsel %vm1945, %v1935, %v1029
    %v2001 = vsel %vm1945, %v1936, %v1031
    %v2002 = vsel %vm1945, %v1937, %v1033
    %v2003 = vsel %vm1945, %v1938, %v1035
    %v2004 = vsel %vm1945, %v1939, %v1037
    %v2005 = vsel %vm1945, %v1940, %v1039
    %v2006 = vsel %vm1945, %v1941, %v1041
    %v2007 = vsel %vm1945, %v1942, %v1043
    %v2008 = vsel %vm1945, %v1943, %v1045
    %v2009 = vsel %vm1945, %v1944, %v1047
    %vm2010 = vcmask 785408
    %v2011 = vsel %vm2010, %v1946, %v1113
    %v2012 = vsel %vm2010, %v1947, %v1115
    %v2013 = vsel %vm2010, %v1948, %v1117
    %v2014 = vsel %vm2010, %v1949, %v1119
    %v2015 = vsel %vm2010, %v1950, %v1121
    %v2016 = vsel %vm2010, %v1951, %v1123
    %v2017 = vsel %vm2010, %v1952, %v1125
    %v2018 = vsel %vm2010, %v1953, %v1127
    %v2019 = vsel %vm2010, %v1954, %v1129
    %v2020 = vsel %vm2010, %v1955, %v1131
    %v2021 = vsel %vm2010, %v1956, %v1133
    %v2022 = vsel %vm2010, %v1957, %v1135
    %v2023 = vsel %vm2010, %v1958, %v1137
    %v2024 = vsel %vm2010, %v1959, %v1139
    %v2025 = vsel %vm2010, %v1960, %v1141
    %v2026 = vsel %vm2010, %v1961, %v1143
    %v2027 = vsel %vm2010, %v1962, %v1145
    %v2028 = vsel %vm2010, %v1963, %v1147
    %v2029 = vsel %vm2010, %v1964, %v1149
    %v2030 = vsel %vm2010, %v1965, %v1151
    %v2031 = vsel %vm2010, %v1966, %v1153
    %v2032 = vsel %vm2010, %v1967, %v1155
    %v2033 = vsel %vm2010, %v1968, %v1157
    %v2034 = vsel %vm2010, %v1969, %v1159
    %v2035 = vsel %vm2010, %v1970, %v1161
    %v2036 = vsel %vm2010, %v1971, %v1163
    %v2037 = vsel %vm2010, %v1972, %v1165
    %v2038 = vsel %vm2010, %v1973, %v1167
    %v2039 = vsel %vm2010, %v1974, %v1169
    %v2040 = vsel %vm2010, %v1975, %v1171
    %v2041 = vsel %vm2010, %v1976, %v1173
    %v2042 = vsel %vm2010, %v1977, %v1175
    %v2043 = vsel %vm2010, %v1978, %v1177
    %v2044 = vsel %vm2010, %v1979, %v1179
    %v2045 = vsel %vm2010, %v1980, %v1181
    %v2046 = vsel %vm2010, %v1981, %v1183
    %v2047 = vsel %vm2010, %v1982, %v1185
    %v2048 = vsel %vm2010, %v1983, %v1187
    %v2049 = vsel %vm2010, %v1984, %v1189
    %v2050 = vsel %vm2010, %v1985, %v1191
    %v2051 = vsel %vm2010, %v1986, %v1193
    %v2052 = vsel %vm2010, %v1987, %v1195
    %v2053 = vsel %vm2010, %v1988, %v1197
    %v2054 = vsel %vm2010, %v1989, %v1199
    %v2055 = vsel %vm2010, %v1990, %v1201
    %v2056 = vsel %vm2010, %v1991, %v1203
    %v2057 = vsel %vm2010, %v1992, %v1205
    %v2058 = vsel %vm2010, %v1993, %v1207
    %v2059 = vsel %vm2010, %v1994, %v1209
    %v2060 = vsel %vm2010, %v1995, %v1211
    %v2061 = vsel %vm2010, %v1996, %v1213
    %v2062 = vsel %vm2010, %v1997, %v1215
    %v2063 = vsel %vm2010, %v1998, %v1217
    %v2064 = vsel %vm2010, %v1999, %v1219
    %v2065 = vsel %vm2010, %v2000, %v1221
    %v2066 = vsel %vm2010, %v2001, %v1223
    %v2067 = vsel %vm2010, %v2002, %v1225
    %v2068 = vsel %vm2010, %v2003, %v1227
    %v2069 = vsel %vm2010, %v2004, %v1229
    %v2070 = vsel %vm2010, %v2005, %v1231
    %v2071 = vsel %vm2010, %v2006, %v1233
    %v2072 = vsel %vm2010, %v2007, %v1235
    %v2073 = vsel %vm2010, %v2008, %v1237
    %v2074 = vsel %vm2010, %v2009, %v1239
    %v2075 = vsel %vm1880, %v234, %v1305
    %v2076 = vsel %vm1880, %v236, %v1307
    %v2077 = vsel %vm1880, %v239, %v1309
    %v2078 = vsel %vm1880, %v241, %v1311
    %v2079 = vsel %vm1880, %v244, %v1313
    %v2080 = vsel %vm1880, %v246, %v1315
    %v2081 = vsel %vm1880, %v249, %v1317
    %v2082 = vsel %vm1880, %v251, %v1319
    %v2083 = vsel %vm1880, %v254, %v1321
    %v2084 = vsel %vm1880, %v256, %v1323
    %v2085 = vsel %vm1880, %v259, %v1325
    %v2086 = vsel %vm1880, %v261, %v1327
    %v2087 = vsel %vm1880, %v264, %v1329
    %v2088 = vsel %vm1880, %v266, %v1331
    %v2089 = vsel %vm1880, %v269, %v1333
    %v2090 = vsel %vm1880, %v271, %v1335
    %v2091 = vsel %vm1880, %v274, %v1337
    %v2092 = vsel %vm1880, %v276, %v1339
    %v2093 = vsel %vm1880, %v279, %v1341
    %v2094 = vsel %vm1880, %v281, %v1343
    %v2095 = vsel %vm1880, %v284, %v1345
    %v2096 = vsel %vm1880, %v286, %v1347
    %v2097 = vsel %vm1880, %v289, %v1349
    %v2098 = vsel %vm1880, %v291, %v1351
    %v2099 = vsel %vm1880, %v294, %v1353
    %v2100 = vsel %vm1880, %v296, %v1355
    %v2101 = vsel %vm1880, %v299, %v1357
    %v2102 = vsel %vm1880, %v301, %v1359
    %v2103 = vsel %vm1880, %v304, %v1361
    %v2104 = vsel %vm1880, %v306, %v1363
    %v2105 = vsel %vm1880, %v556, %v1365
    %v2106 = vsel %vm1880, %v558, %v1367
    %v2107 = vsel %vm1880, %v314, %v1369
    %v2108 = vsel %vm1880, %v316, %v1371
    %v2109 = vsel %vm1880, %v319, %v1373
    %v2110 = vsel %vm1880, %v321, %v1375
    %v2111 = vsel %vm1880, %v324, %v1377
    %v2112 = vsel %vm1880, %v326, %v1379
    %v2113 = vsel %vm1880, %v329, %v1381
    %v2114 = vsel %vm1880, %v331, %v1383
    %v2115 = vsel %vm1880, %v334, %v1385
    %v2116 = vsel %vm1880, %v336, %v1387
    %v2117 = vsel %vm1880, %v339, %v1389
    %v2118 = vsel %vm1880, %v341, %v1391
    %v2119 = vsel %vm1880, %v344, %v1393
    %v2120 = vsel %vm1880, %v346, %v1395
    %v2121 = vsel %vm1880, %v349, %v1397
    %v2122 = vsel %vm1880, %v351, %v1399
    %v2123 = vsel %vm1880, %v354, %v1401
    %v2124 = vsel %vm1880, %v356, %v1403
    %v2125 = vsel %vm1880, %v359, %v1405
    %v2126 = vsel %vm1880, %v361, %v1407
    %v2127 = vsel %vm1880, %v364, %v1409
    %v2128 = vsel %vm1880, %v366, %v1411
    %v2129 = vsel %vm1880, %v369, %v1413
    %v2130 = vsel %vm1880, %v371, %v1415
    %v2131 = vsel %vm1880, %v374, %v1417
    %v2132 = vsel %vm1880, %v376, %v1419
    %v2133 = vsel %vm1880, %v379, %v1421
    %v2134 = vsel %vm1880, %v381, %v1423
    %v2135 = vsel %vm1880, %v384, %v1425
    %v2136 = vsel %vm1880, %v386, %v1427
    %v2137 = vsel %vm1880, %v561, %v1429
    %v2138 = vsel %vm1880, %v563, %v1431
    %v2139 = vsel %vm1945, %v2075, %v1497
    %v2140 = vsel %vm1945, %v2076, %v1499
    %v2141 = vsel %vm1945, %v2077, %v1501
    %v2142 = vsel %vm1945, %v2078, %v1503
    %v2143 = vsel %vm1945, %v2079, %v1505
    %v2144 = vsel %vm1945, %v2080, %v1507
    %v2145 = vsel %vm1945, %v2081, %v1509
    %v2146 = vsel %vm1945, %v2082, %v1511
    %v2147 = vsel %vm1945, %v2083, %v1513
    %v2148 = vsel %vm1945, %v2084, %v1515
    %v2149 = vsel %vm1945, %v2085, %v1517
    %v2150 = vsel %vm1945, %v2086, %v1519
    %v2151 = vsel %vm1945, %v2087, %v1521
    %v2152 = vsel %vm1945, %v2088, %v1523
    %v2153 = vsel %vm1945, %v2089, %v1525
    %v2154 = vsel %vm1945, %v2090, %v1527
    %v2155 = vsel %vm1945, %v2091, %v1529
    %v2156 = vsel %vm1945, %v2092, %v1531
    %v2157 = vsel %vm1945, %v2093, %v1533
    %v2158 = vsel %vm1945, %v2094, %v1535
    %v2159 = vsel %vm1945, %v2095, %v1537
    %v2160 = vsel %vm1945, %v2096, %v1539
    %v2161 = vsel %vm1945, %v2097, %v1541
    %v2162 = vsel %vm1945, %v2098, %v1543
    %v2163 = vsel %vm1945, %v2099, %v1545
    %v2164 = vsel %vm1945, %v2100, %v1547
    %v2165 = vsel %vm1945, %v2101, %v1549
    %v2166 = vsel %vm1945, %v2102, %v1551
    %v2167 = vsel %vm1945, %v2103, %v1553
    %v2168 = vsel %vm1945, %v2104, %v1555
    %v2169 = vsel %vm1945, %v2105, %v1557
    %v2170 = vsel %vm1945, %v2106, %v1559
    %v2171 = vsel %vm1945, %v2107, %v1561
    %v2172 = vsel %vm1945, %v2108, %v1563
    %v2173 = vsel %vm1945, %v2109, %v1565
    %v2174 = vsel %vm1945, %v2110, %v1567
    %v2175 = vsel %vm1945, %v2111, %v1569
    %v2176 = vsel %vm1945, %v2112, %v1571
    %v2177 = vsel %vm1945, %v2113, %v1573
    %v2178 = vsel %vm1945, %v2114, %v1575
    %v2179 = vsel %vm1945, %v2115, %v1577
    %v2180 = vsel %vm1945, %v2116, %v1579
    %v2181 = vsel %vm1945, %v2117, %v1581
    %v2182 = vsel %vm1945, %v2118, %v1583
    %v2183 = vsel %vm1945, %v2119, %v1585
    %v2184 = vsel %vm1945, %v2120, %v1587
    %v2185 = vsel %vm1945, %v2121, %v1589
    %v2186 = vsel %vm1945, %v2122, %v1591
    %v2187 = vsel %vm1945, %v2123, %v1593
    %v2188 = vsel %vm1945, %v2124, %v1595
    %v2189 = vsel %vm1945, %v2125, %v1597
    %v2190 = vsel %vm1945, %v2126, %v1599
    %v2191 = vsel %vm1945, %v2127, %v1601
    %v2192 = vsel %vm1945, %v2128, %v1603
    %v2193 = vsel %vm1945, %v2129, %v1605
    %v2194 = vsel %vm1945, %v2130, %v1607
    %v2195 = vsel %vm1945, %v2131, %v1609
    %v2196 = vsel %vm1945, %v2132, %v1611
    %v2197 = vsel %vm1945, %v2133, %v1613
    %v2198 = vsel %vm1945, %v2134, %v1615
    %v2199 = vsel %vm1945, %v2135, %v1617
    %v2200 = vsel %vm1945, %v2136, %v1619
    %v2201 = vsel %vm1945, %v2137, %v1621
    %v2202 = vsel %vm1945, %v2138, %v1623
    %v2203 = vsel %vm2010, %v2139, %v1689
    %v2204 = vsel %vm2010, %v2140, %v1691
    %v2205 = vsel %vm2010, %v2141, %v1693
    %v2206 = vsel %vm2010, %v2142, %v1695
    %v2207 = vsel %vm2010, %v2143, %v1697
    %v2208 = vsel %vm2010, %v2144, %v1699
    %v2209 = vsel %vm2010, %v2145, %v1701
    %v2210 = vsel %vm2010, %v2146, %v1703
    %v2211 = vsel %vm2010, %v2147, %v1705
    %v2212 = vsel %vm2010, %v2148, %v1707
    %v2213 = vsel %vm2010, %v2149, %v1709
    %v2214 = vsel %vm2010, %v2150, %v1711
    %v2215 = vsel %vm2010, %v2151, %v1713
    %v2216 = vsel %vm2010, %v2152, %v1715
    %v2217 = vsel %vm2010, %v2153, %v1717
    %v2218 = vsel %vm2010, %v2154, %v1719
    %v2219 = vsel %vm2010, %v2155, %v1721
    %v2220 = vsel %vm2010, %v2156, %v1723
    %v2221 = vsel %vm2010, %v2157, %v1725
    %v2222 = vsel %vm2010, %v2158, %v1727
    %v2223 = vsel %vm2010, %v2159, %v1729
    %v2224 = vsel %vm2010, %v2160, %v1731
    %v2225 = vsel %vm2010, %v2161, %v1733
    %v2226 = vsel %vm2010, %v2162, %v1735
    %v2227 = vsel %vm2010, %v2163, %v1737
    %v2228 = vsel %vm2010, %v2164, %v1739
    %v2229 = vsel %vm2010, %v2165, %v1741
    %v2230 = vsel %vm2010, %v2166, %v1743
    %v2231 = vsel %vm2010, %v2167, %v1745
    %v2232 = vsel %vm2010, %v2168, %v1747
    %v2233 = vsel %vm2010, %v2169, %v1749
    %v2234 = vsel %vm2010, %v2170, %v1751
    %v2235 = vsel %vm2010, %v2171, %v1753
    %v2236 = vsel %vm2010, %v2172, %v1755
    %v2237 = vsel %vm2010, %v2173, %v1757
    %v2238 = vsel %vm2010, %v2174, %v1759
    %v2239 = vsel %vm2010, %v2175, %v1761
    %v2240 = vsel %vm2010, %v2176, %v1763
    %v2241 = vsel %vm2010, %v2177, %v1765
    %v2242 = vsel %vm2010, %v2178, %v1767
    %v2243 = vsel %vm2010, %v2179, %v1769
    %v2244 = vsel %vm2010, %v2180, %v1771
    %v2245 = vsel %vm2010, %v2181, %v1773
    %v2246 = vsel %vm2010, %v2182, %v1775
    %v2247 = vsel %vm2010, %v2183, %v1777
    %v2248 = vsel %vm2010, %v2184, %v1779
    %v2249 = vsel %vm2010, %v2185, %v1781
    %v2250 = vsel %vm2010, %v2186, %v1783
    %v2251 = vsel %vm2010, %v2187, %v1785
    %v2252 = vsel %vm2010, %v2188, %v1787
    %v2253 = vsel %vm2010, %v2189, %v1789
    %v2254 = vsel %vm2010, %v2190, %v1791
    %v2255 = vsel %vm2010, %v2191, %v1793
    %v2256 = vsel %vm2010, %v2192, %v1795
    %v2257 = vsel %vm2010, %v2193, %v1797
    %v2258 = vsel %vm2010, %v2194, %v1799
    %v2259 = vsel %vm2010, %v2195, %v1801
    %v2260 = vsel %vm2010, %v2196, %v1803
    %v2261 = vsel %vm2010, %v2197, %v1805
    %v2262 = vsel %vm2010, %v2198, %v1807
    %v2263 = vsel %vm2010, %v2199, %v1809
    %v2264 = vsel %vm2010, %v2200, %v1811
    %v2265 = vsel %vm2010, %v2201, %v1813
    %v2266 = vsel %vm2010, %v2202, %v1815
    %v2267 = vpack.c.bf16 %v2012, %v2011
    %v2268 = vpack.c.bf16 %v2204, %v2203
    %v2269 = vpack.c.bf16 %v402, %v400
    %v2270 = vpack.c.bf16 %v2014, %v2013
    %v2271 = vpack.c.bf16 %v2206, %v2205
    %v2272 = vpack.c.bf16 %v407, %v405
    %v2273 = vpack.c.bf16 %v2016, %v2015
    %v2274 = vpack.c.bf16 %v2208, %v2207
    %v2275 = vpack.c.bf16 %v412, %v410
    %v2276 = vpack.c.bf16 %v2018, %v2017
    %v2277 = vpack.c.bf16 %v2210, %v2209
    %v2278 = vpack.c.bf16 %v417, %v415
    %v2279 = vpack.c.bf16 %v2020, %v2019
    %v2280 = vpack.c.bf16 %v2212, %v2211
    %v2281 = vpack.c.bf16 %v422, %v420
    %v2282 = vpack.c.bf16 %v2022, %v2021
    %v2283 = vpack.c.bf16 %v2214, %v2213
    %v2284 = vpack.c.bf16 %v427, %v425
    %v2285 = vpack.c.bf16 %v2024, %v2023
    %v2286 = vpack.c.bf16 %v2216, %v2215
    %v2287 = vpack.c.bf16 %v432, %v430
    %v2288 = vpack.c.bf16 %v2026, %v2025
    %v2289 = vpack.c.bf16 %v2218, %v2217
    %v2290 = vpack.c.bf16 %v437, %v435
    %v2291 = vpack.c.bf16 %v2028, %v2027
    %v2292 = vpack.c.bf16 %v2220, %v2219
    %v2293 = vpack.c.bf16 %v442, %v440
    %v2294 = vpack.c.bf16 %v2030, %v2029
    %v2295 = vpack.c.bf16 %v2222, %v2221
    %v2296 = vpack.c.bf16 %v447, %v445
    %v2297 = vpack.c.bf16 %v2032, %v2031
    %v2298 = vpack.c.bf16 %v2224, %v2223
    %v2299 = vpack.c.bf16 %v452, %v450
    %v2300 = vpack.c.bf16 %v2034, %v2033
    %v2301 = vpack.c.bf16 %v2226, %v2225
    %v2302 = vpack.c.bf16 %v457, %v455
    %v2303 = vpack.c.bf16 %v2036, %v2035
    %v2304 = vpack.c.bf16 %v2228, %v2227
    %v2305 = vpack.c.bf16 %v462, %v460
    %v2306 = vpack.c.bf16 %v2038, %v2037
    %v2307 = vpack.c.bf16 %v2230, %v2229
    %v2308 = vpack.c.bf16 %v467, %v465
    %v2309 = vpack.c.bf16 %v2040, %v2039
    %v2310 = vpack.c.bf16 %v2232, %v2231
    %v2311 = vpack.c.bf16 %v632, %v630
    %v2312 = vpack.c.bf16 %v2042, %v2041
    %v2313 = vpack.c.bf16 %v2234, %v2233
    %v2314 = vpack.c.bf16 %v658, %v656
    %v2315 = vpack.c.bf16 %v2044, %v2043
    %v2316 = vpack.c.bf16 %v2236, %v2235
    %v2317 = vpack.c.bf16 %v482, %v480
    %v2318 = vpack.c.bf16 %v2046, %v2045
    %v2319 = vpack.c.bf16 %v2238, %v2237
    %v2320 = vpack.c.bf16 %v487, %v485
    %v2321 = vpack.c.bf16 %v2048, %v2047
    %v2322 = vpack.c.bf16 %v2240, %v2239
    %v2323 = vpack.c.bf16 %v492, %v490
    %v2324 = vpack.c.bf16 %v2050, %v2049
    %v2325 = vpack.c.bf16 %v2242, %v2241
    %v2326 = vpack.c.bf16 %v497, %v495
    %v2327 = vpack.c.bf16 %v2052, %v2051
    %v2328 = vpack.c.bf16 %v2244, %v2243
    %v2329 = vpack.c.bf16 %v502, %v500
    %v2330 = vpack.c.bf16 %v2054, %v2053
    %v2331 = vpack.c.bf16 %v2246, %v2245
    %v2332 = vpack.c.bf16 %v507, %v505
    %v2333 = vpack.c.bf16 %v2056, %v2055
    %v2334 = vpack.c.bf16 %v2248, %v2247
    %v2335 = vpack.c.bf16 %v512, %v510
    %v2336 = vpack.c.bf16 %v2058, %v2057
    %v2337 = vpack.c.bf16 %v2250, %v2249
    %v2338 = vpack.c.bf16 %v517, %v515
    %v2339 = vpack.c.bf16 %v2060, %v2059
    %v2340 = vpack.c.bf16 %v2252, %v2251
    %v2341 = vpack.c.bf16 %v522, %v520
    %v2342 = vpack.c.bf16 %v2062, %v2061
    %v2343 = vpack.c.bf16 %v2254, %v2253
    %v2344 = vpack.c.bf16 %v527, %v525
    %v2345 = vpack.c.bf16 %v2064, %v2063
    %v2346 = vpack.c.bf16 %v2256, %v2255
    %v2347 = vpack.c.bf16 %v532, %v530
    %v2348 = vpack.c.bf16 %v2066, %v2065
    %v2349 = vpack.c.bf16 %v2258, %v2257
    %v2350 = vpack.c.bf16 %v537, %v535
    %v2351 = vpack.c.bf16 %v2068, %v2067
    %v2352 = vpack.c.bf16 %v2260, %v2259
    %v2353 = vpack.c.bf16 %v542, %v540
    %v2354 = vpack.c.bf16 %v2070, %v2069
    %v2355 = vpack.c.bf16 %v2262, %v2261
    %v2356 = vpack.c.bf16 %v547, %v545
    %v2357 = vpack.c.bf16 %v2072, %v2071
    %v2358 = vpack.c.bf16 %v2264, %v2263
    %v2359 = vpack.c.bf16 %v637, %v635
    %v2360 = vpack.c.bf16 %v2074, %v2073
    %v2361 = vpack.c.bf16 %v2266, %v2265
    %v2362 = vpack.c.bf16 %v663, %v661
    %v2363 = vld [vmem:[%s1] sm:$0xf]
    %v2364 = vld [vmem:[%s1 + $0x4] sm:$0xf]
    %v2365 = vld [vmem:[%s1 + $0x8] sm:$0xf]
    %v2366 = vld [vmem:[%s1 + $0xc] sm:$0xf]
    %v2367 = vld [vmem:[%s1 + $0x10] sm:$0xf]
    %v2368 = vld [vmem:[%s1 + $0x14] sm:$0xf]
    %v2369 = vld [vmem:[%s1 + $0x18] sm:$0xf]
    %v2370 = vld [vmem:[%s1 + $0x1c] sm:$0xf]
    %v2371 = vld [vmem:[%s1 + $0x20] sm:$0xf]
    %v2372 = vld [vmem:[%s1 + $0x24] sm:$0xf]
    %v2373 = vld [vmem:[%s1 + $0x28] sm:$0xf]
    %v2374 = vld [vmem:[%s1 + $0x2c] sm:$0xf]
    %v2375 = vld [vmem:[%s1 + $0x30] sm:$0xf]
    %v2376 = vld [vmem:[%s1 + $0x34] sm:$0xf]
    %v2377 = vld [vmem:[%s1 + $0x38] sm:$0xf]
    %v2378 = vld [vmem:[%s1 + $0x3c] sm:$0xf]
    %v2379 = vld [vmem:[%s1 + $0x40] sm:$0xf]
    %v2380 = vld [vmem:[%s1 + $0x44] sm:$0xf]
    %v2381 = vld [vmem:[%s1 + $0x48] sm:$0xf]
    %v2382 = vld [vmem:[%s1 + $0x4c] sm:$0xf]
    %v2383 = vld [vmem:[%s1 + $0x50] sm:$0xf]
    %v2384 = vld [vmem:[%s1 + $0x54] sm:$0xf]
    %v2385 = vld [vmem:[%s1 + $0x58] sm:$0xf]
    %v2386 = vld [vmem:[%s1 + $0x5c] sm:$0xf]
    %v2387 = vld [vmem:[%s1 + $0x60] sm:$0xf]
    %v2388 = vld [vmem:[%s1 + $0x64] sm:$0xf]
    %v2389 = vld [vmem:[%s1 + $0x68] sm:$0xf]
    %v2390 = vld [vmem:[%s1 + $0x6c] sm:$0xf]
    %v2391 = vld [vmem:[%s1 + $0x70] sm:$0xf]
    %v2392 = vld [vmem:[%s1 + $0x74] sm:$0xf]
    %v2393 = vld [vmem:[%s1 + $0x78] sm:$0xf]
    %v2394 = vld [vmem:[%s1 + $0x7c] sm:$0xf]
    %v2395 = vld [vmem:[%s1 + $0x80] sm:$0xf]
    %v2396 = vld [vmem:[%s1 + $0x84] sm:$0xf]
    %v2397 = vld [vmem:[%s1 + $0x88] sm:$0xf]
    %v2398 = vld [vmem:[%s1 + $0x8c] sm:$0xf]
    %v2399 = vld [vmem:[%s2] sm:$0x1]
    %v2401 = vlaneseq
    %v2402 = vshrl.u32 %v2401, 7
    %v2403 = vsub.s32 0, %v2402
    %v2404 = vrot.slane %v2399, %v2403
    %v2442 = vunpack.c.l.b16 %v2363
    %v2443 = vunpack.c.l.b16 %v2364
    %v2444 = vunpack.c.l.b16 %v2365
    %v2445 = vunpack.c.l.b16 %v2366
    %v2446 = vunpack.c.l.b16 %v2367
    %v2447 = vunpack.c.l.b16 %v2368
    %v2448 = vunpack.c.l.b16 %v2369
    %v2449 = vunpack.c.l.b16 %v2370
    %v2450 = vunpack.c.l.b16 %v2371
    %v2451 = vunpack.c.l.b16 %v2372
    %v2452 = vunpack.c.l.b16 %v2373
    %v2453 = vunpack.c.l.b16 %v2374
    %v2454 = vunpack.c.l.b16 %v2375
    %v2455 = vunpack.c.l.b16 %v2376
    %v2456 = vunpack.c.l.b16 %v2377
    %v2457 = vunpack.c.l.b16 %v2378
    %v2458 = vunpack.c.l.b16 %v2379
    %v2459 = vunpack.c.l.b16 %v2380
    %v2460 = vunpack.c.l.b16 %v2381
    %v2461 = vunpack.c.l.b16 %v2382
    %v2462 = vunpack.c.l.b16 %v2383
    %v2463 = vunpack.c.l.b16 %v2384
    %v2464 = vunpack.c.l.b16 %v2385
    %v2465 = vunpack.c.l.b16 %v2386
    %v2466 = vunpack.c.l.b16 %v2387
    %v2467 = vunpack.c.l.b16 %v2388
    %v2468 = vunpack.c.l.b16 %v2389
    %v2469 = vunpack.c.l.b16 %v2390
    %v2470 = vunpack.c.l.b16 %v2391
    %v2471 = vunpack.c.l.b16 %v2392
    %v2472 = vunpack.c.l.b16 %v2393
    %v2473 = vunpack.c.l.b16 %v2394
    %v2474 = vunpack.c.l.b16 %v2395
    %v2475 = vunpack.c.l.b16 %v2396
    %v2476 = vunpack.c.l.b16 %v2397
    %v2477 = vunpack.c.l.b16 %v2398
    %v2478 = vpack.c.b16 %v2443, %v2442
    %v2479 = vpack.c.b16 %v2445, %v2444
    %v2480 = vpack.c.b16 %v2447, %v2446
    %v2481 = vpack.c.b16 %v2449, %v2448
    %v2482 = vpack.c.b16 %v2451, %v2450
    %v2483 = vpack.c.b16 %v2453, %v2452
    %v2484 = vpack.c.b16 %v2455, %v2454
    %v2485 = vpack.c.b16 %v2457, %v2456
    %v2486 = vpack.c.b16 %v2459, %v2458
    %v2487 = vpack.c.b16 %v2461, %v2460
    %v2488 = vpack.c.b16 %v2463, %v2462
    %v2489 = vpack.c.b16 %v2465, %v2464
    %v2490 = vpack.c.b16 %v2467, %v2466
    %v2491 = vpack.c.b16 %v2469, %v2468
    %v2492 = vpack.c.b16 %v2471, %v2470
    %v2493 = vpack.c.b16 %v2473, %v2472
    %v2494 = vpack.c.b16 %v2475, %v2474
    %v2495 = vpack.c.b16 %v2477, %v2476
    %v2515 = vsel %vm1880, %v2269, 0
    %v2518 = vsel %vm1880, %v2272, 0
    %v2521 = vsel %vm1880, %v2275, 0
    %v2524 = vsel %vm1880, %v2278, 0
    %v2527 = vsel %vm1880, %v2281, 0
    %v2530 = vsel %vm1880, %v2284, 0
    %v2533 = vsel %vm1880, %v2287, 0
    %v2536 = vsel %vm1880, %v2290, 0
    %v2539 = vsel %vm1880, %v2293, 0
    %v2542 = vsel %vm1880, %v2296, 0
    %v2545 = vsel %vm1880, %v2299, 0
    %v2548 = vsel %vm1880, %v2302, 0
    %v2551 = vsel %vm1880, %v2305, 0
    %v2554 = vsel %vm1880, %v2308, 0
    %v2557 = vsel %vm1880, %v2311, 0
    %v2560 = vsel %vm1880, %v2314, 0
    %v2563 = vsel %vm1880, %v2317, 0
    %v2566 = vsel %vm1880, %v2320, 0
    %v2569 = vsel %vm1880, %v2323, 0
    %v2572 = vsel %vm1880, %v2326, 0
    %v2575 = vsel %vm1880, %v2329, 0
    %v2578 = vsel %vm1880, %v2332, 0
    %v2581 = vsel %vm1880, %v2335, 0
    %v2584 = vsel %vm1880, %v2338, 0
    %v2587 = vsel %vm1880, %v2341, 0
    %v2590 = vsel %vm1880, %v2344, 0
    %v2593 = vsel %vm1880, %v2347, 0
    %v2596 = vsel %vm1880, %v2350, 0
    %v2599 = vsel %vm1880, %v2353, 0
    %v2602 = vsel %vm1880, %v2356, 0
    %v2605 = vsel %vm1880, %v2359, 0
    %v2608 = vsel %vm1880, %v2362, 0
    %2610 = vmatprep.subr.bf16.mxu0 0
    %2611 = vmatpush1.bf16.msra.mxu0 %v2485
    %2612 = vmatprep.subr.bf16.mxu0 0
    %2613 = vmatpush1.bf16.msra.mxu0 %v2484
    %2614 = vmatprep.subr.bf16.mxu0 0
    %2615 = vmatpush1.bf16.msra.mxu0 %v2483
    %2616 = vmatprep.subr.bf16.mxu0 0
    %2617 = vmatpush1.bf16.msra.mxu0 %v2482
    %2618 = vmatprep.subr.bf16.mxu0 0
    %2619 = vmatpush1.bf16.msra.mxu0 %v2481
    %2620 = vmatprep.subr.bf16.mxu0 0
    %2621 = vmatpush1.bf16.msra.mxu0 %v2480
    %2622 = vmatprep.subr.bf16.mxu0 0
    %2623 = vmatpush1.bf16.msra.mxu0 %v2479
    %2624 = vmatprep.subr.bf16.mxu0 0
    %2625 = vmatpush1.bf16.msra.mxu0 %v2478
    %2626 = vmatprep.subr.bf16.mxu0 0
    %2627 = vmatpush2.bf16.msra.mxu0 %v2493
    %2628 = vmatprep.subr.bf16.mxu0 0
    %2629 = vmatpush2.bf16.msra.mxu0 %v2492
    %2630 = vmatprep.subr.bf16.mxu0 0
    %2631 = vmatpush2.bf16.msra.mxu0 %v2491
    %2632 = vmatprep.subr.bf16.mxu0 0
    %2633 = vmatpush2.bf16.msra.mxu0 %v2490
    %2634 = vmatprep.subr.bf16.mxu0 0
    %2635 = vmatpush2.bf16.msra.mxu0 %v2489
    %2636 = vmatprep.subr.bf16.mxu0 0
    %2637 = vmatpush2.bf16.msra.mxu0 %v2488
    %2638 = vmatprep.subr.bf16.mxu0 0
    %2639 = vmatpush2.bf16.msra.mxu0 %v2487
    %2640 = vmatprep.subr.bf16.mxu0 0
    %2641 = vmatpush2.bf16.msra.mxu0 %v2486
    %2642 = vmatprep.mubr.bf16.mxu0 %v2268
    %2643 = vmatmul.mubr.bf16.gmra.mxu0 %v2267
    %v2644 = vpop.f32.mrf.mxu0
    %v2645 = vadd.f32 %v2404, %v2644
    %v2646 = vpop.f32.mrf.mxu0
    %v2647 = vpop.f32.mrf.mxu0
    %v2648 = vadd.f32 %v2404, %v2647
    %v2649 = vpop.f32.mrf.mxu0
    %2650 = vmatprep.mubr.bf16.mxu0 %v2271
    %2651 = vmatmul.mubr.bf16.gmra.mxu0 %v2270
    %v2652 = vpop.f32.mrf.mxu0
    %v2653 = vadd.f32 %v2404, %v2652
    %v2654 = vpop.f32.mrf.mxu0
    %v2655 = vpop.f32.mrf.mxu0
    %v2656 = vadd.f32 %v2404, %v2655
    %v2657 = vpop.f32.mrf.mxu0
    %2658 = vmatprep.mubr.bf16.mxu0 %v2274
    %2659 = vmatmul.mubr.bf16.gmra.mxu0 %v2273
    %v2660 = vpop.f32.mrf.mxu0
    %v2661 = vadd.f32 %v2404, %v2660
    %v2662 = vpop.f32.mrf.mxu0
    %v2663 = vpop.f32.mrf.mxu0
    %v2664 = vadd.f32 %v2404, %v2663
    %v2665 = vpop.f32.mrf.mxu0
    %2666 = vmatprep.mubr.bf16.mxu0 %v2277
    %2667 = vmatmul.mubr.bf16.gmra.mxu0 %v2276
    %v2668 = vpop.f32.mrf.mxu0
    %v2669 = vadd.f32 %v2404, %v2668
    %v2670 = vpop.f32.mrf.mxu0
    %v2671 = vpop.f32.mrf.mxu0
    %v2672 = vadd.f32 %v2404, %v2671
    %v2673 = vpop.f32.mrf.mxu0
    %2674 = vmatprep.mubr.bf16.mxu0 %v2280
    %2675 = vmatmul.mubr.bf16.gmra.mxu0 %v2279
    %v2676 = vpop.f32.mrf.mxu0
    %v2677 = vadd.f32 %v2404, %v2676
    %v2678 = vpop.f32.mrf.mxu0
    %v2679 = vpop.f32.mrf.mxu0
    %v2680 = vadd.f32 %v2404, %v2679
    %v2681 = vpop.f32.mrf.mxu0
    %2682 = vmatprep.mubr.bf16.mxu0 %v2283
    %2683 = vmatmul.mubr.bf16.gmra.mxu0 %v2282
    %v2684 = vpop.f32.mrf.mxu0
    %v2685 = vadd.f32 %v2404, %v2684
    %v2686 = vpop.f32.mrf.mxu0
    %v2687 = vpop.f32.mrf.mxu0
    %v2688 = vadd.f32 %v2404, %v2687
    %v2689 = vpop.f32.mrf.mxu0
    %2690 = vmatprep.mubr.bf16.mxu0 %v2286
    %2691 = vmatmul.mubr.bf16.gmra.mxu0 %v2285
    %v2692 = vpop.f32.mrf.mxu0
    %v2693 = vadd.f32 %v2404, %v2692
    %v2694 = vpop.f32.mrf.mxu0
    %v2695 = vpop.f32.mrf.mxu0
    %v2696 = vadd.f32 %v2404, %v2695
    %v2697 = vpop.f32.mrf.mxu0
    %2698 = vmatprep.mubr.bf16.mxu0 %v2289
    %2699 = vmatmul.mubr.bf16.gmra.mxu0 %v2288
    %v2700 = vpop.f32.mrf.mxu0
    %v2701 = vadd.f32 %v2404, %v2700
    %v2702 = vpop.f32.mrf.mxu0
    %v2703 = vpop.f32.mrf.mxu0
    %v2704 = vadd.f32 %v2404, %v2703
    %v2705 = vpop.f32.mrf.mxu0
    %2706 = vmatprep.mubr.bf16.mxu0 %v2292
    %2707 = vmatmul.mubr.bf16.gmra.mxu0 %v2291
    %v2708 = vpop.f32.mrf.mxu0
    %v2709 = vadd.f32 %v2404, %v2708
    %v2710 = vpop.f32.mrf.mxu0
    %v2711 = vpop.f32.mrf.mxu0
    %v2712 = vadd.f32 %v2404, %v2711
    %v2713 = vpop.f32.mrf.mxu0
    %2714 = vmatprep.mubr.bf16.mxu0 %v2295
    %2715 = vmatmul.mubr.bf16.gmra.mxu0 %v2294
    %v2716 = vpop.f32.mrf.mxu0
    %v2717 = vadd.f32 %v2404, %v2716
    %v2718 = vpop.f32.mrf.mxu0
    %v2719 = vpop.f32.mrf.mxu0
    %v2720 = vadd.f32 %v2404, %v2719
    %v2721 = vpop.f32.mrf.mxu0
    %2722 = vmatprep.mubr.bf16.mxu0 %v2298
    %2723 = vmatmul.mubr.bf16.gmra.mxu0 %v2297
    %v2724 = vpop.f32.mrf.mxu0
    %v2725 = vadd.f32 %v2404, %v2724
    %v2726 = vpop.f32.mrf.mxu0
    %v2727 = vpop.f32.mrf.mxu0
    %v2728 = vadd.f32 %v2404, %v2727
    %v2729 = vpop.f32.mrf.mxu0
    %2730 = vmatprep.mubr.bf16.mxu0 %v2301
    %2731 = vmatmul.mubr.bf16.gmra.mxu0 %v2300
    %v2732 = vpop.f32.mrf.mxu0
    %v2733 = vadd.f32 %v2404, %v2732
    %v2734 = vpop.f32.mrf.mxu0
    %v2735 = vpop.f32.mrf.mxu0
    %v2736 = vadd.f32 %v2404, %v2735
    %v2737 = vpop.f32.mrf.mxu0
    %2738 = vmatprep.mubr.bf16.mxu0 %v2304
    %2739 = vmatmul.mubr.bf16.gmra.mxu0 %v2303
    %v2740 = vpop.f32.mrf.mxu0
    %v2741 = vadd.f32 %v2404, %v2740
    %v2742 = vpop.f32.mrf.mxu0
    %v2743 = vpop.f32.mrf.mxu0
    %v2744 = vadd.f32 %v2404, %v2743
    %v2745 = vpop.f32.mrf.mxu0
    %2746 = vmatprep.mubr.bf16.mxu0 %v2307
    %2747 = vmatmul.mubr.bf16.gmra.mxu0 %v2306
    %v2748 = vpop.f32.mrf.mxu0
    %v2749 = vadd.f32 %v2404, %v2748
    %v2750 = vpop.f32.mrf.mxu0
    %v2751 = vpop.f32.mrf.mxu0
    %v2752 = vadd.f32 %v2404, %v2751
    %v2753 = vpop.f32.mrf.mxu0
    %2754 = vmatprep.mubr.bf16.mxu0 %v2310
    %2755 = vmatmul.mubr.bf16.gmra.mxu0 %v2309
    %v2756 = vpop.f32.mrf.mxu0
    %v2757 = vadd.f32 %v2404, %v2756
    %v2758 = vpop.f32.mrf.mxu0
    %v2759 = vpop.f32.mrf.mxu0
    %v2760 = vadd.f32 %v2404, %v2759
    %v2761 = vpop.f32.mrf.mxu0
    %2762 = vmatprep.mubr.bf16.mxu0 %v2313
    %2763 = vmatmul.mubr.bf16.gmra.mxu0 %v2312
    %v2764 = vpop.f32.mrf.mxu0
    %v2765 = vadd.f32 %v2404, %v2764
    %v2766 = vpop.f32.mrf.mxu0
    %v2767 = vpop.f32.mrf.mxu0
    %v2768 = vadd.f32 %v2404, %v2767
    %v2769 = vpop.f32.mrf.mxu0
    %2770 = vmatprep.mubr.bf16.mxu0 %v2316
    %2771 = vmatmul.mubr.bf16.gmra.mxu0 %v2315
    %v2772 = vpop.f32.mrf.mxu0
    %v2773 = vadd.f32 %v2404, %v2772
    %v2774 = vpop.f32.mrf.mxu0
    %v2775 = vpop.f32.mrf.mxu0
    %v2776 = vadd.f32 %v2404, %v2775
    %v2777 = vpop.f32.mrf.mxu0
    %2778 = vmatprep.mubr.bf16.mxu0 %v2319
    %2779 = vmatmul.mubr.bf16.gmra.mxu0 %v2318
    %v2780 = vpop.f32.mrf.mxu0
    %v2781 = vadd.f32 %v2404, %v2780
    %v2782 = vpop.f32.mrf.mxu0
    %v2783 = vpop.f32.mrf.mxu0
    %v2784 = vadd.f32 %v2404, %v2783
    %v2785 = vpop.f32.mrf.mxu0
    %2786 = vmatprep.mubr.bf16.mxu0 %v2322
    %2787 = vmatmul.mubr.bf16.gmra.mxu0 %v2321
    %v2788 = vpop.f32.mrf.mxu0
    %v2789 = vadd.f32 %v2404, %v2788
    %v2790 = vpop.f32.mrf.mxu0
    %v2791 = vpop.f32.mrf.mxu0
    %v2792 = vadd.f32 %v2404, %v2791
    %v2793 = vpop.f32.mrf.mxu0
    %2794 = vmatprep.mubr.bf16.mxu0 %v2325
    %2795 = vmatmul.mubr.bf16.gmra.mxu0 %v2324
    %v2796 = vpop.f32.mrf.mxu0
    %v2797 = vadd.f32 %v2404, %v2796
    %v2798 = vpop.f32.mrf.mxu0
    %v2799 = vpop.f32.mrf.mxu0
    %v2800 = vadd.f32 %v2404, %v2799
    %v2801 = vpop.f32.mrf.mxu0
    %2802 = vmatprep.mubr.bf16.mxu0 %v2328
    %2803 = vmatmul.mubr.bf16.gmra.mxu0 %v2327
    %v2804 = vpop.f32.mrf.mxu0
    %v2805 = vadd.f32 %v2404, %v2804
    %v2806 = vpop.f32.mrf.mxu0
    %v2807 = vpop.f32.mrf.mxu0
    %v2808 = vadd.f32 %v2404, %v2807
    %v2809 = vpop.f32.mrf.mxu0
    %2810 = vmatprep.mubr.bf16.mxu0 %v2331
    %2811 = vmatmul.mubr.bf16.gmra.mxu0 %v2330
    %v2812 = vpop.f32.mrf.mxu0
    %v2813 = vadd.f32 %v2404, %v2812
    %v2814 = vpop.f32.mrf.mxu0
    %v2815 = vpop.f32.mrf.mxu0
    %v2816 = vadd.f32 %v2404, %v2815
    %v2817 = vpop.f32.mrf.mxu0
    %2818 = vmatprep.mubr.bf16.mxu0 %v2334
    %2819 = vmatmul.mubr.bf16.gmra.mxu0 %v2333
    %v2820 = vpop.f32.mrf.mxu0
    %v2821 = vadd.f32 %v2404, %v2820
    %v2822 = vpop.f32.mrf.mxu0
    %v2823 = vpop.f32.mrf.mxu0
    %v2824 = vadd.f32 %v2404, %v2823
    %v2825 = vpop.f32.mrf.mxu0
    %2826 = vmatprep.mubr.bf16.mxu0 %v2337
    %2827 = vmatmul.mubr.bf16.gmra.mxu0 %v2336
    %v2828 = vpop.f32.mrf.mxu0
    %v2829 = vadd.f32 %v2404, %v2828
    %v2830 = vpop.f32.mrf.mxu0
    %v2831 = vpop.f32.mrf.mxu0
    %v2832 = vadd.f32 %v2404, %v2831
    %v2833 = vpop.f32.mrf.mxu0
    %2834 = vmatprep.mubr.bf16.mxu0 %v2340
    %2835 = vmatmul.mubr.bf16.gmra.mxu0 %v2339
    %v2836 = vpop.f32.mrf.mxu0
    %v2837 = vadd.f32 %v2404, %v2836
    %v2838 = vpop.f32.mrf.mxu0
    %v2839 = vpop.f32.mrf.mxu0
    %v2840 = vadd.f32 %v2404, %v2839
    %v2841 = vpop.f32.mrf.mxu0
    %2842 = vmatprep.mubr.bf16.mxu0 %v2343
    %2843 = vmatmul.mubr.bf16.gmra.mxu0 %v2342
    %v2844 = vpop.f32.mrf.mxu0
    %v2845 = vadd.f32 %v2404, %v2844
    %v2846 = vpop.f32.mrf.mxu0
    %v2847 = vpop.f32.mrf.mxu0
    %v2848 = vadd.f32 %v2404, %v2847
    %v2849 = vpop.f32.mrf.mxu0
    %2850 = vmatprep.mubr.bf16.mxu0 %v2346
    %2851 = vmatmul.mubr.bf16.gmra.mxu0 %v2345
    %v2852 = vpop.f32.mrf.mxu0
    %v2853 = vadd.f32 %v2404, %v2852
    %v2854 = vpop.f32.mrf.mxu0
    %v2855 = vpop.f32.mrf.mxu0
    %v2856 = vadd.f32 %v2404, %v2855
    %v2857 = vpop.f32.mrf.mxu0
    %2858 = vmatprep.mubr.bf16.mxu0 %v2349
    %2859 = vmatmul.mubr.bf16.gmra.mxu0 %v2348
    %v2860 = vpop.f32.mrf.mxu0
    %v2861 = vadd.f32 %v2404, %v2860
    %v2862 = vpop.f32.mrf.mxu0
    %v2863 = vpop.f32.mrf.mxu0
    %v2864 = vadd.f32 %v2404, %v2863
    %v2865 = vpop.f32.mrf.mxu0
    %2866 = vmatprep.mubr.bf16.mxu0 %v2352
    %2867 = vmatmul.mubr.bf16.gmra.mxu0 %v2351
    %v2868 = vpop.f32.mrf.mxu0
    %v2869 = vadd.f32 %v2404, %v2868
    %v2870 = vpop.f32.mrf.mxu0
    %v2871 = vpop.f32.mrf.mxu0
    %v2872 = vadd.f32 %v2404, %v2871
    %v2873 = vpop.f32.mrf.mxu0
    %2874 = vmatprep.mubr.bf16.mxu0 %v2355
    %2875 = vmatmul.mubr.bf16.gmra.mxu0 %v2354
    %v2876 = vpop.f32.mrf.mxu0
    %v2877 = vadd.f32 %v2404, %v2876
    %v2878 = vpop.f32.mrf.mxu0
    %v2879 = vpop.f32.mrf.mxu0
    %v2880 = vadd.f32 %v2404, %v2879
    %v2881 = vpop.f32.mrf.mxu0
    %2882 = vmatprep.mubr.bf16.mxu0 %v2358
    %2883 = vmatmul.mubr.bf16.gmra.mxu0 %v2357
    %v2884 = vpop.f32.mrf.mxu0
    %v2885 = vadd.f32 %v2404, %v2884
    %v2886 = vpop.f32.mrf.mxu0
    %v2887 = vpop.f32.mrf.mxu0
    %v2888 = vadd.f32 %v2404, %v2887
    %v2889 = vpop.f32.mrf.mxu0
    %2890 = vmatprep.mubr.bf16.mxu0 %v2361
    %2891 = vmatmul.mubr.bf16.gmra.mxu0 %v2360
    %v2892 = vpop.f32.mrf.mxu0
    %v2893 = vadd.f32 %v2404, %v2892
    %v2894 = vpop.f32.mrf.mxu0
    %v2895 = vpop.f32.mrf.mxu0
    %v2896 = vadd.f32 %v2404, %v2895
    %v2897 = vpop.f32.mrf.mxu0
    %2898 = vdwg.mxu0
    %2899 = vmatprep.subr.bf16.mxu0 0
    %2900 = vmatpush1.bf16.msra.mxu0 0
    %2901 = vmatprep.subr.bf16.mxu0 0
    %2902 = vmatpush1.bf16.msra.mxu0 0
    %2903 = vmatprep.subr.bf16.mxu0 0
    %2904 = vmatpush1.bf16.msra.mxu0 0
    %2905 = vmatprep.subr.bf16.mxu0 0
    %2906 = vmatpush1.bf16.msra.mxu0 0
    %2907 = vmatprep.subr.bf16.mxu0 0
    %2908 = vmatpush1.bf16.msra.mxu0 0
    %2909 = vmatprep.subr.bf16.mxu0 0
    %2910 = vmatpush1.bf16.msra.mxu0 0
    %2911 = vmatprep.subr.bf16.mxu0 0
    %2912 = vmatpush1.bf16.msra.mxu0 %v2495
    %2913 = vmatprep.subr.bf16.mxu0 0
    %2914 = vmatpush1.bf16.msra.mxu0 %v2494
    %2915 = vmatprep.subr.bf16.mxu0 0
    %2916 = vmatpush2.bf16.msra.mxu0 0
    %2917 = vmatprep.subr.bf16.mxu0 0
    %2918 = vmatpush2.bf16.msra.mxu0 0
    %2919 = vmatprep.subr.bf16.mxu0 0
    %2920 = vmatpush2.bf16.msra.mxu0 0
    %2921 = vmatprep.subr.bf16.mxu0 0
    %2922 = vmatpush2.bf16.msra.mxu0 0
    %2923 = vmatprep.subr.bf16.mxu0 0
    %2924 = vmatpush2.bf16.msra.mxu0 0
    %2925 = vmatprep.subr.bf16.mxu0 0
    %2926 = vmatpush2.bf16.msra.mxu0 0
    %2927 = vmatprep.subr.bf16.mxu0 0
    %2928 = vmatpush2.bf16.msra.mxu0 0
    %2929 = vmatprep.subr.bf16.mxu0 0
    %2930 = vmatpush2.bf16.msra.mxu0 0
    %2931 = vmatprep.mubr.bf16.mxu0 0
    %2932 = vmatmul.mubr.bf16.gmra.mxu0 %v2515
    %v2933 = vpop.f32.mrf.mxu0
    %v2934 = vadd.f32 %v2645, %v2933
    %v2935 = vpop.f32.mrf.mxu0
    %v2936 = vpop.f32.mrf.mxu0
    %v2937 = vadd.f32 %v2648, %v2936
    %v2938 = vpop.f32.mrf.mxu0
    %2939 = vmatprep.mubr.bf16.mxu0 0
    %2940 = vmatmul.mubr.bf16.gmra.mxu0 %v2518
    %v2941 = vpop.f32.mrf.mxu0
    %v2942 = vadd.f32 %v2653, %v2941
    %v2943 = vpop.f32.mrf.mxu0
    %v2944 = vpop.f32.mrf.mxu0
    %v2945 = vadd.f32 %v2656, %v2944
    %v2946 = vpop.f32.mrf.mxu0
    %2947 = vmatprep.mubr.bf16.mxu0 0
    %2948 = vmatmul.mubr.bf16.gmra.mxu0 %v2521
    %v2949 = vpop.f32.mrf.mxu0
    %v2950 = vadd.f32 %v2661, %v2949
    %v2951 = vpop.f32.mrf.mxu0
    %v2952 = vpop.f32.mrf.mxu0
    %v2953 = vadd.f32 %v2664, %v2952
    %v2954 = vpop.f32.mrf.mxu0
    %2955 = vmatprep.mubr.bf16.mxu0 0
    %2956 = vmatmul.mubr.bf16.gmra.mxu0 %v2524
    %v2957 = vpop.f32.mrf.mxu0
    %v2958 = vadd.f32 %v2669, %v2957
    %v2959 = vpop.f32.mrf.mxu0
    %v2960 = vpop.f32.mrf.mxu0
    %v2961 = vadd.f32 %v2672, %v2960
    %v2962 = vpop.f32.mrf.mxu0
    %2963 = vmatprep.mubr.bf16.mxu0 0
    %2964 = vmatmul.mubr.bf16.gmra.mxu0 %v2527
    %v2965 = vpop.f32.mrf.mxu0
    %v2966 = vadd.f32 %v2677, %v2965
    %v2967 = vpop.f32.mrf.mxu0
    %v2968 = vpop.f32.mrf.mxu0
    %v2969 = vadd.f32 %v2680, %v2968
    %v2970 = vpop.f32.mrf.mxu0
    %2971 = vmatprep.mubr.bf16.mxu0 0
    %2972 = vmatmul.mubr.bf16.gmra.mxu0 %v2530
    %v2973 = vpop.f32.mrf.mxu0
    %v2974 = vadd.f32 %v2685, %v2973
    %v2975 = vpop.f32.mrf.mxu0
    %v2976 = vpop.f32.mrf.mxu0
    %v2977 = vadd.f32 %v2688, %v2976
    %v2978 = vpop.f32.mrf.mxu0
    %2979 = vmatprep.mubr.bf16.mxu0 0
    %2980 = vmatmul.mubr.bf16.gmra.mxu0 %v2533
    %v2981 = vpop.f32.mrf.mxu0
    %v2982 = vadd.f32 %v2693, %v2981
    %v2983 = vpop.f32.mrf.mxu0
    %v2984 = vpop.f32.mrf.mxu0
    %v2985 = vadd.f32 %v2696, %v2984
    %v2986 = vpop.f32.mrf.mxu0
    %2987 = vmatprep.mubr.bf16.mxu0 0
    %2988 = vmatmul.mubr.bf16.gmra.mxu0 %v2536
    %v2989 = vpop.f32.mrf.mxu0
    %v2990 = vadd.f32 %v2701, %v2989
    %v2991 = vpop.f32.mrf.mxu0
    %v2992 = vpop.f32.mrf.mxu0
    %v2993 = vadd.f32 %v2704, %v2992
    %v2994 = vpop.f32.mrf.mxu0
    %2995 = vmatprep.mubr.bf16.mxu0 0
    %2996 = vmatmul.mubr.bf16.gmra.mxu0 %v2539
    %v2997 = vpop.f32.mrf.mxu0
    %v2998 = vadd.f32 %v2709, %v2997
    %v2999 = vpop.f32.mrf.mxu0
    %v3000 = vpop.f32.mrf.mxu0
    %v3001 = vadd.f32 %v2712, %v3000
    %v3002 = vpop.f32.mrf.mxu0
    %3003 = vmatprep.mubr.bf16.mxu0 0
    %3004 = vmatmul.mubr.bf16.gmra.mxu0 %v2542
    %v3005 = vpop.f32.mrf.mxu0
    %v3006 = vadd.f32 %v2717, %v3005
    %v3007 = vpop.f32.mrf.mxu0
    %v3008 = vpop.f32.mrf.mxu0
    %v3009 = vadd.f32 %v2720, %v3008
    %v3010 = vpop.f32.mrf.mxu0
    %3011 = vmatprep.mubr.bf16.mxu0 0
    %3012 = vmatmul.mubr.bf16.gmra.mxu0 %v2545
    %v3013 = vpop.f32.mrf.mxu0
    %v3014 = vadd.f32 %v2725, %v3013
    %v3015 = vpop.f32.mrf.mxu0
    %v3016 = vpop.f32.mrf.mxu0
    %v3017 = vadd.f32 %v2728, %v3016
    %v3018 = vpop.f32.mrf.mxu0
    %3019 = vmatprep.mubr.bf16.mxu0 0
    %3020 = vmatmul.mubr.bf16.gmra.mxu0 %v2548
    %v3021 = vpop.f32.mrf.mxu0
    %v3022 = vadd.f32 %v2733, %v3021
    %v3023 = vpop.f32.mrf.mxu0
    %v3024 = vpop.f32.mrf.mxu0
    %v3025 = vadd.f32 %v2736, %v3024
    %v3026 = vpop.f32.mrf.mxu0
    %3027 = vmatprep.mubr.bf16.mxu0 0
    %3028 = vmatmul.mubr.bf16.gmra.mxu0 %v2551
    %v3029 = vpop.f32.mrf.mxu0
    %v3030 = vadd.f32 %v2741, %v3029
    %v3031 = vpop.f32.mrf.mxu0
    %v3032 = vpop.f32.mrf.mxu0
    %v3033 = vadd.f32 %v2744, %v3032
    %v3034 = vpop.f32.mrf.mxu0
    %3035 = vmatprep.mubr.bf16.mxu0 0
    %3036 = vmatmul.mubr.bf16.gmra.mxu0 %v2554
    %v3037 = vpop.f32.mrf.mxu0
    %v3038 = vadd.f32 %v2749, %v3037
    %v3039 = vpop.f32.mrf.mxu0
    %v3040 = vpop.f32.mrf.mxu0
    %v3041 = vadd.f32 %v2752, %v3040
    %v3042 = vpop.f32.mrf.mxu0
    %3043 = vmatprep.mubr.bf16.mxu0 0
    %3044 = vmatmul.mubr.bf16.gmra.mxu0 %v2557
    %v3045 = vpop.f32.mrf.mxu0
    %v3046 = vadd.f32 %v2757, %v3045
    %v3047 = vpop.f32.mrf.mxu0
    %v3048 = vpop.f32.mrf.mxu0
    %v3049 = vadd.f32 %v2760, %v3048
    %v3050 = vpop.f32.mrf.mxu0
    %3051 = vmatprep.mubr.bf16.mxu0 0
    %3052 = vmatmul.mubr.bf16.gmra.mxu0 %v2560
    %v3053 = vpop.f32.mrf.mxu0
    %v3054 = vadd.f32 %v2765, %v3053
    %v3055 = vpop.f32.mrf.mxu0
    %v3056 = vpop.f32.mrf.mxu0
    %v3057 = vadd.f32 %v2768, %v3056
    %v3058 = vpop.f32.mrf.mxu0
    %3059 = vmatprep.mubr.bf16.mxu0 0
    %3060 = vmatmul.mubr.bf16.gmra.mxu0 %v2563
    %v3061 = vpop.f32.mrf.mxu0
    %v3062 = vadd.f32 %v2773, %v3061
    %v3063 = vpop.f32.mrf.mxu0
    %v3064 = vpop.f32.mrf.mxu0
    %v3065 = vadd.f32 %v2776, %v3064
    %v3066 = vpop.f32.mrf.mxu0
    %3067 = vmatprep.mubr.bf16.mxu0 0
    %3068 = vmatmul.mubr.bf16.gmra.mxu0 %v2566
    %v3069 = vpop.f32.mrf.mxu0
    %v3070 = vadd.f32 %v2781, %v3069
    %v3071 = vpop.f32.mrf.mxu0
    %v3072 = vpop.f32.mrf.mxu0
    %v3073 = vadd.f32 %v2784, %v3072
    %v3074 = vpop.f32.mrf.mxu0
    %3075 = vmatprep.mubr.bf16.mxu0 0
    %3076 = vmatmul.mubr.bf16.gmra.mxu0 %v2569
    %v3077 = vpop.f32.mrf.mxu0
    %v3078 = vadd.f32 %v2789, %v3077
    %v3079 = vpop.f32.mrf.mxu0
    %v3080 = vpop.f32.mrf.mxu0
    %v3081 = vadd.f32 %v2792, %v3080
    %v3082 = vpop.f32.mrf.mxu0
    %3083 = vmatprep.mubr.bf16.mxu0 0
    %3084 = vmatmul.mubr.bf16.gmra.mxu0 %v2572
    %v3085 = vpop.f32.mrf.mxu0
    %v3086 = vadd.f32 %v2797, %v3085
    %v3087 = vpop.f32.mrf.mxu0
    %v3088 = vpop.f32.mrf.mxu0
    %v3089 = vadd.f32 %v2800, %v3088
    %v3090 = vpop.f32.mrf.mxu0
    %3091 = vmatprep.mubr.bf16.mxu0 0
    %3092 = vmatmul.mubr.bf16.gmra.mxu0 %v2575
    %v3093 = vpop.f32.mrf.mxu0
    %v3094 = vadd.f32 %v2805, %v3093
    %v3095 = vpop.f32.mrf.mxu0
    %v3096 = vpop.f32.mrf.mxu0
    %v3097 = vadd.f32 %v2808, %v3096
    %v3098 = vpop.f32.mrf.mxu0
    %3099 = vmatprep.mubr.bf16.mxu0 0
    %3100 = vmatmul.mubr.bf16.gmra.mxu0 %v2578
    %v3101 = vpop.f32.mrf.mxu0
    %v3102 = vadd.f32 %v2813, %v3101
    %v3103 = vpop.f32.mrf.mxu0
    %v3104 = vpop.f32.mrf.mxu0
    %v3105 = vadd.f32 %v2816, %v3104
    %v3106 = vpop.f32.mrf.mxu0
    %3107 = vmatprep.mubr.bf16.mxu0 0
    %3108 = vmatmul.mubr.bf16.gmra.mxu0 %v2581
    %v3109 = vpop.f32.mrf.mxu0
    %v3110 = vadd.f32 %v2821, %v3109
    %v3111 = vpop.f32.mrf.mxu0
    %v3112 = vpop.f32.mrf.mxu0
    %v3113 = vadd.f32 %v2824, %v3112
    %v3114 = vpop.f32.mrf.mxu0
    %3115 = vmatprep.mubr.bf16.mxu0 0
    %3116 = vmatmul.mubr.bf16.gmra.mxu0 %v2584
    %v3117 = vpop.f32.mrf.mxu0
    %v3118 = vadd.f32 %v2829, %v3117
    %v3119 = vpop.f32.mrf.mxu0
    %v3120 = vpop.f32.mrf.mxu0
    %v3121 = vadd.f32 %v2832, %v3120
    %v3122 = vpop.f32.mrf.mxu0
    %3123 = vmatprep.mubr.bf16.mxu0 0
    %3124 = vmatmul.mubr.bf16.gmra.mxu0 %v2587
    %v3125 = vpop.f32.mrf.mxu0
    %v3126 = vadd.f32 %v2837, %v3125
    %v3127 = vpop.f32.mrf.mxu0
    %v3128 = vpop.f32.mrf.mxu0
    %v3129 = vadd.f32 %v2840, %v3128
    %v3130 = vpop.f32.mrf.mxu0
    %3131 = vmatprep.mubr.bf16.mxu0 0
    %3132 = vmatmul.mubr.bf16.gmra.mxu0 %v2590
    %v3133 = vpop.f32.mrf.mxu0
    %v3134 = vadd.f32 %v2845, %v3133
    %v3135 = vpop.f32.mrf.mxu0
    %v3136 = vpop.f32.mrf.mxu0
    %v3137 = vadd.f32 %v2848, %v3136
    %v3138 = vpop.f32.mrf.mxu0
    %3139 = vmatprep.mubr.bf16.mxu0 0
    %3140 = vmatmul.mubr.bf16.gmra.mxu0 %v2593
    %v3141 = vpop.f32.mrf.mxu0
    %v3142 = vadd.f32 %v2853, %v3141
    %v3143 = vpop.f32.mrf.mxu0
    %v3144 = vpop.f32.mrf.mxu0
    %v3145 = vadd.f32 %v2856, %v3144
    %v3146 = vpop.f32.mrf.mxu0
    %3147 = vmatprep.mubr.bf16.mxu0 0
    %3148 = vmatmul.mubr.bf16.gmra.mxu0 %v2596
    %v3149 = vpop.f32.mrf.mxu0
    %v3150 = vadd.f32 %v2861, %v3149
    %v3151 = vpop.f32.mrf.mxu0
    %v3152 = vpop.f32.mrf.mxu0
    %v3153 = vadd.f32 %v2864, %v3152
    %v3154 = vpop.f32.mrf.mxu0
    %3155 = vmatprep.mubr.bf16.mxu0 0
    %3156 = vmatmul.mubr.bf16.gmra.mxu0 %v2599
    %v3157 = vpop.f32.mrf.mxu0
    %v3158 = vadd.f32 %v2869, %v3157
    %v3159 = vpop.f32.mrf.mxu0
    %v3160 = vpop.f32.mrf.mxu0
    %v3161 = vadd.f32 %v2872, %v3160
    %v3162 = vpop.f32.mrf.mxu0
    %3163 = vmatprep.mubr.bf16.mxu0 0
    %3164 = vmatmul.mubr.bf16.gmra.mxu0 %v2602
    %v3165 = vpop.f32.mrf.mxu0
    %v3166 = vadd.f32 %v2877, %v3165
    %v3167 = vpop.f32.mrf.mxu0
    %v3168 = vpop.f32.mrf.mxu0
    %v3169 = vadd.f32 %v2880, %v3168
    %v3170 = vpop.f32.mrf.mxu0
    %3171 = vmatprep.mubr.bf16.mxu0 0
    %3172 = vmatmul.mubr.bf16.gmra.mxu0 %v2605
    %v3173 = vpop.f32.mrf.mxu0
    %v3174 = vadd.f32 %v2885, %v3173
    %v3175 = vpop.f32.mrf.mxu0
    %v3176 = vpop.f32.mrf.mxu0
    %v3177 = vadd.f32 %v2888, %v3176
    %v3178 = vpop.f32.mrf.mxu0
    %3179 = vmatprep.mubr.bf16.mxu0 0
    %3180 = vmatmul.mubr.bf16.gmra.mxu0 %v2608
    %v3181 = vpop.f32.mrf.mxu0
    %v3182 = vadd.f32 %v2893, %v3181
    %v3183 = vpop.f32.mrf.mxu0
    %v3184 = vpop.f32.mrf.mxu0
    %v3185 = vadd.f32 %v2896, %v3184
    %v3186 = vpop.f32.mrf.mxu0
    %3187 = vdwg.mxu0
    %v3188 = vmax.f32 %v2934, 0.0
    %v3189 = vmax.f32 %v2937, 0.0
    %v3190 = vmax.f32 %v2942, 0.0
    %v3191 = vmax.f32 %v2945, 0.0
    %v3192 = vmax.f32 %v2950, 0.0
    %v3193 = vmax.f32 %v2953, 0.0
    %v3194 = vmax.f32 %v2958, 0.0
    %v3195 = vmax.f32 %v2961, 0.0
    %v3196 = vmax.f32 %v2966, 0.0
    %v3197 = vmax.f32 %v2969, 0.0
    %v3198 = vmax.f32 %v2974, 0.0
    %v3199 = vmax.f32 %v2977, 0.0
    %v3200 = vmax.f32 %v2982, 0.0
    %v3201 = vmax.f32 %v2985, 0.0
    %v3202 = vmax.f32 %v2990, 0.0
    %v3203 = vmax.f32 %v2993, 0.0
    %v3204 = vmax.f32 %v2998, 0.0
    %v3205 = vmax.f32 %v3001, 0.0
    %v3206 = vmax.f32 %v3006, 0.0
    %v3207 = vmax.f32 %v3009, 0.0
    %v3208 = vmax.f32 %v3014, 0.0
    %v3209 = vmax.f32 %v3017, 0.0
    %v3210 = vmax.f32 %v3022, 0.0
    %v3211 = vmax.f32 %v3025, 0.0
    %v3212 = vmax.f32 %v3030, 0.0
    %v3213 = vmax.f32 %v3033, 0.0
    %v3214 = vmax.f32 %v3038, 0.0
    %v3215 = vmax.f32 %v3041, 0.0
    %v3216 = vmax.f32 %v3046, 0.0
    %v3217 = vmax.f32 %v3049, 0.0
    %v3218 = vmax.f32 %v3054, 0.0
    %v3219 = vmax.f32 %v3057, 0.0
    %v3220 = vmax.f32 %v3062, 0.0
    %v3221 = vmax.f32 %v3065, 0.0
    %v3222 = vmax.f32 %v3070, 0.0
    %v3223 = vmax.f32 %v3073, 0.0
    %v3224 = vmax.f32 %v3078, 0.0
    %v3225 = vmax.f32 %v3081, 0.0
    %v3226 = vmax.f32 %v3086, 0.0
    %v3227 = vmax.f32 %v3089, 0.0
    %v3228 = vmax.f32 %v3094, 0.0
    %v3229 = vmax.f32 %v3097, 0.0
    %v3230 = vmax.f32 %v3102, 0.0
    %v3231 = vmax.f32 %v3105, 0.0
    %v3232 = vmax.f32 %v3110, 0.0
    %v3233 = vmax.f32 %v3113, 0.0
    %v3234 = vmax.f32 %v3118, 0.0
    %v3235 = vmax.f32 %v3121, 0.0
    %v3236 = vmax.f32 %v3126, 0.0
    %v3237 = vmax.f32 %v3129, 0.0
    %v3238 = vmax.f32 %v3134, 0.0
    %v3239 = vmax.f32 %v3137, 0.0
    %v3240 = vmax.f32 %v3142, 0.0
    %v3241 = vmax.f32 %v3145, 0.0
    %v3242 = vmax.f32 %v3150, 0.0
    %v3243 = vmax.f32 %v3153, 0.0
    %v3244 = vmax.f32 %v3158, 0.0
    %v3245 = vmax.f32 %v3161, 0.0
    %v3246 = vmax.f32 %v3166, 0.0
    %v3247 = vmax.f32 %v3169, 0.0
    %v3248 = vmax.f32 %v3174, 0.0
    %v3249 = vmax.f32 %v3177, 0.0
    %v3250 = vmax.f32 %v3182, 0.0
    %v3251 = vmax.f32 %v3185, 0.0
    %v3252 = vpack.c.bf16 %v3189, %v3188
    %v3253 = vpack.c.bf16 %v3191, %v3190
    %v3254 = vpack.c.bf16 %v3193, %v3192
    %v3255 = vpack.c.bf16 %v3195, %v3194
    %v3256 = vpack.c.bf16 %v3197, %v3196
    %v3257 = vpack.c.bf16 %v3199, %v3198
    %v3258 = vpack.c.bf16 %v3201, %v3200
    %v3259 = vpack.c.bf16 %v3203, %v3202
    %v3260 = vpack.c.bf16 %v3205, %v3204
    %v3261 = vpack.c.bf16 %v3207, %v3206
    %v3262 = vpack.c.bf16 %v3209, %v3208
    %v3263 = vpack.c.bf16 %v3211, %v3210
    %v3264 = vpack.c.bf16 %v3213, %v3212
    %v3265 = vpack.c.bf16 %v3215, %v3214
    %v3266 = vpack.c.bf16 %v3217, %v3216
    %v3267 = vpack.c.bf16 %v3219, %v3218
    %v3268 = vpack.c.bf16 %v3221, %v3220
    %v3269 = vpack.c.bf16 %v3223, %v3222
    %v3270 = vpack.c.bf16 %v3225, %v3224
    %v3271 = vpack.c.bf16 %v3227, %v3226
    %v3272 = vpack.c.bf16 %v3229, %v3228
    %v3273 = vpack.c.bf16 %v3231, %v3230
    %v3274 = vpack.c.bf16 %v3233, %v3232
    %v3275 = vpack.c.bf16 %v3235, %v3234
    %v3276 = vpack.c.bf16 %v3237, %v3236
    %v3277 = vpack.c.bf16 %v3239, %v3238
    %v3278 = vpack.c.bf16 %v3241, %v3240
    %v3279 = vpack.c.bf16 %v3243, %v3242
    %v3280 = vpack.c.bf16 %v3245, %v3244
    %v3281 = vpack.c.bf16 %v3247, %v3246
    %v3282 = vpack.c.bf16 %v3249, %v3248
    %v3283 = vpack.c.bf16 %v3251, %v3250
    %v3284 = vld [vmem:[%s3] sm:$0xf]
    %v3285 = vld [vmem:[%s3 + $0x4] sm:$0xf]
    %v3286 = vld [vmem:[%s3 + $0x8] sm:$0xf]
    %v3287 = vld [vmem:[%s3 + $0xc] sm:$0xf]
    %v3288 = vld [vmem:[%s3 + $0x10] sm:$0xf]
    %v3289 = vld [vmem:[%s3 + $0x14] sm:$0xf]
    %v3290 = vld [vmem:[%s3 + $0x18] sm:$0xf]
    %v3291 = vld [vmem:[%s3 + $0x1c] sm:$0xf]
    %v3292 = vld [vmem:[%s3 + $0x20] sm:$0xf]
    %v3293 = vld [vmem:[%s3 + $0x24] sm:$0xf]
    %v3294 = vld [vmem:[%s3 + $0x28] sm:$0xf]
    %v3295 = vld [vmem:[%s3 + $0x2c] sm:$0xf]
    %v3296 = vld [vmem:[%s3 + $0x30] sm:$0xf]
    %v3297 = vld [vmem:[%s3 + $0x34] sm:$0xf]
    %v3298 = vld [vmem:[%s3 + $0x38] sm:$0xf]
    %v3299 = vld [vmem:[%s3 + $0x3c] sm:$0xf]
    %v3300 = vld [vmem:[%s4] sm:$0x1]
    %v3302 = vlaneseq
    %v3303 = vshrl.u32 %v3302, 7
    %v3304 = vsub.s32 0, %v3303
    %v3305 = vrot.slane %v3300, %v3304
    %v3323 = vunpack.c.l.b16 %v3284
    %v3324 = vunpack.c.l.b16 %v3285
    %v3325 = vunpack.c.l.b16 %v3286
    %v3326 = vunpack.c.l.b16 %v3287
    %v3327 = vunpack.c.l.b16 %v3288
    %v3328 = vunpack.c.l.b16 %v3289
    %v3329 = vunpack.c.l.b16 %v3290
    %v3330 = vunpack.c.l.b16 %v3291
    %v3331 = vunpack.c.l.b16 %v3292
    %v3332 = vunpack.c.l.b16 %v3293
    %v3333 = vunpack.c.l.b16 %v3294
    %v3334 = vunpack.c.l.b16 %v3295
    %v3335 = vunpack.c.l.b16 %v3296
    %v3336 = vunpack.c.l.b16 %v3297
    %v3337 = vunpack.c.l.b16 %v3298
    %v3338 = vunpack.c.l.b16 %v3299
    %v3339 = vpack.c.b16 %v3324, %v3323
    %v3340 = vpack.c.b16 %v3326, %v3325
    %v3341 = vpack.c.b16 %v3328, %v3327
    %v3342 = vpack.c.b16 %v3330, %v3329
    %v3343 = vpack.c.b16 %v3332, %v3331
    %v3344 = vpack.c.b16 %v3334, %v3333
    %v3345 = vpack.c.b16 %v3336, %v3335
    %v3346 = vpack.c.b16 %v3338, %v3337
    %3355 = vmatprep.subr.bf16.mxu0 0
    %3356 = vmatpush1.bf16.msra.mxu0 %v3346
    %3357 = vmatprep.subr.bf16.mxu0 0
    %3358 = vmatpush1.bf16.msra.mxu0 %v3345
    %3359 = vmatprep.subr.bf16.mxu0 0
    %3360 = vmatpush1.bf16.msra.mxu0 %v3344
    %3361 = vmatprep.subr.bf16.mxu0 0
    %3362 = vmatpush1.bf16.msra.mxu0 %v3343
    %3363 = vmatprep.subr.bf16.mxu0 0
    %3364 = vmatpush1.bf16.msra.mxu0 %v3342
    %3365 = vmatprep.subr.bf16.mxu0 0
    %3366 = vmatpush1.bf16.msra.mxu0 %v3341
    %3367 = vmatprep.subr.bf16.mxu0 0
    %3368 = vmatpush1.bf16.msra.mxu0 %v3340
    %3369 = vmatprep.subr.bf16.mxu0 0
    %3370 = vmatpush1.bf16.msra.mxu0 %v3339
    %3371 = vmatprep.subr.bf16.mxu0 0
    %3372 = vmatpush2.bf16.msra.mxu0 0
    %3373 = vmatprep.subr.bf16.mxu0 0
    %3374 = vmatpush2.bf16.msra.mxu0 0
    %3375 = vmatprep.subr.bf16.mxu0 0
    %3376 = vmatpush2.bf16.msra.mxu0 0
    %3377 = vmatprep.subr.bf16.mxu0 0
    %3378 = vmatpush2.bf16.msra.mxu0 0
    %3379 = vmatprep.subr.bf16.mxu0 0
    %3380 = vmatpush2.bf16.msra.mxu0 0
    %3381 = vmatprep.subr.bf16.mxu0 0
    %3382 = vmatpush2.bf16.msra.mxu0 0
    %3383 = vmatprep.subr.bf16.mxu0 0
    %3384 = vmatpush2.bf16.msra.mxu0 0
    %3385 = vmatprep.subr.bf16.mxu0 0
    %3386 = vmatpush2.bf16.msra.mxu0 0
    %3387 = vmatprep.mubr.bf16.mxu0 0
    %3388 = vmatmul.mubr.bf16.gmra.mxu0 %v3252
    %v3389 = vpop.f32.mrf.mxu0
    %v3390 = vadd.f32 %v3305, %v3389
    %v3391 = vpop.f32.mrf.mxu0
    %v3392 = vpop.f32.mrf.mxu0
    %v3393 = vadd.f32 %v3305, %v3392
    %v3394 = vpop.f32.mrf.mxu0
    %3395 = vmatprep.mubr.bf16.mxu0 0
    %3396 = vmatmul.mubr.bf16.gmra.mxu0 %v3253
    %v3397 = vpop.f32.mrf.mxu0
    %v3398 = vadd.f32 %v3305, %v3397
    %v3399 = vpop.f32.mrf.mxu0
    %v3400 = vpop.f32.mrf.mxu0
    %v3401 = vadd.f32 %v3305, %v3400
    %v3402 = vpop.f32.mrf.mxu0
    %3403 = vmatprep.mubr.bf16.mxu0 0
    %3404 = vmatmul.mubr.bf16.gmra.mxu0 %v3254
    %v3405 = vpop.f32.mrf.mxu0
    %v3406 = vadd.f32 %v3305, %v3405
    %v3407 = vpop.f32.mrf.mxu0
    %v3408 = vpop.f32.mrf.mxu0
    %v3409 = vadd.f32 %v3305, %v3408
    %v3410 = vpop.f32.mrf.mxu0
    %3411 = vmatprep.mubr.bf16.mxu0 0
    %3412 = vmatmul.mubr.bf16.gmra.mxu0 %v3255
    %v3413 = vpop.f32.mrf.mxu0
    %v3414 = vadd.f32 %v3305, %v3413
    %v3415 = vpop.f32.mrf.mxu0
    %v3416 = vpop.f32.mrf.mxu0
    %v3417 = vadd.f32 %v3305, %v3416
    %v3418 = vpop.f32.mrf.mxu0
    %3419 = vmatprep.mubr.bf16.mxu0 0
    %3420 = vmatmul.mubr.bf16.gmra.mxu0 %v3256
    %v3421 = vpop.f32.mrf.mxu0
    %v3422 = vadd.f32 %v3305, %v3421
    %v3423 = vpop.f32.mrf.mxu0
    %v3424 = vpop.f32.mrf.mxu0
    %v3425 = vadd.f32 %v3305, %v3424
    %v3426 = vpop.f32.mrf.mxu0
    %3427 = vmatprep.mubr.bf16.mxu0 0
    %3428 = vmatmul.mubr.bf16.gmra.mxu0 %v3257
    %v3429 = vpop.f32.mrf.mxu0
    %v3430 = vadd.f32 %v3305, %v3429
    %v3431 = vpop.f32.mrf.mxu0
    %v3432 = vpop.f32.mrf.mxu0
    %v3433 = vadd.f32 %v3305, %v3432
    %v3434 = vpop.f32.mrf.mxu0
    %3435 = vmatprep.mubr.bf16.mxu0 0
    %3436 = vmatmul.mubr.bf16.gmra.mxu0 %v3258
    %v3437 = vpop.f32.mrf.mxu0
    %v3438 = vadd.f32 %v3305, %v3437
    %v3439 = vpop.f32.mrf.mxu0
    %v3440 = vpop.f32.mrf.mxu0
    %v3441 = vadd.f32 %v3305, %v3440
    %v3442 = vpop.f32.mrf.mxu0
    %3443 = vmatprep.mubr.bf16.mxu0 0
    %3444 = vmatmul.mubr.bf16.gmra.mxu0 %v3259
    %v3445 = vpop.f32.mrf.mxu0
    %v3446 = vadd.f32 %v3305, %v3445
    %v3447 = vpop.f32.mrf.mxu0
    %v3448 = vpop.f32.mrf.mxu0
    %v3449 = vadd.f32 %v3305, %v3448
    %v3450 = vpop.f32.mrf.mxu0
    %3451 = vmatprep.mubr.bf16.mxu0 0
    %3452 = vmatmul.mubr.bf16.gmra.mxu0 %v3260
    %v3453 = vpop.f32.mrf.mxu0
    %v3454 = vadd.f32 %v3305, %v3453
    %v3455 = vpop.f32.mrf.mxu0
    %v3456 = vpop.f32.mrf.mxu0
    %v3457 = vadd.f32 %v3305, %v3456
    %v3458 = vpop.f32.mrf.mxu0
    %3459 = vmatprep.mubr.bf16.mxu0 0
    %3460 = vmatmul.mubr.bf16.gmra.mxu0 %v3261
    %v3461 = vpop.f32.mrf.mxu0
    %v3462 = vadd.f32 %v3305, %v3461
    %v3463 = vpop.f32.mrf.mxu0
    %v3464 = vpop.f32.mrf.mxu0
    %v3465 = vadd.f32 %v3305, %v3464
    %v3466 = vpop.f32.mrf.mxu0
    %3467 = vmatprep.mubr.bf16.mxu0 0
    %3468 = vmatmul.mubr.bf16.gmra.mxu0 %v3262
    %v3469 = vpop.f32.mrf.mxu0
    %v3470 = vadd.f32 %v3305, %v3469
    %v3471 = vpop.f32.mrf.mxu0
    %v3472 = vpop.f32.mrf.mxu0
    %v3473 = vadd.f32 %v3305, %v3472
    %v3474 = vpop.f32.mrf.mxu0
    %3475 = vmatprep.mubr.bf16.mxu0 0
    %3476 = vmatmul.mubr.bf16.gmra.mxu0 %v3263
    %v3477 = vpop.f32.mrf.mxu0
    %v3478 = vadd.f32 %v3305, %v3477
    %v3479 = vpop.f32.mrf.mxu0
    %v3480 = vpop.f32.mrf.mxu0
    %v3481 = vadd.f32 %v3305, %v3480
    %v3482 = vpop.f32.mrf.mxu0
    %3483 = vmatprep.mubr.bf16.mxu0 0
    %3484 = vmatmul.mubr.bf16.gmra.mxu0 %v3264
    %v3485 = vpop.f32.mrf.mxu0
    %v3486 = vadd.f32 %v3305, %v3485
    %v3487 = vpop.f32.mrf.mxu0
    %v3488 = vpop.f32.mrf.mxu0
    %v3489 = vadd.f32 %v3305, %v3488
    %v3490 = vpop.f32.mrf.mxu0
    %3491 = vmatprep.mubr.bf16.mxu0 0
    %3492 = vmatmul.mubr.bf16.gmra.mxu0 %v3265
    %v3493 = vpop.f32.mrf.mxu0
    %v3494 = vadd.f32 %v3305, %v3493
    %v3495 = vpop.f32.mrf.mxu0
    %v3496 = vpop.f32.mrf.mxu0
    %v3497 = vadd.f32 %v3305, %v3496
    %v3498 = vpop.f32.mrf.mxu0
    %3499 = vmatprep.mubr.bf16.mxu0 0
    %3500 = vmatmul.mubr.bf16.gmra.mxu0 %v3266
    %v3501 = vpop.f32.mrf.mxu0
    %v3502 = vadd.f32 %v3305, %v3501
    %v3503 = vpop.f32.mrf.mxu0
    %v3504 = vpop.f32.mrf.mxu0
    %v3505 = vadd.f32 %v3305, %v3504
    %v3506 = vpop.f32.mrf.mxu0
    %3507 = vmatprep.mubr.bf16.mxu0 0
    %3508 = vmatmul.mubr.bf16.gmra.mxu0 %v3267
    %v3509 = vpop.f32.mrf.mxu0
    %v3510 = vadd.f32 %v3305, %v3509
    %v3511 = vpop.f32.mrf.mxu0
    %v3512 = vpop.f32.mrf.mxu0
    %v3513 = vadd.f32 %v3305, %v3512
    %v3514 = vpop.f32.mrf.mxu0
    %3515 = vmatprep.mubr.bf16.mxu0 0
    %3516 = vmatmul.mubr.bf16.gmra.mxu0 %v3268
    %v3517 = vpop.f32.mrf.mxu0
    %v3518 = vadd.f32 %v3305, %v3517
    %v3519 = vpop.f32.mrf.mxu0
    %v3520 = vpop.f32.mrf.mxu0
    %v3521 = vadd.f32 %v3305, %v3520
    %v3522 = vpop.f32.mrf.mxu0
    %3523 = vmatprep.mubr.bf16.mxu0 0
    %3524 = vmatmul.mubr.bf16.gmra.mxu0 %v3269
    %v3525 = vpop.f32.mrf.mxu0
    %v3526 = vadd.f32 %v3305, %v3525
    %v3527 = vpop.f32.mrf.mxu0
    %v3528 = vpop.f32.mrf.mxu0
    %v3529 = vadd.f32 %v3305, %v3528
    %v3530 = vpop.f32.mrf.mxu0
    %3531 = vmatprep.mubr.bf16.mxu0 0
    %3532 = vmatmul.mubr.bf16.gmra.mxu0 %v3270
    %v3533 = vpop.f32.mrf.mxu0
    %v3534 = vadd.f32 %v3305, %v3533
    %v3535 = vpop.f32.mrf.mxu0
    %v3536 = vpop.f32.mrf.mxu0
    %v3537 = vadd.f32 %v3305, %v3536
    %v3538 = vpop.f32.mrf.mxu0
    %3539 = vmatprep.mubr.bf16.mxu0 0
    %3540 = vmatmul.mubr.bf16.gmra.mxu0 %v3271
    %v3541 = vpop.f32.mrf.mxu0
    %v3542 = vadd.f32 %v3305, %v3541
    %v3543 = vpop.f32.mrf.mxu0
    %v3544 = vpop.f32.mrf.mxu0
    %v3545 = vadd.f32 %v3305, %v3544
    %v3546 = vpop.f32.mrf.mxu0
    %3547 = vmatprep.mubr.bf16.mxu0 0
    %3548 = vmatmul.mubr.bf16.gmra.mxu0 %v3272
    %v3549 = vpop.f32.mrf.mxu0
    %v3550 = vadd.f32 %v3305, %v3549
    %v3551 = vpop.f32.mrf.mxu0
    %v3552 = vpop.f32.mrf.mxu0
    %v3553 = vadd.f32 %v3305, %v3552
    %v3554 = vpop.f32.mrf.mxu0
    %3555 = vmatprep.mubr.bf16.mxu0 0
    %3556 = vmatmul.mubr.bf16.gmra.mxu0 %v3273
    %v3557 = vpop.f32.mrf.mxu0
    %v3558 = vadd.f32 %v3305, %v3557
    %v3559 = vpop.f32.mrf.mxu0
    %v3560 = vpop.f32.mrf.mxu0
    %v3561 = vadd.f32 %v3305, %v3560
    %v3562 = vpop.f32.mrf.mxu0
    %3563 = vmatprep.mubr.bf16.mxu0 0
    %3564 = vmatmul.mubr.bf16.gmra.mxu0 %v3274
    %v3565 = vpop.f32.mrf.mxu0
    %v3566 = vadd.f32 %v3305, %v3565
    %v3567 = vpop.f32.mrf.mxu0
    %v3568 = vpop.f32.mrf.mxu0
    %v3569 = vadd.f32 %v3305, %v3568
    %v3570 = vpop.f32.mrf.mxu0
    %3571 = vmatprep.mubr.bf16.mxu0 0
    %3572 = vmatmul.mubr.bf16.gmra.mxu0 %v3275
    %v3573 = vpop.f32.mrf.mxu0
    %v3574 = vadd.f32 %v3305, %v3573
    %v3575 = vpop.f32.mrf.mxu0
    %v3576 = vpop.f32.mrf.mxu0
    %v3577 = vadd.f32 %v3305, %v3576
    %v3578 = vpop.f32.mrf.mxu0
    %3579 = vmatprep.mubr.bf16.mxu0 0
    %3580 = vmatmul.mubr.bf16.gmra.mxu0 %v3276
    %v3581 = vpop.f32.mrf.mxu0
    %v3582 = vadd.f32 %v3305, %v3581
    %v3583 = vpop.f32.mrf.mxu0
    %v3584 = vpop.f32.mrf.mxu0
    %v3585 = vadd.f32 %v3305, %v3584
    %v3586 = vpop.f32.mrf.mxu0
    %3587 = vmatprep.mubr.bf16.mxu0 0
    %3588 = vmatmul.mubr.bf16.gmra.mxu0 %v3277
    %v3589 = vpop.f32.mrf.mxu0
    %v3590 = vadd.f32 %v3305, %v3589
    %v3591 = vpop.f32.mrf.mxu0
    %v3592 = vpop.f32.mrf.mxu0
    %v3593 = vadd.f32 %v3305, %v3592
    %v3594 = vpop.f32.mrf.mxu0
    %3595 = vmatprep.mubr.bf16.mxu0 0
    %3596 = vmatmul.mubr.bf16.gmra.mxu0 %v3278
    %v3597 = vpop.f32.mrf.mxu0
    %v3598 = vadd.f32 %v3305, %v3597
    %v3599 = vpop.f32.mrf.mxu0
    %v3600 = vpop.f32.mrf.mxu0
    %v3601 = vadd.f32 %v3305, %v3600
    %v3602 = vpop.f32.mrf.mxu0
    %3603 = vmatprep.mubr.bf16.mxu0 0
    %3604 = vmatmul.mubr.bf16.gmra.mxu0 %v3279
    %v3605 = vpop.f32.mrf.mxu0
    %v3606 = vadd.f32 %v3305, %v3605
    %v3607 = vpop.f32.mrf.mxu0
    %v3608 = vpop.f32.mrf.mxu0
    %v3609 = vadd.f32 %v3305, %v3608
    %v3610 = vpop.f32.mrf.mxu0
    %3611 = vmatprep.mubr.bf16.mxu0 0
    %3612 = vmatmul.mubr.bf16.gmra.mxu0 %v3280
    %v3613 = vpop.f32.mrf.mxu0
    %v3614 = vadd.f32 %v3305, %v3613
    %v3615 = vpop.f32.mrf.mxu0
    %v3616 = vpop.f32.mrf.mxu0
    %v3617 = vadd.f32 %v3305, %v3616
    %v3618 = vpop.f32.mrf.mxu0
    %3619 = vmatprep.mubr.bf16.mxu0 0
    %3620 = vmatmul.mubr.bf16.gmra.mxu0 %v3281
    %v3621 = vpop.f32.mrf.mxu0
    %v3622 = vadd.f32 %v3305, %v3621
    %v3623 = vpop.f32.mrf.mxu0
    %v3624 = vpop.f32.mrf.mxu0
    %v3625 = vadd.f32 %v3305, %v3624
    %v3626 = vpop.f32.mrf.mxu0
    %3627 = vmatprep.mubr.bf16.mxu0 0
    %3628 = vmatmul.mubr.bf16.gmra.mxu0 %v3282
    %v3629 = vpop.f32.mrf.mxu0
    %v3630 = vadd.f32 %v3305, %v3629
    %v3631 = vpop.f32.mrf.mxu0
    %v3632 = vpop.f32.mrf.mxu0
    %v3633 = vadd.f32 %v3305, %v3632
    %v3634 = vpop.f32.mrf.mxu0
    %3635 = vmatprep.mubr.bf16.mxu0 0
    %3636 = vmatmul.mubr.bf16.gmra.mxu0 %v3283
    %v3637 = vpop.f32.mrf.mxu0
    %v3638 = vadd.f32 %v3305, %v3637
    %v3639 = vpop.f32.mrf.mxu0
    %v3640 = vpop.f32.mrf.mxu0
    %v3641 = vadd.f32 %v3305, %v3640
    %v3642 = vpop.f32.mrf.mxu0
    %3643 = vdwg.mxu0
    %3644 = vst [vmem:[#allocation2] sm:$0xff] %v3390
    %3645 = vst [vmem:[#allocation2 + $0x8] sm:$0xff] %v3393
    %3646 = vst [vmem:[#allocation2 + $0x10] sm:$0xff] %v3398
    %3647 = vst [vmem:[#allocation2 + $0x18] sm:$0xff] %v3401
    %3648 = vst [vmem:[#allocation2 + $0x20] sm:$0xff] %v3406
    %3649 = vst [vmem:[#allocation2 + $0x28] sm:$0xff] %v3409
    %3650 = vst [vmem:[#allocation2 + $0x30] sm:$0xff] %v3414
    %3651 = vst [vmem:[#allocation2 + $0x38] sm:$0xff] %v3417
    %3652 = vst [vmem:[#allocation2 + $0x40] sm:$0xff] %v3422
    %3653 = vst [vmem:[#allocation2 + $0x48] sm:$0xff] %v3425
    %3654 = vst [vmem:[#allocation2 + $0x50] sm:$0xff] %v3430
    %3655 = vst [vmem:[#allocation2 + $0x58] sm:$0xff] %v3433
    %3656 = vst [vmem:[#allocation2 + $0x60] sm:$0xff] %v3438
    %3657 = vst [vmem:[#allocation2 + $0x68] sm:$0xff] %v3441
    %3658 = vst [vmem:[#allocation2 + $0x70] sm:$0xff] %v3446
    %3659 = vst [vmem:[#allocation2 + $0x78] sm:$0xff] %v3449
    %3660 = vst [vmem:[#allocation2 + $0x80] sm:$0xff] %v3454
    %3661 = vst [vmem:[#allocation2 + $0x88] sm:$0xff] %v3457
    %3662 = vst [vmem:[#allocation2 + $0x90] sm:$0xff] %v3462
    %3663 = vst [vmem:[#allocation2 + $0x98] sm:$0xff] %v3465
    %3664 = vst [vmem:[#allocation2 + $0xa0] sm:$0xff] %v3470
    %3665 = vst [vmem:[#allocation2 + $0xa8] sm:$0xff] %v3473
    %3666 = vst [vmem:[#allocation2 + $0xb0] sm:$0xff] %v3478
    %3667 = vst [vmem:[#allocation2 + $0xb8] sm:$0xff] %v3481
    %3668 = vst [vmem:[#allocation2 + $0xc0] sm:$0xff] %v3486
    %3669 = vst [vmem:[#allocation2 + $0xc8] sm:$0xff] %v3489
    %3670 = vst [vmem:[#allocation2 + $0xd0] sm:$0xff] %v3494
    %3671 = vst [vmem:[#allocation2 + $0xd8] sm:$0xff] %v3497
    %3672 = vst [vmem:[#allocation2 + $0xe0] sm:$0xff] %v3502
    %3673 = vst [vmem:[#allocation2 + $0xe8] sm:$0xff] %v3505
    %3674 = vst [vmem:[#allocation2 + $0xf0] sm:$0xff] %v3510
    %3675 = vst [vmem:[#allocation2 + $0xf8] sm:$0xff] %v3513
    %3676 = vst [vmem:[#allocation2 + $0x100] sm:$0xff] %v3518
    %3677 = vst [vmem:[#allocation2 + $0x108] sm:$0xff] %v3521
    %3678 = vst [vmem:[#allocation2 + $0x110] sm:$0xff] %v3526
    %3679 = vst [vmem:[#allocation2 + $0x118] sm:$0xff] %v3529
    %3680 = vst [vmem:[#allocation2 + $0x120] sm:$0xff] %v3534
    %3681 = vst [vmem:[#allocation2 + $0x128] sm:$0xff] %v3537
    %3682 = vst [vmem:[#allocation2 + $0x130] sm:$0xff] %v3542
    %3683 = vst [vmem:[#allocation2 + $0x138] sm:$0xff] %v3545
    %3684 = vst [vmem:[#allocation2 + $0x140] sm:$0xff] %v3550
    %3685 = vst [vmem:[#allocation2 + $0x148] sm:$0xff] %v3553
    %3686 = vst [vmem:[#allocation2 + $0x150] sm:$0xff] %v3558
    %3687 = vst [vmem:[#allocation2 + $0x158] sm:$0xff] %v3561
    %3688 = vst [vmem:[#allocation2 + $0x160] sm:$0xff] %v3566
    %3689 = vst [vmem:[#allocation2 + $0x168] sm:$0xff] %v3569
    %3690 = vst [vmem:[#allocation2 + $0x170] sm:$0xff] %v3574
    %3691 = vst [vmem:[#allocation2 + $0x178] sm:$0xff] %v3577
    %3692 = vst [vmem:[#allocation2 + $0x180] sm:$0xff] %v3582
    %3693 = vst [vmem:[#allocation2 + $0x188] sm:$0xff] %v3585
    %3694 = vst [vmem:[#allocation2 + $0x190] sm:$0xff] %v3590
    %3695 = vst [vmem:[#allocation2 + $0x198] sm:$0xff] %v3593
    %3696 = vst [vmem:[#allocation2 + $0x1a0] sm:$0xff] %v3598
    %3697 = vst [vmem:[#allocation2 + $0x1a8] sm:$0xff] %v3601
    %3698 = vst [vmem:[#allocation2 + $0x1b0] sm:$0xff] %v3606
    %3699 = vst [vmem:[#allocation2 + $0x1b8] sm:$0xff] %v3609
    %3700 = vst [vmem:[#allocation2 + $0x1c0] sm:$0xff] %v3614
    %3701 = vst [vmem:[#allocation2 + $0x1c8] sm:$0xff] %v3617
    %3702 = vst [vmem:[#allocation2 + $0x1d0] sm:$0xff] %v3622
    %3703 = vst [vmem:[#allocation2 + $0x1d8] sm:$0xff] %v3625
    %3704 = vst [vmem:[#allocation2 + $0x1e0] sm:$0xff] %v3630
    %3705 = vst [vmem:[#allocation2 + $0x1e8] sm:$0xff] %v3633
    %3706 = vst [vmem:[#allocation2 + $0x1f0] sm:$0xff] %v3638
    %3707 = vst [vmem:[#allocation2 + $0x1f8] sm:$0xff] %v3641
    // Predicated region
    $region22: #{tpu_custom_call.1} parent=1 // pred_check
      _
    $region23: #{tpu_custom_call.1} parent=1 // pred_check_branch
      %3709 = sbr.rel (0) target = $region25
    $region24: #{tpu_custom_call.1} parent=1 // pred_region
      %s3711 = ssub.s32 8192, 8192
      %3712 = vsyncadd [#allocation3], %s3711
      %s3713 = sshll.u32 [#allocation2], 4
      %s3714 = int_to_ptr.vmem [resolvable:$true] %s3713
      %3719 = dma.vmem_to_hbm [thread:$0]  %s3714, 8192, %s5, [#allocation3], 128, 128, 8
    $region25: #{tpu_custom_call.1} parent=1 // pred_fallthru
      _
    // Predicated region
    $region26: #{tpu_custom_call.1} parent=1 // pred_check
      _
    $region27: #{tpu_custom_call.1} parent=1 // pred_check_branch
      %3721 = sbr.rel (0) target = $region29
    $region28: #{tpu_custom_call.1} parent=1 // pred_region
      %3722 = dma.done [#allocation3], 8192
    $region29: #{tpu_custom_call.1} parent=1 // pred_fallthru
      _
    %3723 = vsyncpa [#allocation3], 1

</llo_original>
